<compile_context>
chip_gen: v7x
topology: tpu7x:2x2x1
jax: 0.10.0
libtpu: 0.0.40
codegen_flags: <defaults>
</compile_context>

<pallas_src>
import functools

import jax
import jax.numpy as jnp
import numpy as np
from jax import lax
from jax.experimental import pallas as pl
from jax.experimental.pallas import tpu as pltpu

KSIZE = 3
STRIDE = 2
LANE = 128


def _round_up(x, m):
    return ((x + m - 1) // m) * m


# ----------------------------- Pallas kernel --------------------------------
def fused_predictor_kernel(cols1_ref, w1_ref, b1_ref, w2_ref, b2_ref,
                           wfc_ref, bfc_ref, o_ref, y1_ref, cols2_ref,
                           *, w1o, h2, w2o):
    """Whole ClassRCNNPredictor forward for ONE batch element (one grid step)."""
    c1 = w1_ref.shape[1]          # conv1 out channels (dim_reduced)
    c2 = w2_ref.shape[1]          # conv2 out channels (dim_reduced)
    cpad = o_ref.shape[-1]        # lane-padded num_classes

    # ---- conv1 as im2col GEMM (K zero-padded to a lane multiple) + bias + ReLU ----
    y1 = jnp.dot(cols1_ref[0], w1_ref[...], preferred_element_type=jnp.float32)
    y1_ref[...] = jnp.maximum(y1 + b1_ref[...], 0.0)          # [h1*w1o, c1] f32 in VMEM

    # ---- conv2: in-kernel im2col (gather 3x3/stride-2 taps from VMEM y1), one GEMM ----
    for kh in range(KSIZE):
        for kw in range(KSIZE):
            t = kh * KSIZE + kw
            for oh in range(h2):
                for ow in range(w2o):
                    p = oh * w2o + ow
                    r = (STRIDE * oh + kh) * w1o + (STRIDE * ow + kw)
                    cols2_ref[p:p + 1, t * c1:(t + 1) * c1] = y1_ref[r:r + 1, :]
    y2 = jnp.dot(cols2_ref[...].astype(jnp.bfloat16), w2_ref[...],
                 preferred_element_type=jnp.float32)          # [h2*w2o, c2]
    y2 = jnp.maximum(y2 + b2_ref[...], 0.0)                   # f32 epilogue (VPU)

    # ---- FC: wfc rows were pre-permuted to NHWC (h,w,c) flatten order, so position p
    #      contracts against wfc rows [p*c2, (p+1)*c2) -- no runtime transpose needed ----
    acc = jnp.zeros((1, cpad), jnp.float32)
    for p in range(h2 * w2o):
        acc = acc + jnp.dot(y2[p:p + 1, :].astype(jnp.bfloat16),
                            wfc_ref[p * c2:(p + 1) * c2, :],
                            preferred_element_type=jnp.float32)
    o_ref[...] = (acc + bfc_ref[...]).reshape(1, 1, cpad)


# ------------------------------ JAX glue -------------------------------------
def im2col(x_nhwc, ksize=KSIZE, stride=STRIDE):
    """Patch extraction on the raw input (pure indexing glue). -> [N, Ho*Wo, k*k*C]."""
    N, H, W, C = x_nhwc.shape
    Ho = (H - ksize) // stride + 1
    Wo = (W - ksize) // stride + 1
    cols = []
    for kh in range(ksize):
        for kw in range(ksize):
            cols.append(x_nhwc[:, kh:kh + stride * (Ho - 1) + 1:stride,
                                  kw:kw + stride * (Wo - 1) + 1:stride, :])
    patches = jnp.stack(cols, axis=3)                 # [N, Ho, Wo, k*k, C]
    return patches.reshape(N, Ho * Wo, ksize * ksize * C), (Ho, Wo)


def prepare_params(params, in_hw):
    """One-time (outside-jit) weight preprocessing: flatten/pad/bf16-cast conv weights,
    permute FC rows from NCHW-flatten order to NHWC-flatten order, lane-pad the FC."""
    H, W = in_hw
    w1, b1 = params["w1"], params["b1"]          # HWIO [3,3,Cin,C1], [C1]
    w2, b2 = params["w2"], params["b2"]          # HWIO [3,3,C1,C2], [C2]
    wfc, bfc = params["wfc"], params["bfc"]      # [h2*w2*C2, num_classes], [num_classes]
    kh, kw, cin, c1 = w1.shape
    c2 = w2.shape[-1]
    num_classes = wfc.shape[-1]

    h1, w1o = (H - kh) // STRIDE + 1, (W - kw) // STRIDE + 1
    h2, w2o = (h1 - kh) // STRIDE + 1, (w1o - kw) // STRIDE + 1
    assert h2 * w2o * c2 == wfc.shape[0], "Linear(1024,.) implies 14x14 input, dim_reduced=256"

    k1 = kh * kw * cin
    k1p = _round_up(k1, LANE)                    # pad conv1 contraction dim to 128 lanes
    w1p = jnp.zeros((k1p, c1), jnp.float32).at[:k1].set(w1.reshape(k1, c1))

    cpad = _round_up(num_classes, LANE)          # lane-dense FC output
    # PyTorch flattens NCHW (c,h,w)-major; the kernel flattens NHWC (h,w,c)-major.
    wfc_perm = wfc.reshape(c2, h2, w2o, num_classes).transpose(1, 2, 0, 3)
    wfc_perm = wfc_perm.reshape(h2 * w2o * c2, num_classes)
    wfcp = jnp.zeros((h2 * w2o * c2, cpad), jnp.float32).at[:, :num_classes].set(wfc_perm)
    bfcp = jnp.zeros((1, cpad), jnp.float32).at[0, :num_classes].set(bfc)

    return dict(
        w1p=w1p.astype(jnp.bfloat16),
        b1=b1.reshape(1, c1).astype(jnp.float32),
        w2f=w2.reshape(kh * kw * c1, c2).astype(jnp.bfloat16),
        b2=b2.reshape(1, c2).astype(jnp.float32),
        wfcp=wfcp.astype(jnp.bfloat16),
        bfcp=bfcp,
    )


@functools.partial(jax.jit, static_argnames=("num_classes",))
def class_rcnn_predictor_forward(x_nchw, prep, *, num_classes):
    """Pallas implementation of ClassRCNNPredictor.forward (input NCHW, float32)."""
    N = x_nchw.shape[0]
    k1p, c1 = prep["w1p"].shape
    c2 = prep["w2f"].shape[1]
    cpad = prep["wfcp"].shape[1]

    x = jnp.transpose(x_nchw, (0, 2, 3, 1))           # NCHW -> NHWC (glue)
    cols1, (h1, w1o) = im2col(x)                      # [N, h1*w1o, 9*Cin]
    h2 = (h1 - KSIZE) // STRIDE + 1
    w2o = (w1o - KSIZE) // STRIDE + 1
    m1, m2 = h1 * w1o, h2 * w2o
    cols1 = jnp.pad(cols1, ((0, 0), (0, 0), (0, k1p - cols1.shape[-1])))
    cols1 = cols1.astype(jnp.bfloat16)

    kernel = functools.partial(fused_predictor_kernel, w1o=w1o, h2=h2, w2o=w2o)
    flops = 2 * N * (m1 * k1p * c1 + m2 * (KSIZE * KSIZE * c1) * c2 + m2 * c2 * cpad)
    bytes_accessed = (cols1.size * 2 + prep["w1p"].size * 2 + prep["b1"].size * 4
                      + prep["w2f"].size * 2 + prep["b2"].size * 4
                      + prep["wfcp"].size * 2 + prep["bfcp"].size * 4 + N * cpad * 4)

    out = pl.pallas_call(
        kernel,
        out_shape=jax.ShapeDtypeStruct((N, 1, cpad), jnp.float32),
        grid=(N,),
        in_specs=[
            pl.BlockSpec((1, m1, k1p), lambda b: (b, 0, 0)),            # per-image cols1
            pl.BlockSpec((k1p, c1), lambda b: (0, 0)),                  # w1 (resident)
            pl.BlockSpec((1, c1), lambda b: (0, 0)),                    # b1
            pl.BlockSpec((KSIZE * KSIZE * c1, c2), lambda b: (0, 0)),   # w2 (resident)
            pl.BlockSpec((1, c2), lambda b: (0, 0)),                    # b2
            pl.BlockSpec((m2 * c2, cpad), lambda b: (0, 0)),            # fc W (resident)
            pl.BlockSpec((1, cpad), lambda b: (0, 0)),                  # fc bias
        ],
        out_specs=pl.BlockSpec((1, 1, cpad), lambda b: (b, 0, 0)),
        scratch_shapes=[
            pltpu.VMEM((m1, c1), jnp.float32),                          # y1 (conv1 out)
            pltpu.VMEM((m2, KSIZE * KSIZE * c1), jnp.float32),          # conv2 im2col buf
        ],
        compiler_params=pltpu.CompilerParams(dimension_semantics=("parallel",)),
        cost_estimate=pl.CostEstimate(flops=flops, transcendentals=0,
                                      bytes_accessed=bytes_accessed),
    )(cols1, prep["w1p"], prep["b1"], prep["w2f"], prep["b2"],
      prep["wfcp"], prep["bfcp"])
    return out[:, 0, :num_classes]


# --------------------------- params / reference ------------------------------
def init_params(key, in_channels, dim_reduced, num_classes):
    ks = jax.random.split(key, 6)
    # kaiming_normal_(mode='fan_out', nonlinearity='relu'): std = sqrt(2 / (Cout*KH*KW))
    std = (2.0 / (dim_reduced * 9)) ** 0.5
    w1 = std * jax.random.normal(ks[0], (3, 3, in_channels, dim_reduced), jnp.float32)
    b1 = 0.01 * jax.random.normal(ks[1], (dim_reduced,), jnp.float32)
    w2 = std * jax.random.normal(ks[2], (3, 3, dim_reduced, dim_reduced), jnp.float32)
    b2 = 0.01 * jax.random.normal(ks[3], (dim_reduced,), jnp.float32)
    lim = 1.0 / (1024.0 ** 0.5)
    wfc = jax.random.uniform(ks[4], (1024, num_classes), jnp.float32, -lim, lim)
    bfc = jax.random.uniform(ks[5], (num_classes,), jnp.float32, -lim, lim)
    return dict(w1=w1, b1=b1, w2=w2, b2=b2, wfc=wfc, bfc=bfc)


def reference_forward(x_nchw, p):
    """Pure-JAX reference matching the PyTorch forward semantics."""
    dn = ("NCHW", "HWIO", "NCHW")
    y = lax.conv_general_dilated(x_nchw, p["w1"], (2, 2), "VALID",
                                 dimension_numbers=dn, precision=lax.Precision.HIGHEST)
    y = jax.nn.relu(y + p["b1"].reshape(1, -1, 1, 1))
    y = lax.conv_general_dilated(y, p["w2"], (2, 2), "VALID",
                                 dimension_numbers=dn, precision=lax.Precision.HIGHEST)
    y = jax.nn.relu(y + p["b2"].reshape(1, -1, 1, 1))
    y = y.reshape(y.shape[0], -1)
    return y @ p["wfc"] + p["bfc"]


# --------------------------------- main --------------------------------------
if __name__ == "__main__":
    key = jax.random.PRNGKey(0)
    kx, kp = jax.random.split(key)

    # Linear(1024, C) forces 14x14 input (14 -> 6 -> 2 spatial; 256*2*2 = 1024).
    N, in_channels, H, W = 2, 8, 14, 14
    dim_reduced, num_classes = 256, 8

    x = jax.random.normal(kx, (N, in_channels, H, W), jnp.float32)   # NCHW, like PyTorch
    params = init_params(kp, in_channels, dim_reduced, num_classes)
    prep = prepare_params(params, (H, W))                            # one-time preprocessing

    out = class_rcnn_predictor_forward(x, prep, num_classes=num_classes)
    out = jax.block_until_ready(out)
    assert out.shape == (N, num_classes), out.shape

    ref = reference_forward(x, params)
    np.testing.assert_allclose(np.asarray(out), np.asarray(ref), rtol=5e-2, atol=5e-2)

    print("KERNEL_OK")
</pallas_src>

<mosaic_0001>
module attributes {stable_mosaic.version = 11 : i64} {
  func.func @fused_predictor_kernel(%arg0: i32, %arg1: memref<1x36x128xbf16, #tpu.memory_space<vmem>>, %arg2: memref<128x256xbf16, #tpu.memory_space<vmem>>, %arg3: memref<1x256xf32, #tpu.memory_space<vmem>>, %arg4: memref<2304x256xbf16, #tpu.memory_space<vmem>>, %arg5: memref<1x256xf32, #tpu.memory_space<vmem>>, %arg6: memref<1024x128xbf16, #tpu.memory_space<vmem>>, %arg7: memref<1x128xf32, #tpu.memory_space<vmem>>, %arg8: memref<1x1x128xf32, #tpu.memory_space<vmem>>, %arg9: memref<36x256xf32, #tpu.memory_space<vmem>>, %arg10: memref<4x2304xf32, #tpu.memory_space<vmem>>) attributes {dimension_semantics = [#tpu.dimension_semantics<parallel>], iteration_bounds = array<i64: 2>, scalar_prefetch = 0 : i64, scratch_operands = 2 : i64, tpu.core_type = #tpu.core_type<tc>, window_params = [{transform_indices = @transform_0, window_bounds = array<i64: 1, 36, 128>}, {pipeline_mode = #tpu.pipeline_mode<synchronous>, transform_indices = @transform_1, window_bounds = array<i64: 128, 256>}, {pipeline_mode = #tpu.pipeline_mode<synchronous>, transform_indices = @transform_2, window_bounds = array<i64: 1, 256>}, {pipeline_mode = #tpu.pipeline_mode<synchronous>, transform_indices = @transform_3, window_bounds = array<i64: 2304, 256>}, {pipeline_mode = #tpu.pipeline_mode<synchronous>, transform_indices = @transform_4, window_bounds = array<i64: 1, 256>}, {pipeline_mode = #tpu.pipeline_mode<synchronous>, transform_indices = @transform_5, window_bounds = array<i64: 1024, 128>}, {pipeline_mode = #tpu.pipeline_mode<synchronous>, transform_indices = @transform_6, window_bounds = array<i64: 1, 128>}, {transform_indices = @transform_7, window_bounds = array<i64: 1, 1, 128>}]} {
    %c0 = arith.constant 0 : index
    %c0_0 = arith.constant 0 : index
    %c0_1 = arith.constant 0 : index
    %0 = vector.load %arg1[%c0, %c0_0, %c0_1] : memref<1x36x128xbf16, #tpu.memory_space<vmem>>, vector<1x36x128xbf16>
    %1 = vector.shape_cast %0 : vector<1x36x128xbf16> to vector<36x128xbf16>
    %c0_2 = arith.constant 0 : index
    %c0_3 = arith.constant 0 : index
    %2 = vector.load %arg2[%c0_2, %c0_3] : memref<128x256xbf16, #tpu.memory_space<vmem>>, vector<128x256xbf16>
    %cst = arith.constant dense<0.000000e+00> : vector<36x256xf32>
    %3 = tpu.matmul %1, %2, %cst {dimension_numbers = #tpu.dot_dimension_numbers<[1], [0], [0], [1], [0, 0, 1, 1], [], []>} : vector<36x128xbf16>, vector<128x256xbf16>, vector<36x256xf32> -> vector<36x256xf32>
    %c0_4 = arith.constant 0 : index
    %c0_5 = arith.constant 0 : index
    %4 = vector.load %arg3[%c0_4, %c0_5] : memref<1x256xf32, #tpu.memory_space<vmem>>, vector<1x256xf32>
    %5 = vector.broadcast %4 : vector<1x256xf32> to vector<36x256xf32>
    %6 = arith.addf %3, %5 : vector<36x256xf32>
    %cst_6 = arith.constant 0.000000e+00 : f32
    %7 = vector.broadcast %cst_6 : f32 to vector<36x256xf32>
    %8 = arith.maximumf %6, %7 : vector<36x256xf32>
    %c0_7 = arith.constant 0 : index
    %c0_8 = arith.constant 0 : index
    %9 = vector.load %arg9[%c0_7, %c0_8] : memref<36x256xf32, #tpu.memory_space<vmem>>, vector<36x256xf32>
    tpu.vector_store %arg9[%c0_7, %c0_8], %8 {strides = array<i32>} : memref<36x256xf32, #tpu.memory_space<vmem>>, vector<36x256xf32>,
    %c0_9 = arith.constant 0 : index
    %c0_10 = arith.constant 0 : index
    %10 = vector.load %arg9[%c0_9, %c0_10] : memref<36x256xf32, #tpu.memory_space<vmem>>, vector<1x256xf32>
    %c0_11 = arith.constant 0 : index
    %c0_12 = arith.constant 0 : index
    %11 = vector.load %arg10[%c0_11, %c0_12] : memref<4x2304xf32, #tpu.memory_space<vmem>>, vector<1x256xf32>
    tpu.vector_store %arg10[%c0_11, %c0_12], %10 {strides = array<i32>} : memref<4x2304xf32, #tpu.memory_space<vmem>>, vector<1x256xf32>,
    %c2 = arith.constant 2 : index
    %c0_13 = arith.constant 0 : index
    %12 = vector.load %arg9[%c2, %c0_13] : memref<36x256xf32, #tpu.memory_space<vmem>>, vector<1x256xf32>
    %c1 = arith.constant 1 : index
    %c0_14 = arith.constant 0 : index
    %13 = vector.load %arg10[%c1, %c0_14] : memref<4x2304xf32, #tpu.memory_space<vmem>>, vector<1x256xf32>
    tpu.vector_store %arg10[%c1, %c0_14], %12 {strides = array<i32>} : memref<4x2304xf32, #tpu.memory_space<vmem>>, vector<1x256xf32>,
    %c12 = arith.constant 12 : index
    %c0_15 = arith.constant 0 : index
    %14 = vector.load %arg9[%c12, %c0_15] : memref<36x256xf32, #tpu.memory_space<vmem>>, vector<1x256xf32>
    %c2_16 = arith.constant 2 : index
    %c0_17 = arith.constant 0 : index
    %15 = vector.load %arg10[%c2_16, %c0_17] : memref<4x2304xf32, #tpu.memory_space<vmem>>, vector<1x256xf32>
    tpu.vector_store %arg10[%c2_16, %c0_17], %14 {strides = array<i32>} : memref<4x2304xf32, #tpu.memory_space<vmem>>, vector<1x256xf32>,
    %c14 = arith.constant 14 : index
    %c0_18 = arith.constant 0 : index
    %16 = vector.load %arg9[%c14, %c0_18] : memref<36x256xf32, #tpu.memory_space<vmem>>, vector<1x256xf32>
    %c3 = arith.constant 3 : index
    %c0_19 = arith.constant 0 : index
    %17 = vector.load %arg10[%c3, %c0_19] : memref<4x2304xf32, #tpu.memory_space<vmem>>, vector<1x256xf32>
    tpu.vector_store %arg10[%c3, %c0_19], %16 {strides = array<i32>} : memref<4x2304xf32, #tpu.memory_space<vmem>>, vector<1x256xf32>,
    %c1_20 = arith.constant 1 : index
    %c0_21 = arith.constant 0 : index
    %18 = vector.load %arg9[%c1_20, %c0_21] : memref<36x256xf32, #tpu.memory_space<vmem>>, vector<1x256xf32>
    %c0_22 = arith.constant 0 : index
    %c256 = arith.constant 256 : index
    %19 = vector.load %arg10[%c0_22, %c256] : memref<4x2304xf32, #tpu.memory_space<vmem>>, vector<1x256xf32>
    tpu.vector_store %arg10[%c0_22, %c256], %18 {strides = array<i32>} : memref<4x2304xf32, #tpu.memory_space<vmem>>, vector<1x256xf32>,
    %c3_23 = arith.constant 3 : index
    %c0_24 = arith.constant 0 : index
    %20 = vector.load %arg9[%c3_23, %c0_24] : memref<36x256xf32, #tpu.memory_space<vmem>>, vector<1x256xf32>
    %c1_25 = arith.constant 1 : index
    %c256_26 = arith.constant 256 : index
    %21 = vector.load %arg10[%c1_25, %c256_26] : memref<4x2304xf32, #tpu.memory_space<vmem>>, vector<1x256xf32>
    tpu.vector_store %arg10[%c1_25, %c256_26], %20 {strides = array<i32>} : memref<4x2304xf32, #tpu.memory_space<vmem>>, vector<1x256xf32>,
    %c13 = arith.constant 13 : index
    %c0_27 = arith.constant 0 : index
    %22 = vector.load %arg9[%c13, %c0_27] : memref<36x256xf32, #tpu.memory_space<vmem>>, vector<1x256xf32>
    %c2_28 = arith.constant 2 : index
    %c256_29 = arith.constant 256 : index
    %23 = vector.load %arg10[%c2_28, %c256_29] : memref<4x2304xf32, #tpu.memory_space<vmem>>, vector<1x256xf32>
    tpu.vector_store %arg10[%c2_28, %c256_29], %22 {strides = array<i32>} : memref<4x2304xf32, #tpu.memory_space<vmem>>, vector<1x256xf32>,
    %c15 = arith.constant 15 : index
    %c0_30 = arith.constant 0 : index
    %24 = vector.load %arg9[%c15, %c0_30] : memref<36x256xf32, #tpu.memory_space<vmem>>, vector<1x256xf32>
    %c3_31 = arith.constant 3 : index
    %c256_32 = arith.constant 256 : index
    %25 = vector.load %arg10[%c3_31, %c256_32] : memref<4x2304xf32, #tpu.memory_space<vmem>>, vector<1x256xf32>
    tpu.vector_store %arg10[%c3_31, %c256_32], %24 {strides = array<i32>} : memref<4x2304xf32, #tpu.memory_space<vmem>>, vector<1x256xf32>,
    %c2_33 = arith.constant 2 : index
    %c0_34 = arith.constant 0 : index
    %26 = vector.load %arg9[%c2_33, %c0_34] : memref<36x256xf32, #tpu.memory_space<vmem>>, vector<1x256xf32>
    %c0_35 = arith.constant 0 : index
    %c512 = arith.constant 512 : index
    %27 = vector.load %arg10[%c0_35, %c512] : memref<4x2304xf32, #tpu.memory_space<vmem>>, vector<1x256xf32>
    tpu.vector_store %arg10[%c0_35, %c512], %26 {strides = array<i32>} : memref<4x2304xf32, #tpu.memory_space<vmem>>, vector<1x256xf32>,
    %c4 = arith.constant 4 : index
    %c0_36 = arith.constant 0 : index
    %28 = vector.load %arg9[%c4, %c0_36] : memref<36x256xf32, #tpu.memory_space<vmem>>, vector<1x256xf32>
    %c1_37 = arith.constant 1 : index
    %c512_38 = arith.constant 512 : index
    %29 = vector.load %arg10[%c1_37, %c512_38] : memref<4x2304xf32, #tpu.memory_space<vmem>>, vector<1x256xf32>
    tpu.vector_store %arg10[%c1_37, %c512_38], %28 {strides = array<i32>} : memref<4x2304xf32, #tpu.memory_space<vmem>>, vector<1x256xf32>,
    %c14_39 = arith.constant 14 : index
    %c0_40 = arith.constant 0 : index
    %30 = vector.load %arg9[%c14_39, %c0_40] : memref<36x256xf32, #tpu.memory_space<vmem>>, vector<1x256xf32>
    %c2_41 = arith.constant 2 : index
    %c512_42 = arith.constant 512 : index
    %31 = vector.load %arg10[%c2_41, %c512_42] : memref<4x2304xf32, #tpu.memory_space<vmem>>, vector<1x256xf32>
    tpu.vector_store %arg10[%c2_41, %c512_42], %30 {strides = array<i32>} : memref<4x2304xf32, #tpu.memory_space<vmem>>, vector<1x256xf32>,
    %c16 = arith.constant 16 : index
    %c0_43 = arith.constant 0 : index
    %32 = vector.load %arg9[%c16, %c0_43] : memref<36x256xf32, #tpu.memory_space<vmem>>, vector<1x256xf32>
    %c3_44 = arith.constant 3 : index
    %c512_45 = arith.constant 512 : index
    %33 = vector.load %arg10[%c3_44, %c512_45] : memref<4x2304xf32, #tpu.memory_space<vmem>>, vector<1x256xf32>
    tpu.vector_store %arg10[%c3_44, %c512_45], %32 {strides = array<i32>} : memref<4x2304xf32, #tpu.memory_space<vmem>>, vector<1x256xf32>,
    %c6 = arith.constant 6 : index
    %c0_46 = arith.constant 0 : index
    %34 = vector.load %arg9[%c6, %c0_46] : memref<36x256xf32, #tpu.memory_space<vmem>>, vector<1x256xf32>
    %c0_47 = arith.constant 0 : index
    %c768 = arith.constant 768 : index
    %35 = vector.load %arg10[%c0_47, %c768] : memref<4x2304xf32, #tpu.memory_space<vmem>>, vector<1x256xf32>
    tpu.vector_store %arg10[%c0_47, %c768], %34 {strides = array<i32>} : memref<4x2304xf32, #tpu.memory_space<vmem>>, vector<1x256xf32>,
    %c8 = arith.constant 8 : index
    %c0_48 = arith.constant 0 : index
    %36 = vector.load %arg9[%c8, %c0_48] : memref<36x256xf32, #tpu.memory_space<vmem>>, vector<1x256xf32>
    %c1_49 = arith.constant 1 : index
    %c768_50 = arith.constant 768 : index
    %37 = vector.load %arg10[%c1_49, %c768_50] : memref<4x2304xf32, #tpu.memory_space<vmem>>, vector<1x256xf32>
    tpu.vector_store %arg10[%c1_49, %c768_50], %36 {strides = array<i32>} : memref<4x2304xf32, #tpu.memory_space<vmem>>, vector<1x256xf32>,
    %c18 = arith.constant 18 : index
    %c0_51 = arith.constant 0 : index
    %38 = vector.load %arg9[%c18, %c0_51] : memref<36x256xf32, #tpu.memory_space<vmem>>, vector<1x256xf32>
    %c2_52 = arith.constant 2 : index
    %c768_53 = arith.constant 768 : index
    %39 = vector.load %arg10[%c2_52, %c768_53] : memref<4x2304xf32, #tpu.memory_space<vmem>>, vector<1x256xf32>
    tpu.vector_store %arg10[%c2_52, %c768_53], %38 {strides = array<i32>} : memref<4x2304xf32, #tpu.memory_space<vmem>>, vector<1x256xf32>,
    %c20 = arith.constant 20 : index
    %c0_54 = arith.constant 0 : index
    %40 = vector.load %arg9[%c20, %c0_54] : memref<36x256xf32, #tpu.memory_space<vmem>>, vector<1x256xf32>
    %c3_55 = arith.constant 3 : index
    %c768_56 = arith.constant 768 : index
    %41 = vector.load %arg10[%c3_55, %c768_56] : memref<4x2304xf32, #tpu.memory_space<vmem>>, vector<1x256xf32>
    tpu.vector_store %arg10[%c3_55, %c768_56], %40 {strides = array<i32>} : memref<4x2304xf32, #tpu.memory_space<vmem>>, vector<1x256xf32>,
    %c7 = arith.constant 7 : index
    %c0_57 = arith.constant 0 : index
    %42 = vector.load %arg9[%c7, %c0_57] : memref<36x256xf32, #tpu.memory_space<vmem>>, vector<1x256xf32>
    %c0_58 = arith.constant 0 : index
    %c1024 = arith.constant 1024 : index
    %43 = vector.load %arg10[%c0_58, %c1024] : memref<4x2304xf32, #tpu.memory_space<vmem>>, vector<1x256xf32>
    tpu.vector_store %arg10[%c0_58, %c1024], %42 {strides = array<i32>} : memref<4x2304xf32, #tpu.memory_space<vmem>>, vector<1x256xf32>,
    %c9 = arith.constant 9 : index
    %c0_59 = arith.constant 0 : index
    %44 = vector.load %arg9[%c9, %c0_59] : memref<36x256xf32, #tpu.memory_space<vmem>>, vector<1x256xf32>
    %c1_60 = arith.constant 1 : index
    %c1024_61 = arith.constant 1024 : index
    %45 = vector.load %arg10[%c1_60, %c1024_61] : memref<4x2304xf32, #tpu.memory_space<vmem>>, vector<1x256xf32>
    tpu.vector_store %arg10[%c1_60, %c1024_61], %44 {strides = array<i32>} : memref<4x2304xf32, #tpu.memory_space<vmem>>, vector<1x256xf32>,
    %c19 = arith.constant 19 : index
    %c0_62 = arith.constant 0 : index
    %46 = vector.load %arg9[%c19, %c0_62] : memref<36x256xf32, #tpu.memory_space<vmem>>, vector<1x256xf32>
    %c2_63 = arith.constant 2 : index
    %c1024_64 = arith.constant 1024 : index
    %47 = vector.load %arg10[%c2_63, %c1024_64] : memref<4x2304xf32, #tpu.memory_space<vmem>>, vector<1x256xf32>
    tpu.vector_store %arg10[%c2_63, %c1024_64], %46 {strides = array<i32>} : memref<4x2304xf32, #tpu.memory_space<vmem>>, vector<1x256xf32>,
    %c21 = arith.constant 21 : index
    %c0_65 = arith.constant 0 : index
    %48 = vector.load %arg9[%c21, %c0_65] : memref<36x256xf32, #tpu.memory_space<vmem>>, vector<1x256xf32>
    %c3_66 = arith.constant 3 : index
    %c1024_67 = arith.constant 1024 : index
    %49 = vector.load %arg10[%c3_66, %c1024_67] : memref<4x2304xf32, #tpu.memory_space<vmem>>, vector<1x256xf32>
    tpu.vector_store %arg10[%c3_66, %c1024_67], %48 {strides = array<i32>} : memref<4x2304xf32, #tpu.memory_space<vmem>>, vector<1x256xf32>,
    %c8_68 = arith.constant 8 : index
    %c0_69 = arith.constant 0 : index
    %50 = vector.load %arg9[%c8_68, %c0_69] : memref<36x256xf32, #tpu.memory_space<vmem>>, vector<1x256xf32>
    %c0_70 = arith.constant 0 : index
    %c1280 = arith.constant 1280 : index
    %51 = vector.load %arg10[%c0_70, %c1280] : memref<4x2304xf32, #tpu.memory_space<vmem>>, vector<1x256xf32>
    tpu.vector_store %arg10[%c0_70, %c1280], %50 {strides = array<i32>} : memref<4x2304xf32, #tpu.memory_space<vmem>>, vector<1x256xf32>,
    %c10 = arith.constant 10 : index
    %c0_71 = arith.constant 0 : index
    %52 = vector.load %arg9[%c10, %c0_71] : memref<36x256xf32, #tpu.memory_space<vmem>>, vector<1x256xf32>
    %c1_72 = arith.constant 1 : index
    %c1280_73 = arith.constant 1280 : index
    %53 = vector.load %arg10[%c1_72, %c1280_73] : memref<4x2304xf32, #tpu.memory_space<vmem>>, vector<1x256xf32>
    tpu.vector_store %arg10[%c1_72, %c1280_73], %52 {strides = array<i32>} : memref<4x2304xf32, #tpu.memory_space<vmem>>, vector<1x256xf32>,
    %c20_74 = arith.constant 20 : index
    %c0_75 = arith.constant 0 : index
    %54 = vector.load %arg9[%c20_74, %c0_75] : memref<36x256xf32, #tpu.memory_space<vmem>>, vector<1x256xf32>
    %c2_76 = arith.constant 2 : index
    %c1280_77 = arith.constant 1280 : index
    %55 = vector.load %arg10[%c2_76, %c1280_77] : memref<4x2304xf32, #tpu.memory_space<vmem>>, vector<1x256xf32>
    tpu.vector_store %arg10[%c2_76, %c1280_77], %54 {strides = array<i32>} : memref<4x2304xf32, #tpu.memory_space<vmem>>, vector<1x256xf32>,
    %c22 = arith.constant 22 : index
    %c0_78 = arith.constant 0 : index
    %56 = vector.load %arg9[%c22, %c0_78] : memref<36x256xf32, #tpu.memory_space<vmem>>, vector<1x256xf32>
    %c3_79 = arith.constant 3 : index
    %c1280_80 = arith.constant 1280 : index
    %57 = vector.load %arg10[%c3_79, %c1280_80] : memref<4x2304xf32, #tpu.memory_space<vmem>>, vector<1x256xf32>
    tpu.vector_store %arg10[%c3_79, %c1280_80], %56 {strides = array<i32>} : memref<4x2304xf32, #tpu.memory_space<vmem>>, vector<1x256xf32>,
    %c12_81 = arith.constant 12 : index
    %c0_82 = arith.constant 0 : index
    %58 = vector.load %arg9[%c12_81, %c0_82] : memref<36x256xf32, #tpu.memory_space<vmem>>, vector<1x256xf32>
    %c0_83 = arith.constant 0 : index
    %c1536 = arith.constant 1536 : index
    %59 = vector.load %arg10[%c0_83, %c1536] : memref<4x2304xf32, #tpu.memory_space<vmem>>, vector<1x256xf32>
    tpu.vector_store %arg10[%c0_83, %c1536], %58 {strides = array<i32>} : memref<4x2304xf32, #tpu.memory_space<vmem>>, vector<1x256xf32>,
    %c14_84 = arith.constant 14 : index
    %c0_85 = arith.constant 0 : index
    %60 = vector.load %arg9[%c14_84, %c0_85] : memref<36x256xf32, #tpu.memory_space<vmem>>, vector<1x256xf32>
    %c1_86 = arith.constant 1 : index
    %c1536_87 = arith.constant 1536 : index
    %61 = vector.load %arg10[%c1_86, %c1536_87] : memref<4x2304xf32, #tpu.memory_space<vmem>>, vector<1x256xf32>
    tpu.vector_store %arg10[%c1_86, %c1536_87], %60 {strides = array<i32>} : memref<4x2304xf32, #tpu.memory_space<vmem>>, vector<1x256xf32>,
    %c24 = arith.constant 24 : index
    %c0_88 = arith.constant 0 : index
    %62 = vector.load %arg9[%c24, %c0_88] : memref<36x256xf32, #tpu.memory_space<vmem>>, vector<1x256xf32>
    %c2_89 = arith.constant 2 : index
    %c1536_90 = arith.constant 1536 : index
    %63 = vector.load %arg10[%c2_89, %c1536_90] : memref<4x2304xf32, #tpu.memory_space<vmem>>, vector<1x256xf32>
    tpu.vector_store %arg10[%c2_89, %c1536_90], %62 {strides = array<i32>} : memref<4x2304xf32, #tpu.memory_space<vmem>>, vector<1x256xf32>,
    %c26 = arith.constant 26 : index
    %c0_91 = arith.constant 0 : index
    %64 = vector.load %arg9[%c26, %c0_91] : memref<36x256xf32, #tpu.memory_space<vmem>>, vector<1x256xf32>
    %c3_92 = arith.constant 3 : index
    %c1536_93 = arith.constant 1536 : index
    %65 = vector.load %arg10[%c3_92, %c1536_93] : memref<4x2304xf32, #tpu.memory_space<vmem>>, vector<1x256xf32>
    tpu.vector_store %arg10[%c3_92, %c1536_93], %64 {strides = array<i32>} : memref<4x2304xf32, #tpu.memory_space<vmem>>, vector<1x256xf32>,
    %c13_94 = arith.constant 13 : index
    %c0_95 = arith.constant 0 : index
    %66 = vector.load %arg9[%c13_94, %c0_95] : memref<36x256xf32, #tpu.memory_space<vmem>>, vector<1x256xf32>
    %c0_96 = arith.constant 0 : index
    %c1792 = arith.constant 1792 : index
    %67 = vector.load %arg10[%c0_96, %c1792] : memref<4x2304xf32, #tpu.memory_space<vmem>>, vector<1x256xf32>
    tpu.vector_store %arg10[%c0_96, %c1792], %66 {strides = array<i32>} : memref<4x2304xf32, #tpu.memory_space<vmem>>, vector<1x256xf32>,
    %c15_97 = arith.constant 15 : index
    %c0_98 = arith.constant 0 : index
    %68 = vector.load %arg9[%c15_97, %c0_98] : memref<36x256xf32, #tpu.memory_space<vmem>>, vector<1x256xf32>
    %c1_99 = arith.constant 1 : index
    %c1792_100 = arith.constant 1792 : index
    %69 = vector.load %arg10[%c1_99, %c1792_100] : memref<4x2304xf32, #tpu.memory_space<vmem>>, vector<1x256xf32>
    tpu.vector_store %arg10[%c1_99, %c1792_100], %68 {strides = array<i32>} : memref<4x2304xf32, #tpu.memory_space<vmem>>, vector<1x256xf32>,
    %c25 = arith.constant 25 : index
    %c0_101 = arith.constant 0 : index
    %70 = vector.load %arg9[%c25, %c0_101] : memref<36x256xf32, #tpu.memory_space<vmem>>, vector<1x256xf32>
    %c2_102 = arith.constant 2 : index
    %c1792_103 = arith.constant 1792 : index
    %71 = vector.load %arg10[%c2_102, %c1792_103] : memref<4x2304xf32, #tpu.memory_space<vmem>>, vector<1x256xf32>
    tpu.vector_store %arg10[%c2_102, %c1792_103], %70 {strides = array<i32>} : memref<4x2304xf32, #tpu.memory_space<vmem>>, vector<1x256xf32>,
    %c27 = arith.constant 27 : index
    %c0_104 = arith.constant 0 : index
    %72 = vector.load %arg9[%c27, %c0_104] : memref<36x256xf32, #tpu.memory_space<vmem>>, vector<1x256xf32>
    %c3_105 = arith.constant 3 : index
    %c1792_106 = arith.constant 1792 : index
    %73 = vector.load %arg10[%c3_105, %c1792_106] : memref<4x2304xf32, #tpu.memory_space<vmem>>, vector<1x256xf32>
    tpu.vector_store %arg10[%c3_105, %c1792_106], %72 {strides = array<i32>} : memref<4x2304xf32, #tpu.memory_space<vmem>>, vector<1x256xf32>,
    %c14_107 = arith.constant 14 : index
    %c0_108 = arith.constant 0 : index
    %74 = vector.load %arg9[%c14_107, %c0_108] : memref<36x256xf32, #tpu.memory_space<vmem>>, vector<1x256xf32>
    %c0_109 = arith.constant 0 : index
    %c2048 = arith.constant 2048 : index
    %75 = vector.load %arg10[%c0_109, %c2048] : memref<4x2304xf32, #tpu.memory_space<vmem>>, vector<1x256xf32>
    tpu.vector_store %arg10[%c0_109, %c2048], %74 {strides = array<i32>} : memref<4x2304xf32, #tpu.memory_space<vmem>>, vector<1x256xf32>,
    %c16_110 = arith.constant 16 : index
    %c0_111 = arith.constant 0 : index
    %76 = vector.load %arg9[%c16_110, %c0_111] : memref<36x256xf32, #tpu.memory_space<vmem>>, vector<1x256xf32>
    %c1_112 = arith.constant 1 : index
    %c2048_113 = arith.constant 2048 : index
    %77 = vector.load %arg10[%c1_112, %c2048_113] : memref<4x2304xf32, #tpu.memory_space<vmem>>, vector<1x256xf32>
    tpu.vector_store %arg10[%c1_112, %c2048_113], %76 {strides = array<i32>} : memref<4x2304xf32, #tpu.memory_space<vmem>>, vector<1x256xf32>,
    %c26_114 = arith.constant 26 : index
    %c0_115 = arith.constant 0 : index
    %78 = vector.load %arg9[%c26_114, %c0_115] : memref<36x256xf32, #tpu.memory_space<vmem>>, vector<1x256xf32>
    %c2_116 = arith.constant 2 : index
    %c2048_117 = arith.constant 2048 : index
    %79 = vector.load %arg10[%c2_116, %c2048_117] : memref<4x2304xf32, #tpu.memory_space<vmem>>, vector<1x256xf32>
    tpu.vector_store %arg10[%c2_116, %c2048_117], %78 {strides = array<i32>} : memref<4x2304xf32, #tpu.memory_space<vmem>>, vector<1x256xf32>,
    %c28 = arith.constant 28 : index
    %c0_118 = arith.constant 0 : index
    %80 = vector.load %arg9[%c28, %c0_118] : memref<36x256xf32, #tpu.memory_space<vmem>>, vector<1x256xf32>
    %c3_119 = arith.constant 3 : index
    %c2048_120 = arith.constant 2048 : index
    %81 = vector.load %arg10[%c3_119, %c2048_120] : memref<4x2304xf32, #tpu.memory_space<vmem>>, vector<1x256xf32>
    tpu.vector_store %arg10[%c3_119, %c2048_120], %80 {strides = array<i32>} : memref<4x2304xf32, #tpu.memory_space<vmem>>, vector<1x256xf32>,
    %c0_121 = arith.constant 0 : index
    %c0_122 = arith.constant 0 : index
    %82 = vector.load %arg10[%c0_121, %c0_122] : memref<4x2304xf32, #tpu.memory_space<vmem>>, vector<4x2304xf32>
    %83 = arith.truncf %82 : vector<4x2304xf32> to vector<4x2304xbf16>
    %c0_123 = arith.constant 0 : index
    %c0_124 = arith.constant 0 : index
    %84 = vector.load %arg4[%c0_123, %c0_124] : memref<2304x256xbf16, #tpu.memory_space<vmem>>, vector<2304x256xbf16>
    %cst_125 = arith.constant dense<0.000000e+00> : vector<4x256xf32>
    %85 = tpu.matmul %83, %84, %cst_125 {dimension_numbers = #tpu.dot_dimension_numbers<[1], [0], [0], [1], [0, 0, 1, 1], [], []>} : vector<4x2304xbf16>, vector<2304x256xbf16>, vector<4x256xf32> -> vector<4x256xf32>
    %c0_126 = arith.constant 0 : index
    %c0_127 = arith.constant 0 : index
    %86 = vector.load %arg5[%c0_126, %c0_127] : memref<1x256xf32, #tpu.memory_space<vmem>>, vector<1x256xf32>
    %87 = vector.broadcast %86 : vector<1x256xf32> to vector<4x256xf32>
    %88 = arith.addf %85, %87 : vector<4x256xf32>
    %cst_128 = arith.constant 0.000000e+00 : f32
    %89 = vector.broadcast %cst_128 : f32 to vector<4x256xf32>
    %90 = arith.maximumf %88, %89 : vector<4x256xf32>
    %cst_129 = arith.constant 0.000000e+00 : f32
    %91 = vector.broadcast %cst_129 : f32 to vector<1x128xf32>
    %92 = vector.extract_strided_slice %90 {offsets = [0, 0], sizes = [1, 256], strides = [1, 1]} : vector<4x256xf32> to vector<1x256xf32>
    %93 = arith.truncf %92 : vector<1x256xf32> to vector<1x256xbf16>
    %c0_130 = arith.constant 0 : index
    %c0_131 = arith.constant 0 : index
    %94 = vector.load %arg6[%c0_130, %c0_131] : memref<1024x128xbf16, #tpu.memory_space<vmem>>, vector<256x128xbf16>
    %cst_132 = arith.constant dense<0.000000e+00> : vector<1x128xf32>
    %95 = tpu.matmul %93, %94, %cst_132 {dimension_numbers = #tpu.dot_dimension_numbers<[1], [0], [0], [1], [0, 0, 1, 1], [], []>} : vector<1x256xbf16>, vector<256x128xbf16>, vector<1x128xf32> -> vector<1x128xf32>
    %96 = arith.addf %91, %95 : vector<1x128xf32>
    %97 = vector.extract_strided_slice %90 {offsets = [1, 0], sizes = [1, 256], strides = [1, 1]} : vector<4x256xf32> to vector<1x256xf32>
    %98 = arith.truncf %97 : vector<1x256xf32> to vector<1x256xbf16>
    %c256_133 = arith.constant 256 : index
    %c0_134 = arith.constant 0 : index
    %99 = vector.load %arg6[%c256_133, %c0_134] : memref<1024x128xbf16, #tpu.memory_space<vmem>>, vector<256x128xbf16>
    %cst_135 = arith.constant dense<0.000000e+00> : vector<1x128xf32>
    %100 = tpu.matmul %98, %99, %cst_135 {dimension_numbers = #tpu.dot_dimension_numbers<[1], [0], [0], [1], [0, 0, 1, 1], [], []>} : vector<1x256xbf16>, vector<256x128xbf16>, vector<1x128xf32> -> vector<1x128xf32>
    %101 = arith.addf %96, %100 : vector<1x128xf32>
    %102 = vector.extract_strided_slice %90 {offsets = [2, 0], sizes = [1, 256], strides = [1, 1]} : vector<4x256xf32> to vector<1x256xf32>
    %103 = arith.truncf %102 : vector<1x256xf32> to vector<1x256xbf16>
    %c512_136 = arith.constant 512 : index
    %c0_137 = arith.constant 0 : index
    %104 = vector.load %arg6[%c512_136, %c0_137] : memref<1024x128xbf16, #tpu.memory_space<vmem>>, vector<256x128xbf16>
    %cst_138 = arith.constant dense<0.000000e+00> : vector<1x128xf32>
    %105 = tpu.matmul %103, %104, %cst_138 {dimension_numbers = #tpu.dot_dimension_numbers<[1], [0], [0], [1], [0, 0, 1, 1], [], []>} : vector<1x256xbf16>, vector<256x128xbf16>, vector<1x128xf32> -> vector<1x128xf32>
    %106 = arith.addf %101, %105 : vector<1x128xf32>
    %107 = vector.extract_strided_slice %90 {offsets = [3, 0], sizes = [1, 256], strides = [1, 1]} : vector<4x256xf32> to vector<1x256xf32>
    %108 = arith.truncf %107 : vector<1x256xf32> to vector<1x256xbf16>
    %c768_139 = arith.constant 768 : index
    %c0_140 = arith.constant 0 : index
    %109 = vector.load %arg6[%c768_139, %c0_140] : memref<1024x128xbf16, #tpu.memory_space<vmem>>, vector<256x128xbf16>
    %cst_141 = arith.constant dense<0.000000e+00> : vector<1x128xf32>
    %110 = tpu.matmul %108, %109, %cst_141 {dimension_numbers = #tpu.dot_dimension_numbers<[1], [0], [0], [1], [0, 0, 1, 1], [], []>} : vector<1x256xbf16>, vector<256x128xbf16>, vector<1x128xf32> -> vector<1x128xf32>
    %111 = arith.addf %106, %110 : vector<1x128xf32>
    %c0_142 = arith.constant 0 : index
    %c0_143 = arith.constant 0 : index
    %112 = vector.load %arg7[%c0_142, %c0_143] : memref<1x128xf32, #tpu.memory_space<vmem>>, vector<1x128xf32>
    %113 = arith.addf %111, %112 : vector<1x128xf32>
    %114 = vector.shape_cast %113 : vector<1x128xf32> to vector<1x1x128xf32>
    %c0_144 = arith.constant 0 : index
    %c0_145 = arith.constant 0 : index
    %c0_146 = arith.constant 0 : index
    %115 = vector.load %arg8[%c0_144, %c0_145, %c0_146] : memref<1x1x128xf32, #tpu.memory_space<vmem>>, vector<1x1x128xf32>
    tpu.vector_store %arg8[%c0_144, %c0_145, %c0_146], %114 {strides = array<i32>} : memref<1x1x128xf32, #tpu.memory_space<vmem>>, vector<1x1x128xf32>,
    return
  }
  func.func @transform_0(%arg0: i32) -> (i32, i32, i32) {
    %c0_i32 = arith.constant 0 : i32
    %c0_i32_0 = arith.constant 0 : i32
    %c0_i32_1 = arith.constant 0 : i32
    return %arg0, %c0_i32, %c0_i32_0 : i32, i32, i32
  }
  func.func @transform_1(%arg0: i32) -> (i32, i32) {
    %c0_i32 = arith.constant 0 : i32
    %c0_i32_0 = arith.constant 0 : i32
    %c0_i32_1 = arith.constant 0 : i32
    return %c0_i32, %c0_i32_0 : i32, i32
  }
  func.func @transform_2(%arg0: i32) -> (i32, i32) {
    %c0_i32 = arith.constant 0 : i32
    %c0_i32_0 = arith.constant 0 : i32
    %c0_i32_1 = arith.constant 0 : i32
    return %c0_i32, %c0_i32_0 : i32, i32
  }
  func.func @transform_3(%arg0: i32) -> (i32, i32) {
    %c0_i32 = arith.constant 0 : i32
    %c0_i32_0 = arith.constant 0 : i32
    %c0_i32_1 = arith.constant 0 : i32
    return %c0_i32, %c0_i32_0 : i32, i32
  }
  func.func @transform_4(%arg0: i32) -> (i32, i32) {
    %c0_i32 = arith.constant 0 : i32
    %c0_i32_0 = arith.constant 0 : i32
    %c0_i32_1 = arith.constant 0 : i32
    return %c0_i32, %c0_i32_0 : i32, i32
  }
  func.func @transform_5(%arg0: i32) -> (i32, i32) {
    %c0_i32 = arith.constant 0 : i32
    %c0_i32_0 = arith.constant 0 : i32
    %c0_i32_1 = arith.constant 0 : i32
    return %c0_i32, %c0_i32_0 : i32, i32
  }
  func.func @transform_6(%arg0: i32) -> (i32, i32) {
    %c0_i32 = arith.constant 0 : i32
    %c0_i32_0 = arith.constant 0 : i32
    %c0_i32_1 = arith.constant 0 : i32
    return %c0_i32, %c0_i32_0 : i32, i32
  }
  func.func @transform_7(%arg0: i32) -> (i32, i32, i32) {
    %c0_i32 = arith.constant 0 : i32
    %c0_i32_0 = arith.constant 0 : i32
    %c0_i32_1 = arith.constant 0 : i32
    return %arg0, %c0_i32, %c0_i32_0 : i32, i32, i32
  }
}

</mosaic_0001>

<llo_original>
// kernel: class_rcnn_predictor_forward.1
$region0: #{class_rcnn_predictor_forward.1}
  #allocation0 [shape = 'u32[]', space=smem, size = 0x4, offset = 0x4, fixed_abs, tag = 'smem constant byte address 0x4 - core index']
  #allocation1 [shape = 'u32[144,128]{1,0:T(1,128)}', space=vmem, size = 0x12000, scoped, tag = 'internal scratch']
  #allocation2 [shape = 'f32[36,256]{1,0:T(8,128)}', space=vmem, size = 0xa000, scoped, tag = 'scratch operand']
  #allocation3 [shape = 'f32[4,2304]{1,0:T(4,128)}', space=vmem, size = 0x9000, scoped, tag = 'scratch operand']
  %s0 = inlined_call_operand.vmem [shape: bf16[2,36,128], index: 0, kind: input, shape index: {}]
  %s1 = inlined_call_operand.vmem [shape: bf16[128,256], index: 1, kind: input, shape index: {}]
  %s2 = inlined_call_operand.vmem [shape: f32[1,256], index: 2, kind: input, shape index: {}]
  %s3 = inlined_call_operand.vmem [shape: bf16[2304,256], index: 3, kind: input, shape index: {}]
  %s4 = inlined_call_operand.vmem [shape: f32[1,256], index: 4, kind: input, shape index: {}]
  %s5 = inlined_call_operand.vmem [shape: bf16[1024,128], index: 5, kind: input, shape index: {}]
  %s6 = inlined_call_operand.vmem [shape: f32[1,128], index: 6, kind: input, shape index: {}]
  %s7 = inlined_call_operand.hbm [shape: f32[2,1,128], index: 7, kind: output, shape index: {}]
  %s8 = sld [smem:[#allocation0]]
  $region61: #{class_rcnn_predictor_forward.1} parent=0
    _
  %s10 = ssub.s32 1, %s8
  %s11 = scalar_select 0, %s10, %s8
  $region1: #{class_rcnn_predictor_forward.1} parent=0
    #allocation4 [shape = 'u8[1024]{0}', space=vmem, size = 0x400, scoped, tag = 'output window, operand 0']
    #allocation5 [shape = 's32[2]{0}', space=sflag, size = 0x8, scoped, tag = 'scoped memory for class_rcnn_predictor_forward.1']
    %12 = vsyncpa [#allocation5], 0
    %s13 = scalar_lea.sflag [#allocation5], 1
    %14 = vsyncpa %s13, 0
    loop: start=0, step=1, limit=4
    $region2: #{class_rcnn_predictor_forward.1} parent=1 // loop_pre_header
      _
    $region3: #{class_rcnn_predictor_forward.1} parent=1 // loop_header
      %s16 = sphi 0, %s20
      %p17 = scmp.ge.s32.totalorder %s16, 4
      %s26 = sphi 0, %s28
      %s29 = sphi 0, %s26
      %s30 = sphi 0, %s29
      %s46 = sphi 0, %s30
      %s50 = sphi 0, %s50
      %s52 = sphi 0, %s50
      %s53 = sphi 0, %s52
      %s67 = sphi 0, %s53
      %s71 = sphi 0, %s71
      %s73 = sphi 0, %s71
      %s74 = sphi 0, %s73
      %s88 = sphi 0, %s74
      %s92 = sphi 0, %s92
      %s94 = sphi 0, %s92
      %s95 = sphi 0, %s94
      %s109 = sphi 0, %s95
      %s113 = sphi 0, %s113
      %s115 = sphi 0, %s113
      %s116 = sphi 0, %s115
      %s130 = sphi 0, %s116
      %s134 = sphi 0, %s134
      %s136 = sphi 0, %s134
      %s137 = sphi 0, %s136
      %s151 = sphi 0, %s137
      %s155 = sphi 0, %s155
      %s157 = sphi 0, %s155
      %s158 = sphi 0, %s157
      %s172 = sphi 0, %s158
      %s178 = sphi 0, %s180
      %s181 = sphi 0, %s178
      %s182 = sphi 0, %s181
      %s198 = sphi 0, %s182
    $region4: #{class_rcnn_predictor_forward.1} parent=1 // loop_header_branch
      %19 = sbr.rel (%p17) target = $region8
    $region5: #{class_rcnn_predictor_forward.1} parent=1 // loop_body
      %s21 = ssub.s32 %s16, 1
      %s22 = ssub.s32 %s16, 2
      %s23 = sadd.s32 %s16, 1
      %s24 = ssub.s32 %s16, %s23
      %p25 = scmp.eq.s32.totalorder %s24, 0
      %s27 = sadd.s32 %s26, 1
      %s28 = scalar_select %p25, %s26, %s27
      %p31 = pneg %p25
      %p32 = scmp.eq.s32.totalorder %s16, 1
      %p33 = por %p31, %p32
      %p34 = scmp.ne.s32.totalorder %s26, %s29
      %p35 = scmp.eq.s32.totalorder %s16, 0
      %p36 = por %p34, %p35
      %p37 = scmp.ne.s32.totalorder %s26, %s29
      %p38 = scmp.eq.s32.totalorder %s21, 1
      %p39 = por %p37, %p38
      %p40 = scmp.ne.s32.totalorder %s29, %s30
      %p41 = scmp.eq.s32.totalorder %s21, 0
      %p42 = por %p40, %p41
      %p43 = scmp.ne.s32.totalorder %s29, %s30
      %p44 = scmp.eq.s32.totalorder %s22, 1
      %p45 = por %p43, %p44
      %p47 = scmp.ne.s32.totalorder %s30, %s46
      %p48 = scmp.eq.s32.totalorder %s22, 0
      %p49 = por %p47, %p48
      %s51 = sadd.s32 %s50, 1
      %p54 = scmp.eq.s32.totalorder %s16, 1
      %p55 = scmp.ne.s32.totalorder %s50, %s52
      %p56 = scmp.eq.s32.totalorder %s16, 0
      %p57 = por %p55, %p56
      %p58 = scmp.ne.s32.totalorder %s50, %s52
      %p59 = scmp.eq.s32.totalorder %s21, 1
      %p60 = por %p58, %p59
      %p61 = scmp.ne.s32.totalorder %s52, %s53
      %p62 = scmp.eq.s32.totalorder %s21, 0
      %p63 = por %p61, %p62
      %p64 = scmp.ne.s32.totalorder %s52, %s53
      %p65 = scmp.eq.s32.totalorder %s22, 1
      %p66 = por %p64, %p65
      %p68 = scmp.ne.s32.totalorder %s53, %s67
      %p69 = scmp.eq.s32.totalorder %s22, 0
      %p70 = por %p68, %p69
      %s72 = sadd.s32 %s71, 1
      %p75 = scmp.eq.s32.totalorder %s16, 1
      %p76 = scmp.ne.s32.totalorder %s71, %s73
      %p77 = scmp.eq.s32.totalorder %s16, 0
      %p78 = por %p76, %p77
      %p79 = scmp.ne.s32.totalorder %s71, %s73
      %p80 = scmp.eq.s32.totalorder %s21, 1
      %p81 = por %p79, %p80
      %p82 = scmp.ne.s32.totalorder %s73, %s74
      %p83 = scmp.eq.s32.totalorder %s21, 0
      %p84 = por %p82, %p83
      %p85 = scmp.ne.s32.totalorder %s73, %s74
      %p86 = scmp.eq.s32.totalorder %s22, 1
      %p87 = por %p85, %p86
      %p89 = scmp.ne.s32.totalorder %s74, %s88
      %p90 = scmp.eq.s32.totalorder %s22, 0
      %p91 = por %p89, %p90
      %s93 = sadd.s32 %s92, 1
      %p96 = scmp.eq.s32.totalorder %s16, 1
      %p97 = scmp.ne.s32.totalorder %s92, %s94
      %p98 = scmp.eq.s32.totalorder %s16, 0
      %p99 = por %p97, %p98
      %p100 = scmp.ne.s32.totalorder %s92, %s94
      %p101 = scmp.eq.s32.totalorder %s21, 1
      %p102 = por %p100, %p101
      %p103 = scmp.ne.s32.totalorder %s94, %s95
      %p104 = scmp.eq.s32.totalorder %s21, 0
      %p105 = por %p103, %p104
      %p106 = scmp.ne.s32.totalorder %s94, %s95
      %p107 = scmp.eq.s32.totalorder %s22, 1
      %p108 = por %p106, %p107
      %p110 = scmp.ne.s32.totalorder %s95, %s109
      %p111 = scmp.eq.s32.totalorder %s22, 0
      %p112 = por %p110, %p111
      %s114 = sadd.s32 %s113, 1
      %p117 = scmp.eq.s32.totalorder %s16, 1
      %p118 = scmp.ne.s32.totalorder %s113, %s115
      %p119 = scmp.eq.s32.totalorder %s16, 0
      %p120 = por %p118, %p119
      %p121 = scmp.ne.s32.totalorder %s113, %s115
      %p122 = scmp.eq.s32.totalorder %s21, 1
      %p123 = por %p121, %p122
      %p124 = scmp.ne.s32.totalorder %s115, %s116
      %p125 = scmp.eq.s32.totalorder %s21, 0
      %p126 = por %p124, %p125
      %p127 = scmp.ne.s32.totalorder %s115, %s116
      %p128 = scmp.eq.s32.totalorder %s22, 1
      %p129 = por %p127, %p128
      %p131 = scmp.ne.s32.totalorder %s116, %s130
      %p132 = scmp.eq.s32.totalorder %s22, 0
      %p133 = por %p131, %p132
      %s135 = sadd.s32 %s134, 1
      %p138 = scmp.eq.s32.totalorder %s16, 1
      %p139 = scmp.ne.s32.totalorder %s134, %s136
      %p140 = scmp.eq.s32.totalorder %s16, 0
      %p141 = por %p139, %p140
      %p142 = scmp.ne.s32.totalorder %s134, %s136
      %p143 = scmp.eq.s32.totalorder %s21, 1
      %p144 = por %p142, %p143
      %p145 = scmp.ne.s32.totalorder %s136, %s137
      %p146 = scmp.eq.s32.totalorder %s21, 0
      %p147 = por %p145, %p146
      %p148 = scmp.ne.s32.totalorder %s136, %s137
      %p149 = scmp.eq.s32.totalorder %s22, 1
      %p150 = por %p148, %p149
      %p152 = scmp.ne.s32.totalorder %s137, %s151
      %p153 = scmp.eq.s32.totalorder %s22, 0
      %p154 = por %p152, %p153
      %s156 = sadd.s32 %s155, 1
      %p159 = scmp.eq.s32.totalorder %s16, 1
      %p160 = scmp.ne.s32.totalorder %s155, %s157
      %p161 = scmp.eq.s32.totalorder %s16, 0
      %p162 = por %p160, %p161
      %p163 = scmp.ne.s32.totalorder %s155, %s157
      %p164 = scmp.eq.s32.totalorder %s21, 1
      %p165 = por %p163, %p164
      %p166 = scmp.ne.s32.totalorder %s157, %s158
      %p167 = scmp.eq.s32.totalorder %s21, 0
      %p168 = por %p166, %p167
      %p169 = scmp.ne.s32.totalorder %s157, %s158
      %p170 = scmp.eq.s32.totalorder %s22, 1
      %p171 = por %p169, %p170
      %p173 = scmp.ne.s32.totalorder %s158, %s172
      %p174 = scmp.eq.s32.totalorder %s22, 0
      %p175 = por %p173, %p174
      %s176 = ssub.s32 %s16, %s23
      %p177 = scmp.eq.s32.totalorder %s176, 0
      %s179 = sadd.s32 %s178, 1
      %s180 = scalar_select %p177, %s178, %s179
      %p183 = pneg %p177
      %p184 = scmp.eq.s32.totalorder %s16, 1
      %p185 = por %p183, %p184
      %p186 = scmp.ne.s32.totalorder %s178, %s181
      %p187 = scmp.eq.s32.totalorder %s16, 0
      %p188 = por %p186, %p187
      %p189 = scmp.ne.s32.totalorder %s178, %s181
      %p190 = scmp.eq.s32.totalorder %s21, 1
      %p191 = por %p189, %p190
      %p192 = scmp.ne.s32.totalorder %s181, %s182
      %p193 = scmp.eq.s32.totalorder %s21, 0
      %p194 = por %p192, %p193
      %p195 = scmp.ne.s32.totalorder %s181, %s182
      %p196 = scmp.eq.s32.totalorder %s22, 1
      %p197 = por %p195, %p196
      %p199 = scmp.ne.s32.totalorder %s182, %s198
      %p200 = scmp.eq.s32.totalorder %s22, 0
      %p201 = por %p199, %p200
      %p202 = scmp.le.s32.totalorder 1, %s16
      %p203 = scmp.lt.s32.totalorder %s16, 3
      %p204 = pnand %p202, %p203
      %p205 = pneg %p204
      // Predicated region
      $region9: #{class_rcnn_predictor_forward.1} parent=5 // pred_check
        _
      $region10: #{class_rcnn_predictor_forward.1} parent=5 // pred_check_branch
        %207 = sbr.rel (%p204) target = $region12
      $region11: #{class_rcnn_predictor_forward.1} parent=5 // pred_region
        %s208 = ssub.s32 %s16, 1
        // Predicated region
        $region13: #{class_rcnn_predictor_forward.1} parent=11 // pred_check
          %p209 = pneg %p63
        $region14: #{class_rcnn_predictor_forward.1} parent=11 // pred_check_branch
          %211 = sbr.rel (%p209) target = $region16
        $region15: #{class_rcnn_predictor_forward.1} parent=11 // pred_region
          _
        $region16: #{class_rcnn_predictor_forward.1} parent=11 // pred_fallthru
          _
        // Predicated region
        $region17: #{class_rcnn_predictor_forward.1} parent=11 // pred_check
          %p212 = pneg %p84
        $region18: #{class_rcnn_predictor_forward.1} parent=11 // pred_check_branch
          %214 = sbr.rel (%p212) target = $region20
        $region19: #{class_rcnn_predictor_forward.1} parent=11 // pred_region
          _
        $region20: #{class_rcnn_predictor_forward.1} parent=11 // pred_fallthru
          _
        // Predicated region
        $region21: #{class_rcnn_predictor_forward.1} parent=11 // pred_check
          %p215 = pneg %p105
        $region22: #{class_rcnn_predictor_forward.1} parent=11 // pred_check_branch
          %217 = sbr.rel (%p215) target = $region24
        $region23: #{class_rcnn_predictor_forward.1} parent=11 // pred_region
          _
        $region24: #{class_rcnn_predictor_forward.1} parent=11 // pred_fallthru
          _
        // Predicated region
        $region25: #{class_rcnn_predictor_forward.1} parent=11 // pred_check
          %p218 = pneg %p126
        $region26: #{class_rcnn_predictor_forward.1} parent=11 // pred_check_branch
          %220 = sbr.rel (%p218) target = $region28
        $region27: #{class_rcnn_predictor_forward.1} parent=11 // pred_region
          _
        $region28: #{class_rcnn_predictor_forward.1} parent=11 // pred_fallthru
          _
        // Predicated region
        $region29: #{class_rcnn_predictor_forward.1} parent=11 // pred_check
          %p221 = pneg %p147
        $region30: #{class_rcnn_predictor_forward.1} parent=11 // pred_check_branch
          %223 = sbr.rel (%p221) target = $region32
        $region31: #{class_rcnn_predictor_forward.1} parent=11 // pred_region
          _
        $region32: #{class_rcnn_predictor_forward.1} parent=11 // pred_fallthru
          _
        // Predicated region
        $region33: #{class_rcnn_predictor_forward.1} parent=11 // pred_check
          %p224 = pneg %p168
        $region34: #{class_rcnn_predictor_forward.1} parent=11 // pred_check_branch
          %226 = sbr.rel (%p224) target = $region36
        $region35: #{class_rcnn_predictor_forward.1} parent=11 // pred_region
          _
        $region36: #{class_rcnn_predictor_forward.1} parent=11 // pred_fallthru
          _
      $region12: #{class_rcnn_predictor_forward.1} parent=5 // pred_fallthru
        _
      %p227 = scmp.lt.s32.totalorder %s16, 2
      // Predicated region
      $region37: #{class_rcnn_predictor_forward.1} parent=5 // pred_check
        %p228 = pneg %p227
      $region38: #{class_rcnn_predictor_forward.1} parent=5 // pred_check_branch
        %230 = sbr.rel (%p228) target = $region40
      $region39: #{class_rcnn_predictor_forward.1} parent=5 // pred_region
        // Predicated region
        $region41: #{class_rcnn_predictor_forward.1} parent=39 // pred_check
          %p231 = pneg %p36
        $region42: #{class_rcnn_predictor_forward.1} parent=39 // pred_check_branch
          %233 = sbr.rel (%p231) target = $region44
        $region43: #{class_rcnn_predictor_forward.1} parent=39 // pred_region
          %p234 = scmp.lt.s32.totalorder %s16, 1
          %s235 = scalar_select %p234, %s16, 1
          %s236 = smul.addr %s235, 5
          %s237 = smul.addr %s236, 4
          %s238 = scalar_lea.vmem %s0, %s237
        $region44: #{class_rcnn_predictor_forward.1} parent=39 // pred_fallthru
          _
      $region40: #{class_rcnn_predictor_forward.1} parent=5 // pred_fallthru
        _
      %p239 = scmp.le.s32.totalorder 1, %s16
      %p240 = scmp.lt.s32.totalorder %s16, 3
      %p241 = pnand %p239, %p240
      %p242 = pneg %p241
      // Predicated region
      $region45: #{class_rcnn_predictor_forward.1} parent=5 // pred_check
        _
      $region46: #{class_rcnn_predictor_forward.1} parent=5 // pred_check_branch
        %244 = sbr.rel (%p241) target = $region48
      $region47: #{class_rcnn_predictor_forward.1} parent=5 // pred_region
        %s245 = ssub.s32 %s16, 1
        %p246 = scmp.lt.s32.totalorder %s21, 1
        %s247 = scalar_select %p246, %s21, 1
        %s248 = smul.addr %s247, 5
        %s249 = smul.addr %s248, 4
        %s250 = scalar_lea.vmem %s0, %s249
        %p251 = pneg %p42
        %p252 = pneg %p39
        %p253 = pneg %p63
        %p254 = pneg %p60
        %p255 = pneg %p84
        %p256 = pneg %p81
        %p257 = pneg %p105
        %p258 = pneg %p102
        %p259 = pneg %p126
        %p260 = pneg %p123
        %p261 = pneg %p147
        %p262 = pneg %p144
        %p263 = pneg %p168
        %p264 = pneg %p165
        %p265 = pneg %p194
        %p266 = pneg %p191
        %s267 = sand.u32 %s181, 1
        %s268 = scalar_lea.sflag [#allocation5], %s267
        %s269 = sand.u32 %s181, 1
        %s270 = scalar_lea.vmem [#allocation4], %s269
        %p271 = scmp.lt.s32.totalorder %s21, 1
        %s272 = scalar_select %p271, %s21, 1
        %s273 = smul.addr %s272, 5
        %s274 = smul.addr %s273, 4
        %s275 = scalar_lea.vmem %s0, %s274
        %v277 = vld [vmem:[%s275] sm:$0xf]
        %v278 = vld [vmem:[%s275 + $0x4] sm:$0xf]
        %v279 = vld [vmem:[%s275 + $0x8] sm:$0xf]
        %v280 = vld [vmem:[%s275 + $0xc] sm:$0xf]
        %v281 = vld [vmem:[%s275 + $0x10] sm:$0x3]
        %v282 = vld [vmem:[%s1] sm:$0xff]
        %v283 = vld [vmem:[%s1 + $0x8] sm:$0xff]
        %v284 = vld [vmem:[%s1 + $0x10] sm:$0xff]
        %v285 = vld [vmem:[%s1 + $0x18] sm:$0xff]
        %v286 = vld [vmem:[%s1 + $0x20] sm:$0xff]
        %v287 = vld [vmem:[%s1 + $0x28] sm:$0xff]
        %v288 = vld [vmem:[%s1 + $0x30] sm:$0xff]
        %v289 = vld [vmem:[%s1 + $0x38] sm:$0xff]
        %v290 = vld [vmem:[%s1 + $0x40] sm:$0xff]
        %v291 = vld [vmem:[%s1 + $0x48] sm:$0xff]
        %v292 = vld [vmem:[%s1 + $0x50] sm:$0xff]
        %v293 = vld [vmem:[%s1 + $0x58] sm:$0xff]
        %v294 = vld [vmem:[%s1 + $0x60] sm:$0xff]
        %v295 = vld [vmem:[%s1 + $0x68] sm:$0xff]
        %v296 = vld [vmem:[%s1 + $0x70] sm:$0xff]
        %v297 = vld [vmem:[%s1 + $0x78] sm:$0xff]
        %v298 = vld [vmem:[%s2] sm:$0x3]
        %v300 = vlaneseq
        %v301 = vshrl.u32 %v300, 7
        %v302 = vsub.s32 0, %v301
        %v303 = vrot.slane %v298, %v302
        %v304 = vlaneseq
        %v305 = vshrl.u32 %v304, 7
        %v306 = vsub.s32 1, %v305
        %v307 = vrot.slane %v298, %v306
        %v315 = vunpack.c.l.b16 %v277
        %v316 = vunpack.c.l.b16 %v278
        %v317 = vunpack.c.l.b16 %v279
        %v318 = vunpack.c.l.b16 %v280
        %v319 = vunpack.c.l.b16 %v281
        %v320 = vpack.c.b16 %v316, %v315
        %v321 = vpack.c.b16 %v318, %v317
        %v322 = vpack.c.b16 %v319, %v319
        %v342 = vunpack.c.l.b16 %v282
        %v343 = vunpack.c.h.b16 %v282
        %v344 = vunpack.c.l.b16 %v283
        %v345 = vunpack.c.h.b16 %v283
        %v346 = vunpack.c.l.b16 %v284
        %v347 = vunpack.c.h.b16 %v284
        %v348 = vunpack.c.l.b16 %v285
        %v349 = vunpack.c.h.b16 %v285
        %v350 = vunpack.c.l.b16 %v286
        %v351 = vunpack.c.h.b16 %v286
        %v352 = vunpack.c.l.b16 %v287
        %v353 = vunpack.c.h.b16 %v287
        %v354 = vunpack.c.l.b16 %v288
        %v355 = vunpack.c.h.b16 %v288
        %v356 = vunpack.c.l.b16 %v289
        %v357 = vunpack.c.h.b16 %v289
        %v358 = vunpack.c.l.b16 %v290
        %v359 = vunpack.c.h.b16 %v290
        %v360 = vunpack.c.l.b16 %v291
        %v361 = vunpack.c.h.b16 %v291
        %v362 = vunpack.c.l.b16 %v292
        %v363 = vunpack.c.h.b16 %v292
        %v364 = vunpack.c.l.b16 %v293
        %v365 = vunpack.c.h.b16 %v293
        %v366 = vunpack.c.l.b16 %v294
        %v367 = vunpack.c.h.b16 %v294
        %v368 = vunpack.c.l.b16 %v295
        %v369 = vunpack.c.h.b16 %v295
        %v370 = vunpack.c.l.b16 %v296
        %v371 = vunpack.c.h.b16 %v296
        %v372 = vunpack.c.l.b16 %v297
        %v373 = vunpack.c.h.b16 %v297
        %v374 = vpack.c.b16 %v344, %v342
        %v375 = vpack.c.b16 %v345, %v343
        %v376 = vpack.c.b16 %v348, %v346
        %v377 = vpack.c.b16 %v349, %v347
        %v378 = vpack.c.b16 %v352, %v350
        %v379 = vpack.c.b16 %v353, %v351
        %v380 = vpack.c.b16 %v356, %v354
        %v381 = vpack.c.b16 %v357, %v355
        %v382 = vpack.c.b16 %v360, %v358
        %v383 = vpack.c.b16 %v361, %v359
        %v384 = vpack.c.b16 %v364, %v362
        %v385 = vpack.c.b16 %v365, %v363
        %v386 = vpack.c.b16 %v368, %v366
        %v387 = vpack.c.b16 %v369, %v367
        %v388 = vpack.c.b16 %v372, %v370
        %v389 = vpack.c.b16 %v373, %v371
        %406 = vmatprep.subr.bf16.mxu0 %v375
        %407 = vmatpush1.bf16.msra.mxu0 %v374
        %408 = vmatprep.subr.bf16.mxu0 %v377
        %409 = vmatpush1.bf16.msra.mxu0 %v376
        %410 = vmatprep.subr.bf16.mxu0 %v379
        %411 = vmatpush1.bf16.msra.mxu0 %v378
        %412 = vmatprep.subr.bf16.mxu0 %v381
        %413 = vmatpush1.bf16.msra.mxu0 %v380
        %414 = vmatprep.subr.bf16.mxu0 %v383
        %415 = vmatpush1.bf16.msra.mxu0 %v382
        %416 = vmatprep.subr.bf16.mxu0 %v385
        %417 = vmatpush1.bf16.msra.mxu0 %v384
        %418 = vmatprep.subr.bf16.mxu0 %v387
        %419 = vmatpush1.bf16.msra.mxu0 %v386
        %420 = vmatprep.subr.bf16.mxu0 %v389
        %421 = vmatpush1.bf16.msra.mxu0 %v388
        %422 = vmatprep.subr.bf16.mxu0 0
        %423 = vmatpush1.bf16.msra.mxu0 0
        %424 = vmatprep.subr.bf16.mxu0 0
        %425 = vmatpush1.bf16.msra.mxu0 0
        %426 = vmatprep.subr.bf16.mxu0 0
        %427 = vmatpush1.bf16.msra.mxu0 0
        %428 = vmatprep.subr.bf16.mxu0 0
        %429 = vmatpush1.bf16.msra.mxu0 0
        %430 = vmatprep.subr.bf16.mxu0 0
        %431 = vmatpush1.bf16.msra.mxu0 0
        %432 = vmatprep.subr.bf16.mxu0 0
        %433 = vmatpush1.bf16.msra.mxu0 0
        %434 = vmatprep.subr.bf16.mxu0 0
        %435 = vmatpush1.bf16.msra.mxu0 0
        %436 = vmatprep.subr.bf16.mxu0 0
        %437 = vmatpush1.bf16.msra.mxu0 0
        %438 = vmatprep.mubr.bf16.mxu0 0
        %439 = vmatmul.mubr.bf16.gmra.mrb[0].mxu0 %v320
        %v440 = vpop.f32.mrb[0].mxu0
        %v441 = vadd.f32 %v303, %v440
        %v442 = vpop.f32.mrb[0].mxu0
        %v443 = vadd.f32 %v307, %v442
        %v444 = vpop.f32.mrb[0].mxu0
        %v445 = vadd.f32 %v303, %v444
        %v446 = vpop.f32.mrb[0].mxu0
        %v447 = vadd.f32 %v307, %v446
        %448 = vmatprep.mubr.bf16.mxu0 0
        %449 = vmatmul.mubr.bf16.gmra.mrb[0].mxu0 %v321
        %v450 = vpop.f32.mrb[0].mxu0
        %v451 = vadd.f32 %v303, %v450
        %v452 = vpop.f32.mrb[0].mxu0
        %v453 = vadd.f32 %v307, %v452
        %v454 = vpop.f32.mrb[0].mxu0
        %v455 = vadd.f32 %v303, %v454
        %v456 = vpop.f32.mrb[0].mxu0
        %v457 = vadd.f32 %v307, %v456
        %458 = vmatprep.mubr.bf16.mxu0 0
        %459 = vmatmul.mubr.bf16.gmra.mrb[0].mxu0 %v322
        %v460 = vpop.f32.mrb[0].mxu0
        %v461 = vadd.f32 %v303, %v460
        %v462 = vpop.f32.mrb[0].mxu0
        %v463 = vadd.f32 %v307, %v462
        %v464 = vpop.f32.mrb[0].mxu0
        %v465 = vpop.f32.mrb[0].mxu0
        %466 = vdwg.mxu0
        %v467 = vmax.f32 %v441, 0.0
        %v468 = vmax.f32 %v443, 0.0
        %v469 = vmax.f32 %v445, 0.0
        %v470 = vmax.f32 %v447, 0.0
        %v471 = vmax.f32 %v451, 0.0
        %v472 = vmax.f32 %v453, 0.0
        %v473 = vmax.f32 %v455, 0.0
        %v474 = vmax.f32 %v457, 0.0
        %v475 = vmax.f32 %v461, 0.0
        %v476 = vmax.f32 %v463, 0.0
        %477 = vst [vmem:[#allocation2] sm:$0xff] %v467
        %478 = vst [vmem:[#allocation2 + $0x8] sm:$0xff] %v468
        %479 = vst [vmem:[#allocation2 + $0x10] sm:$0xff] %v469
        %480 = vst [vmem:[#allocation2 + $0x18] sm:$0xff] %v470
        %481 = vst [vmem:[#allocation2 + $0x20] sm:$0xff] %v471
        %482 = vst [vmem:[#allocation2 + $0x28] sm:$0xff] %v472
        %483 = vst [vmem:[#allocation2 + $0x30] sm:$0xff] %v473
        %484 = vst [vmem:[#allocation2 + $0x38] sm:$0xff] %v474
        %485 = vst [vmem:[#allocation2 + $0x40] sm:$0xf] %v475
        %486 = vst [vmem:[#allocation2 + $0x48] sm:$0xf] %v476
        %v487 = vld [vmem:[#allocation2] ss:$8 sm:$0x3]
        %v488 = vlaneseq
        %vm489 = vcmp.ge.s32.totalorder %v488, 0
        %vm490 = vcmp.lt.s32.totalorder %v488, 256
        %vm491 = vmand %vm489, %vm490
        %492 = vst.msk [vmem:[#allocation3] ss:$4 sm:$0x3] %vm491, %v487
        %s493 = scalar_lea.vmem [#allocation2], 2
        %v494 = vld [vmem:[%s493] ss:$8 sm:$0x3]
        %s495 = scalar_lea.vmem [#allocation3], 1
        %496 = vst.msk [vmem:[%s495] ss:$4 sm:$0x3] %vm491, %v494
        %s497 = scalar_lea.vmem [#allocation2], 20
        %v498 = vld [vmem:[%s497] ss:$8 sm:$0x3]
        %s499 = scalar_lea.vmem [#allocation3], 2
        %500 = vst.msk [vmem:[%s499] ss:$4 sm:$0x3] %vm491, %v498
        %s501 = scalar_lea.vmem [#allocation2], 22
        %v502 = vld [vmem:[%s501] ss:$8 sm:$0x3]
        %s503 = scalar_lea.vmem [#allocation3], 3
        %504 = vst.msk [vmem:[%s503] ss:$4 sm:$0x3] %vm491, %v502
        %s505 = scalar_lea.vmem [#allocation2], 1
        %v506 = vld [vmem:[%s505] ss:$8 sm:$0x3]
        %s507 = scalar_lea.vmem [#allocation3], 8
        %508 = vst.msk [vmem:[%s507] ss:$4 sm:$0x3] %vm491, %v506
        %s509 = scalar_lea.vmem [#allocation2], 3
        %v510 = vld [vmem:[%s509] ss:$8 sm:$0x3]
        %s511 = scalar_lea.vmem [#allocation3], 9
        %512 = vst.msk [vmem:[%s511] ss:$4 sm:$0x3] %vm491, %v510
        %s513 = scalar_lea.vmem [#allocation2], 21
        %v514 = vld [vmem:[%s513] ss:$8 sm:$0x3]
        %s515 = scalar_lea.vmem [#allocation3], 10
        %516 = vst.msk [vmem:[%s515] ss:$4 sm:$0x3] %vm491, %v514
        %s517 = scalar_lea.vmem [#allocation2], 23
        %v518 = vld [vmem:[%s517] ss:$8 sm:$0x3]
        %s519 = scalar_lea.vmem [#allocation3], 11
        %520 = vst.msk [vmem:[%s519] ss:$4 sm:$0x3] %vm491, %v518
        %v521 = vld [vmem:[%s493] ss:$8 sm:$0x3]
        %s522 = scalar_lea.vmem [#allocation3], 16
        %523 = vst.msk [vmem:[%s522] ss:$4 sm:$0x3] %vm491, %v521
        %s524 = scalar_lea.vmem [#allocation2], 4
        %v525 = vld [vmem:[%s524] ss:$8 sm:$0x3]
        %s526 = scalar_lea.vmem [#allocation3], 17
        %527 = vst.msk [vmem:[%s526] ss:$4 sm:$0x3] %vm491, %v525
        %v528 = vld [vmem:[%s501] ss:$8 sm:$0x3]
        %s529 = scalar_lea.vmem [#allocation3], 18
        %530 = vst.msk [vmem:[%s529] ss:$4 sm:$0x3] %vm491, %v528
        %s531 = scalar_lea.vmem [#allocation2], 32
        %v532 = vld [vmem:[%s531] ss:$8 sm:$0x3]
        %s533 = scalar_lea.vmem [#allocation3], 19
        %534 = vst.msk [vmem:[%s533] ss:$4 sm:$0x3] %vm491, %v532
        %s535 = scalar_lea.vmem [#allocation2], 6
        %v536 = vld [vmem:[%s535] ss:$8 sm:$0x3]
        %s537 = scalar_lea.vmem [#allocation3], 24
        %538 = vst.msk [vmem:[%s537] ss:$4 sm:$0x3] %vm491, %v536
        %s539 = scalar_lea.vmem [#allocation2], 16
        %v540 = vld [vmem:[%s539] ss:$8 sm:$0x3]
        %s541 = scalar_lea.vmem [#allocation3], 25
        %542 = vst.msk [vmem:[%s541] ss:$4 sm:$0x3] %vm491, %v540
        %s543 = scalar_lea.vmem [#allocation2], 34
        %v544 = vld [vmem:[%s543] ss:$8 sm:$0x3]
        %s545 = scalar_lea.vmem [#allocation3], 26
        %546 = vst.msk [vmem:[%s545] ss:$4 sm:$0x3] %vm491, %v544
        %s547 = scalar_lea.vmem [#allocation2], 36
        %v548 = vld [vmem:[%s547] ss:$8 sm:$0x3]
        %s549 = scalar_lea.vmem [#allocation3], 27
        %550 = vst.msk [vmem:[%s549] ss:$4 sm:$0x3] %vm491, %v548
        %s551 = scalar_lea.vmem [#allocation2], 7
        %v552 = vld [vmem:[%s551] ss:$8 sm:$0x3]
        %s553 = scalar_lea.vmem [#allocation3], 32
        %554 = vst.msk [vmem:[%s553] ss:$4 sm:$0x3] %vm491, %v552
        %s555 = scalar_lea.vmem [#allocation2], 17
        %v556 = vld [vmem:[%s555] ss:$8 sm:$0x3]
        %s557 = scalar_lea.vmem [#allocation3], 33
        %558 = vst.msk [vmem:[%s557] ss:$4 sm:$0x3] %vm491, %v556
        %s559 = scalar_lea.vmem [#allocation2], 35
        %v560 = vld [vmem:[%s559] ss:$8 sm:$0x3]
        %s561 = scalar_lea.vmem [#allocation3], 34
        %562 = vst.msk [vmem:[%s561] ss:$4 sm:$0x3] %vm491, %v560
        %s563 = scalar_lea.vmem [#allocation2], 37
        %v564 = vld [vmem:[%s563] ss:$8 sm:$0x3]
        %s565 = scalar_lea.vmem [#allocation3], 35
        %566 = vst.msk [vmem:[%s565] ss:$4 sm:$0x3] %vm491, %v564
        %v567 = vld [vmem:[%s539] ss:$8 sm:$0x3]
        %s568 = scalar_lea.vmem [#allocation3], 40
        %569 = vst.msk [vmem:[%s568] ss:$4 sm:$0x3] %vm491, %v567
        %s570 = scalar_lea.vmem [#allocation2], 18
        %v571 = vld [vmem:[%s570] ss:$8 sm:$0x3]
        %s572 = scalar_lea.vmem [#allocation3], 41
        %573 = vst.msk [vmem:[%s572] ss:$4 sm:$0x3] %vm491, %v571
        %v574 = vld [vmem:[%s547] ss:$8 sm:$0x3]
        %s575 = scalar_lea.vmem [#allocation3], 42
        %576 = vst.msk [vmem:[%s575] ss:$4 sm:$0x3] %vm491, %v574
        %s577 = scalar_lea.vmem [#allocation2], 38
        %v578 = vld [vmem:[%s577] ss:$8 sm:$0x3]
        %s579 = scalar_lea.vmem [#allocation3], 43
        %580 = vst.msk [vmem:[%s579] ss:$4 sm:$0x3] %vm491, %v578
        %v581 = vld [vmem:[%s497] ss:$8 sm:$0x3]
        %s582 = scalar_lea.vmem [#allocation3], 48
        %583 = vst.msk [vmem:[%s582] ss:$4 sm:$0x3] %vm491, %v581
        %v584 = vld [vmem:[%s501] ss:$8 sm:$0x3]
        %s585 = scalar_lea.vmem [#allocation3], 49
        %586 = vst.msk [vmem:[%s585] ss:$4 sm:$0x3] %vm491, %v584
        %s587 = scalar_lea.vmem [#allocation2], 48
        %v588 = vld [vmem:[%s587] ss:$8 sm:$0x3]
        %s589 = scalar_lea.vmem [#allocation3], 50
        %590 = vst.msk [vmem:[%s589] ss:$4 sm:$0x3] %vm491, %v588
        %s591 = scalar_lea.vmem [#allocation2], 50
        %v592 = vld [vmem:[%s591] ss:$8 sm:$0x3]
        %s593 = scalar_lea.vmem [#allocation3], 51
        %594 = vst.msk [vmem:[%s593] ss:$4 sm:$0x3] %vm491, %v592
        %v595 = vld [vmem:[%s513] ss:$8 sm:$0x3]
        %s596 = scalar_lea.vmem [#allocation3], 56
        %597 = vst.msk [vmem:[%s596] ss:$4 sm:$0x3] %vm491, %v595
        %v598 = vld [vmem:[%s517] ss:$8 sm:$0x3]
        %s599 = scalar_lea.vmem [#allocation3], 57
        %600 = vst.msk [vmem:[%s599] ss:$4 sm:$0x3] %vm491, %v598
        %s601 = scalar_lea.vmem [#allocation2], 49
        %v602 = vld [vmem:[%s601] ss:$8 sm:$0x3]
        %s603 = scalar_lea.vmem [#allocation3], 58
        %604 = vst.msk [vmem:[%s603] ss:$4 sm:$0x3] %vm491, %v602
        %s605 = scalar_lea.vmem [#allocation2], 51
        %v606 = vld [vmem:[%s605] ss:$8 sm:$0x3]
        %s607 = scalar_lea.vmem [#allocation3], 59
        %608 = vst.msk [vmem:[%s607] ss:$4 sm:$0x3] %vm491, %v606
        %v609 = vld [vmem:[%s501] ss:$8 sm:$0x3]
        %s610 = scalar_lea.vmem [#allocation3], 64
        %611 = vst.msk [vmem:[%s610] ss:$4 sm:$0x3] %vm491, %v609
        %v612 = vld [vmem:[%s531] ss:$8 sm:$0x3]
        %s613 = scalar_lea.vmem [#allocation3], 65
        %614 = vst.msk [vmem:[%s613] ss:$4 sm:$0x3] %vm491, %v612
        %v615 = vld [vmem:[%s591] ss:$8 sm:$0x3]
        %s616 = scalar_lea.vmem [#allocation3], 66
        %617 = vst.msk [vmem:[%s616] ss:$4 sm:$0x3] %vm491, %v615
        %s618 = scalar_lea.vmem [#allocation2], 52
        %v619 = vld [vmem:[%s618] ss:$8 sm:$0x3]
        %s620 = scalar_lea.vmem [#allocation3], 67
        %621 = vst.msk [vmem:[%s620] ss:$4 sm:$0x3] %vm491, %v619
        %v622 = vld [vmem:[#allocation3] sm:$0xff]
        %v623 = vld [vmem:[#allocation3 + $0x8] sm:$0xff]
        %v624 = vld [vmem:[#allocation3 + $0x10] sm:$0xff]
        %v625 = vld [vmem:[#allocation3 + $0x18] sm:$0xff]
        %v626 = vld [vmem:[#allocation3 + $0x20] sm:$0xff]
        %v627 = vld [vmem:[#allocation3 + $0x28] sm:$0xff]
        %v628 = vld [vmem:[#allocation3 + $0x30] sm:$0xff]
        %v629 = vld [vmem:[#allocation3 + $0x38] sm:$0xff]
        %v630 = vld [vmem:[#allocation3 + $0x40] sm:$0xff]
        %v640 = vcombine.high %v622, %v622
        %v641 = vcombine.high %v623, %v623
        %v642 = vcombine.high %v624, %v624
        %v643 = vcombine.high %v625, %v625
        %v644 = vcombine.high %v626, %v626
        %v645 = vcombine.high %v627, %v627
        %v646 = vcombine.high %v628, %v628
        %v647 = vcombine.high %v629, %v629
        %v648 = vcombine.high %v630, %v630
        %v658 = vpack.c.bf16 %v622, %v622
        %v659 = vpack.c.bf16 %v640, %v640
        %v660 = vpack.c.bf16 %v623, %v623
        %v661 = vpack.c.bf16 %v641, %v641
        %v662 = vpack.c.bf16 %v624, %v624
        %v663 = vpack.c.bf16 %v642, %v642
        %v664 = vpack.c.bf16 %v625, %v625
        %v665 = vpack.c.bf16 %v643, %v643
        %v666 = vpack.c.bf16 %v626, %v626
        %v667 = vpack.c.bf16 %v644, %v644
        %v668 = vpack.c.bf16 %v627, %v627
        %v669 = vpack.c.bf16 %v645, %v645
        %v670 = vpack.c.bf16 %v628, %v628
        %v671 = vpack.c.bf16 %v646, %v646
        %v672 = vpack.c.bf16 %v629, %v629
        %v673 = vpack.c.bf16 %v647, %v647
        %v674 = vpack.c.bf16 %v630, %v630
        %v675 = vpack.c.bf16 %v648, %v648
        %v676 = vld [vmem:[%s3] sm:$0xff]
        %v677 = vld [vmem:[%s3 + $0x8] sm:$0xff]
        %v678 = vld [vmem:[%s3 + $0x10] sm:$0xff]
        %v679 = vld [vmem:[%s3 + $0x18] sm:$0xff]
        %v680 = vld [vmem:[%s3 + $0x20] sm:$0xff]
        %v681 = vld [vmem:[%s3 + $0x28] sm:$0xff]
        %v682 = vld [vmem:[%s3 + $0x30] sm:$0xff]
        %v683 = vld [vmem:[%s3 + $0x38] sm:$0xff]
        %v684 = vld [vmem:[%s3 + $0x40] sm:$0xff]
        %v685 = vld [vmem:[%s3 + $0x48] sm:$0xff]
        %v686 = vld [vmem:[%s3 + $0x50] sm:$0xff]
        %v687 = vld [vmem:[%s3 + $0x58] sm:$0xff]
        %v688 = vld [vmem:[%s3 + $0x60] sm:$0xff]
        %v689 = vld [vmem:[%s3 + $0x68] sm:$0xff]
        %v690 = vld [vmem:[%s3 + $0x70] sm:$0xff]
        %v691 = vld [vmem:[%s3 + $0x78] sm:$0xff]
        %v692 = vld [vmem:[%s3 + $0x80] sm:$0xff]
        %v693 = vld [vmem:[%s3 + $0x88] sm:$0xff]
        %v694 = vld [vmem:[%s3 + $0x90] sm:$0xff]
        %v695 = vld [vmem:[%s3 + $0x98] sm:$0xff]
        %v696 = vld [vmem:[%s3 + $0xa0] sm:$0xff]
        %v697 = vld [vmem:[%s3 + $0xa8] sm:$0xff]
        %v698 = vld [vmem:[%s3 + $0xb0] sm:$0xff]
        %v699 = vld [vmem:[%s3 + $0xb8] sm:$0xff]
        %v700 = vld [vmem:[%s3 + $0xc0] sm:$0xff]
        %v701 = vld [vmem:[%s3 + $0xc8] sm:$0xff]
        %v702 = vld [vmem:[%s3 + $0xd0] sm:$0xff]
        %v703 = vld [vmem:[%s3 + $0xd8] sm:$0xff]
        %v704 = vld [vmem:[%s3 + $0xe0] sm:$0xff]
        %v705 = vld [vmem:[%s3 + $0xe8] sm:$0xff]
        %v706 = vld [vmem:[%s3 + $0xf0] sm:$0xff]
        %v707 = vld [vmem:[%s3 + $0xf8] sm:$0xff]
        %v708 = vld [vmem:[%s3 + $0x100] sm:$0xff]
        %v709 = vld [vmem:[%s3 + $0x108] sm:$0xff]
        %v710 = vld [vmem:[%s3 + $0x110] sm:$0xff]
        %v711 = vld [vmem:[%s3 + $0x118] sm:$0xff]
        %v712 = vld [vmem:[%s3 + $0x120] sm:$0xff]
        %v713 = vld [vmem:[%s3 + $0x128] sm:$0xff]
        %v714 = vld [vmem:[%s3 + $0x130] sm:$0xff]
        %v715 = vld [vmem:[%s3 + $0x138] sm:$0xff]
        %v716 = vld [vmem:[%s3 + $0x140] sm:$0xff]
        %v717 = vld [vmem:[%s3 + $0x148] sm:$0xff]
        %v718 = vld [vmem:[%s3 + $0x150] sm:$0xff]
        %v719 = vld [vmem:[%s3 + $0x158] sm:$0xff]
        %v720 = vld [vmem:[%s3 + $0x160] sm:$0xff]
        %v721 = vld [vmem:[%s3 + $0x168] sm:$0xff]
        %v722 = vld [vmem:[%s3 + $0x170] sm:$0xff]
        %v723 = vld [vmem:[%s3 + $0x178] sm:$0xff]
        %v724 = vld [vmem:[%s3 + $0x180] sm:$0xff]
        %v725 = vld [vmem:[%s3 + $0x188] sm:$0xff]
        %v726 = vld [vmem:[%s3 + $0x190] sm:$0xff]
        %v727 = vld [vmem:[%s3 + $0x198] sm:$0xff]
        %v728 = vld [vmem:[%s3 + $0x1a0] sm:$0xff]
        %v729 = vld [vmem:[%s3 + $0x1a8] sm:$0xff]
        %v730 = vld [vmem:[%s3 + $0x1b0] sm:$0xff]
        %v731 = vld [vmem:[%s3 + $0x1b8] sm:$0xff]
        %v732 = vld [vmem:[%s3 + $0x1c0] sm:$0xff]
        %v733 = vld [vmem:[%s3 + $0x1c8] sm:$0xff]
        %v734 = vld [vmem:[%s3 + $0x1d0] sm:$0xff]
        %v735 = vld [vmem:[%s3 + $0x1d8] sm:$0xff]
        %v736 = vld [vmem:[%s3 + $0x1e0] sm:$0xff]
        %v737 = vld [vmem:[%s3 + $0x1e8] sm:$0xff]
        %v738 = vld [vmem:[%s3 + $0x1f0] sm:$0xff]
        %v739 = vld [vmem:[%s3 + $0x1f8] sm:$0xff]
        %v740 = vld [vmem:[%s3 + $0x200] sm:$0xff]
        %v741 = vld [vmem:[%s3 + $0x208] sm:$0xff]
        %v742 = vld [vmem:[%s3 + $0x210] sm:$0xff]
        %v743 = vld [vmem:[%s3 + $0x218] sm:$0xff]
        %v744 = vld [vmem:[%s3 + $0x220] sm:$0xff]
        %v745 = vld [vmem:[%s3 + $0x228] sm:$0xff]
        %v746 = vld [vmem:[%s3 + $0x230] sm:$0xff]
        %v747 = vld [vmem:[%s3 + $0x238] sm:$0xff]
        %v748 = vld [vmem:[%s3 + $0x240] sm:$0xff]
        %v749 = vld [vmem:[%s3 + $0x248] sm:$0xff]
        %v750 = vld [vmem:[%s3 + $0x250] sm:$0xff]
        %v751 = vld [vmem:[%s3 + $0x258] sm:$0xff]
        %v752 = vld [vmem:[%s3 + $0x260] sm:$0xff]
        %v753 = vld [vmem:[%s3 + $0x268] sm:$0xff]
        %v754 = vld [vmem:[%s3 + $0x270] sm:$0xff]
        %v755 = vld [vmem:[%s3 + $0x278] sm:$0xff]
        %v756 = vld [vmem:[%s3 + $0x280] sm:$0xff]
        %v757 = vld [vmem:[%s3 + $0x288] sm:$0xff]
        %v758 = vld [vmem:[%s3 + $0x290] sm:$0xff]
        %v759 = vld [vmem:[%s3 + $0x298] sm:$0xff]
        %v760 = vld [vmem:[%s3 + $0x2a0] sm:$0xff]
        %v761 = vld [vmem:[%s3 + $0x2a8] sm:$0xff]
        %v762 = vld [vmem:[%s3 + $0x2b0] sm:$0xff]
        %v763 = vld [vmem:[%s3 + $0x2b8] sm:$0xff]
        %v764 = vld [vmem:[%s3 + $0x2c0] sm:$0xff]
        %v765 = vld [vmem:[%s3 + $0x2c8] sm:$0xff]
        %v766 = vld [vmem:[%s3 + $0x2d0] sm:$0xff]
        %v767 = vld [vmem:[%s3 + $0x2d8] sm:$0xff]
        %v768 = vld [vmem:[%s3 + $0x2e0] sm:$0xff]
        %v769 = vld [vmem:[%s3 + $0x2e8] sm:$0xff]
        %v770 = vld [vmem:[%s3 + $0x2f0] sm:$0xff]
        %v771 = vld [vmem:[%s3 + $0x2f8] sm:$0xff]
        %v772 = vld [vmem:[%s3 + $0x300] sm:$0xff]
        %v773 = vld [vmem:[%s3 + $0x308] sm:$0xff]
        %v774 = vld [vmem:[%s3 + $0x310] sm:$0xff]
        %v775 = vld [vmem:[%s3 + $0x318] sm:$0xff]
        %v776 = vld [vmem:[%s3 + $0x320] sm:$0xff]
        %v777 = vld [vmem:[%s3 + $0x328] sm:$0xff]
        %v778 = vld [vmem:[%s3 + $0x330] sm:$0xff]
        %v779 = vld [vmem:[%s3 + $0x338] sm:$0xff]
        %v780 = vld [vmem:[%s3 + $0x340] sm:$0xff]
        %v781 = vld [vmem:[%s3 + $0x348] sm:$0xff]
        %v782 = vld [vmem:[%s3 + $0x350] sm:$0xff]
        %v783 = vld [vmem:[%s3 + $0x358] sm:$0xff]
        %v784 = vld [vmem:[%s3 + $0x360] sm:$0xff]
        %v785 = vld [vmem:[%s3 + $0x368] sm:$0xff]
        %v786 = vld [vmem:[%s3 + $0x370] sm:$0xff]
        %v787 = vld [vmem:[%s3 + $0x378] sm:$0xff]
        %v788 = vld [vmem:[%s3 + $0x380] sm:$0xff]
        %v789 = vld [vmem:[%s3 + $0x388] sm:$0xff]
        %v790 = vld [vmem:[%s3 + $0x390] sm:$0xff]
        %v791 = vld [vmem:[%s3 + $0x398] sm:$0xff]
        %v792 = vld [vmem:[%s3 + $0x3a0] sm:$0xff]
        %v793 = vld [vmem:[%s3 + $0x3a8] sm:$0xff]
        %v794 = vld [vmem:[%s3 + $0x3b0] sm:$0xff]
        %v795 = vld [vmem:[%s3 + $0x3b8] sm:$0xff]
        %v796 = vld [vmem:[%s3 + $0x3c0] sm:$0xff]
        %v797 = vld [vmem:[%s3 + $0x3c8] sm:$0xff]
        %v798 = vld [vmem:[%s3 + $0x3d0] sm:$0xff]
        %v799 = vld [vmem:[%s3 + $0x3d8] sm:$0xff]
        %v800 = vld [vmem:[%s3 + $0x3e0] sm:$0xff]
        %v801 = vld [vmem:[%s3 + $0x3e8] sm:$0xff]
        %v802 = vld [vmem:[%s3 + $0x3f0] sm:$0xff]
        %v803 = vld [vmem:[%s3 + $0x3f8] sm:$0xff]
        %v804 = vld [vmem:[%s3 + $0x400] sm:$0xff]
        %v805 = vld [vmem:[%s3 + $0x408] sm:$0xff]
        %v806 = vld [vmem:[%s3 + $0x410] sm:$0xff]
        %v807 = vld [vmem:[%s3 + $0x418] sm:$0xff]
        %v808 = vld [vmem:[%s3 + $0x420] sm:$0xff]
        %v809 = vld [vmem:[%s3 + $0x428] sm:$0xff]
        %v810 = vld [vmem:[%s3 + $0x430] sm:$0xff]
        %v811 = vld [vmem:[%s3 + $0x438] sm:$0xff]
        %v812 = vld [vmem:[%s3 + $0x440] sm:$0xff]
        %v813 = vld [vmem:[%s3 + $0x448] sm:$0xff]
        %v814 = vld [vmem:[%s3 + $0x450] sm:$0xff]
        %v815 = vld [vmem:[%s3 + $0x458] sm:$0xff]
        %v816 = vld [vmem:[%s3 + $0x460] sm:$0xff]
        %v817 = vld [vmem:[%s3 + $0x468] sm:$0xff]
        %v818 = vld [vmem:[%s3 + $0x470] sm:$0xff]
        %v819 = vld [vmem:[%s3 + $0x478] sm:$0xff]
        %v820 = vld [vmem:[%s3 + $0x480] sm:$0xff]
        %v821 = vld [vmem:[%s3 + $0x488] sm:$0xff]
        %v822 = vld [vmem:[%s3 + $0x490] sm:$0xff]
        %v823 = vld [vmem:[%s3 + $0x498] sm:$0xff]
        %v824 = vld [vmem:[%s3 + $0x4a0] sm:$0xff]
        %v825 = vld [vmem:[%s3 + $0x4a8] sm:$0xff]
        %v826 = vld [vmem:[%s3 + $0x4b0] sm:$0xff]
        %v827 = vld [vmem:[%s3 + $0x4b8] sm:$0xff]
        %v828 = vld [vmem:[%s3 + $0x4c0] sm:$0xff]
        %v829 = vld [vmem:[%s3 + $0x4c8] sm:$0xff]
        %v830 = vld [vmem:[%s3 + $0x4d0] sm:$0xff]
        %v831 = vld [vmem:[%s3 + $0x4d8] sm:$0xff]
        %v832 = vld [vmem:[%s3 + $0x4e0] sm:$0xff]
        %v833 = vld [vmem:[%s3 + $0x4e8] sm:$0xff]
        %v834 = vld [vmem:[%s3 + $0x4f0] sm:$0xff]
        %v835 = vld [vmem:[%s3 + $0x4f8] sm:$0xff]
        %v836 = vld [vmem:[%s3 + $0x500] sm:$0xff]
        %v837 = vld [vmem:[%s3 + $0x508] sm:$0xff]
        %v838 = vld [vmem:[%s3 + $0x510] sm:$0xff]
        %v839 = vld [vmem:[%s3 + $0x518] sm:$0xff]
        %v840 = vld [vmem:[%s3 + $0x520] sm:$0xff]
        %v841 = vld [vmem:[%s3 + $0x528] sm:$0xff]
        %v842 = vld [vmem:[%s3 + $0x530] sm:$0xff]
        %v843 = vld [vmem:[%s3 + $0x538] sm:$0xff]
        %v844 = vld [vmem:[%s3 + $0x540] sm:$0xff]
        %v845 = vld [vmem:[%s3 + $0x548] sm:$0xff]
        %v846 = vld [vmem:[%s3 + $0x550] sm:$0xff]
        %v847 = vld [vmem:[%s3 + $0x558] sm:$0xff]
        %v848 = vld [vmem:[%s3 + $0x560] sm:$0xff]
        %v849 = vld [vmem:[%s3 + $0x568] sm:$0xff]
        %v850 = vld [vmem:[%s3 + $0x570] sm:$0xff]
        %v851 = vld [vmem:[%s3 + $0x578] sm:$0xff]
        %v852 = vld [vmem:[%s3 + $0x580] sm:$0xff]
        %v853 = vld [vmem:[%s3 + $0x588] sm:$0xff]
        %v854 = vld [vmem:[%s3 + $0x590] sm:$0xff]
        %v855 = vld [vmem:[%s3 + $0x598] sm:$0xff]
        %v856 = vld [vmem:[%s3 + $0x5a0] sm:$0xff]
        %v857 = vld [vmem:[%s3 + $0x5a8] sm:$0xff]
        %v858 = vld [vmem:[%s3 + $0x5b0] sm:$0xff]
        %v859 = vld [vmem:[%s3 + $0x5b8] sm:$0xff]
        %v860 = vld [vmem:[%s3 + $0x5c0] sm:$0xff]
        %v861 = vld [vmem:[%s3 + $0x5c8] sm:$0xff]
        %v862 = vld [vmem:[%s3 + $0x5d0] sm:$0xff]
        %v863 = vld [vmem:[%s3 + $0x5d8] sm:$0xff]
        %v864 = vld [vmem:[%s3 + $0x5e0] sm:$0xff]
        %v865 = vld [vmem:[%s3 + $0x5e8] sm:$0xff]
        %v866 = vld [vmem:[%s3 + $0x5f0] sm:$0xff]
        %v867 = vld [vmem:[%s3 + $0x5f8] sm:$0xff]
        %v868 = vld [vmem:[%s3 + $0x600] sm:$0xff]
        %v869 = vld [vmem:[%s3 + $0x608] sm:$0xff]
        %v870 = vld [vmem:[%s3 + $0x610] sm:$0xff]
        %v871 = vld [vmem:[%s3 + $0x618] sm:$0xff]
        %v872 = vld [vmem:[%s3 + $0x620] sm:$0xff]
        %v873 = vld [vmem:[%s3 + $0x628] sm:$0xff]
        %v874 = vld [vmem:[%s3 + $0x630] sm:$0xff]
        %v875 = vld [vmem:[%s3 + $0x638] sm:$0xff]
        %v876 = vld [vmem:[%s3 + $0x640] sm:$0xff]
        %v877 = vld [vmem:[%s3 + $0x648] sm:$0xff]
        %v878 = vld [vmem:[%s3 + $0x650] sm:$0xff]
        %v879 = vld [vmem:[%s3 + $0x658] sm:$0xff]
        %v880 = vld [vmem:[%s3 + $0x660] sm:$0xff]
        %v881 = vld [vmem:[%s3 + $0x668] sm:$0xff]
        %v882 = vld [vmem:[%s3 + $0x670] sm:$0xff]
        %v883 = vld [vmem:[%s3 + $0x678] sm:$0xff]
        %v884 = vld [vmem:[%s3 + $0x680] sm:$0xff]
        %v885 = vld [vmem:[%s3 + $0x688] sm:$0xff]
        %v886 = vld [vmem:[%s3 + $0x690] sm:$0xff]
        %v887 = vld [vmem:[%s3 + $0x698] sm:$0xff]
        %v888 = vld [vmem:[%s3 + $0x6a0] sm:$0xff]
        %v889 = vld [vmem:[%s3 + $0x6a8] sm:$0xff]
        %v890 = vld [vmem:[%s3 + $0x6b0] sm:$0xff]
        %v891 = vld [vmem:[%s3 + $0x6b8] sm:$0xff]
        %v892 = vld [vmem:[%s3 + $0x6c0] sm:$0xff]
        %v893 = vld [vmem:[%s3 + $0x6c8] sm:$0xff]
        %v894 = vld [vmem:[%s3 + $0x6d0] sm:$0xff]
        %v895 = vld [vmem:[%s3 + $0x6d8] sm:$0xff]
        %v896 = vld [vmem:[%s3 + $0x6e0] sm:$0xff]
        %v897 = vld [vmem:[%s3 + $0x6e8] sm:$0xff]
        %v898 = vld [vmem:[%s3 + $0x6f0] sm:$0xff]
        %v899 = vld [vmem:[%s3 + $0x6f8] sm:$0xff]
        %v900 = vld [vmem:[%s3 + $0x700] sm:$0xff]
        %v901 = vld [vmem:[%s3 + $0x708] sm:$0xff]
        %v902 = vld [vmem:[%s3 + $0x710] sm:$0xff]
        %v903 = vld [vmem:[%s3 + $0x718] sm:$0xff]
        %v904 = vld [vmem:[%s3 + $0x720] sm:$0xff]
        %v905 = vld [vmem:[%s3 + $0x728] sm:$0xff]
        %v906 = vld [vmem:[%s3 + $0x730] sm:$0xff]
        %v907 = vld [vmem:[%s3 + $0x738] sm:$0xff]
        %v908 = vld [vmem:[%s3 + $0x740] sm:$0xff]
        %v909 = vld [vmem:[%s3 + $0x748] sm:$0xff]
        %v910 = vld [vmem:[%s3 + $0x750] sm:$0xff]
        %v911 = vld [vmem:[%s3 + $0x758] sm:$0xff]
        %v912 = vld [vmem:[%s3 + $0x760] sm:$0xff]
        %v913 = vld [vmem:[%s3 + $0x768] sm:$0xff]
        %v914 = vld [vmem:[%s3 + $0x770] sm:$0xff]
        %v915 = vld [vmem:[%s3 + $0x778] sm:$0xff]
        %v916 = vld [vmem:[%s3 + $0x780] sm:$0xff]
        %v917 = vld [vmem:[%s3 + $0x788] sm:$0xff]
        %v918 = vld [vmem:[%s3 + $0x790] sm:$0xff]
        %v919 = vld [vmem:[%s3 + $0x798] sm:$0xff]
        %v920 = vld [vmem:[%s3 + $0x7a0] sm:$0xff]
        %v921 = vld [vmem:[%s3 + $0x7a8] sm:$0xff]
        %v922 = vld [vmem:[%s3 + $0x7b0] sm:$0xff]
        %v923 = vld [vmem:[%s3 + $0x7b8] sm:$0xff]
        %v924 = vld [vmem:[%s3 + $0x7c0] sm:$0xff]
        %v925 = vld [vmem:[%s3 + $0x7c8] sm:$0xff]
        %v926 = vld [vmem:[%s3 + $0x7d0] sm:$0xff]
        %v927 = vld [vmem:[%s3 + $0x7d8] sm:$0xff]
        %v928 = vld [vmem:[%s3 + $0x7e0] sm:$0xff]
        %v929 = vld [vmem:[%s3 + $0x7e8] sm:$0xff]
        %v930 = vld [vmem:[%s3 + $0x7f0] sm:$0xff]
        %v931 = vld [vmem:[%s3 + $0x7f8] sm:$0xff]
        %v932 = vld [vmem:[%s3 + $0x800] sm:$0xff]
        %v933 = vld [vmem:[%s3 + $0x808] sm:$0xff]
        %v934 = vld [vmem:[%s3 + $0x810] sm:$0xff]
        %v935 = vld [vmem:[%s3 + $0x818] sm:$0xff]
        %v936 = vld [vmem:[%s3 + $0x820] sm:$0xff]
        %v937 = vld [vmem:[%s3 + $0x828] sm:$0xff]
        %v938 = vld [vmem:[%s3 + $0x830] sm:$0xff]
        %v939 = vld [vmem:[%s3 + $0x838] sm:$0xff]
        %v940 = vld [vmem:[%s3 + $0x840] sm:$0xff]
        %v941 = vld [vmem:[%s3 + $0x848] sm:$0xff]
        %v942 = vld [vmem:[%s3 + $0x850] sm:$0xff]
        %v943 = vld [vmem:[%s3 + $0x858] sm:$0xff]
        %v944 = vld [vmem:[%s3 + $0x860] sm:$0xff]
        %v945 = vld [vmem:[%s3 + $0x868] sm:$0xff]
        %v946 = vld [vmem:[%s3 + $0x870] sm:$0xff]
        %v947 = vld [vmem:[%s3 + $0x878] sm:$0xff]
        %v948 = vld [vmem:[%s3 + $0x880] sm:$0xff]
        %v949 = vld [vmem:[%s3 + $0x888] sm:$0xff]
        %v950 = vld [vmem:[%s3 + $0x890] sm:$0xff]
        %v951 = vld [vmem:[%s3 + $0x898] sm:$0xff]
        %v952 = vld [vmem:[%s3 + $0x8a0] sm:$0xff]
        %v953 = vld [vmem:[%s3 + $0x8a8] sm:$0xff]
        %v954 = vld [vmem:[%s3 + $0x8b0] sm:$0xff]
        %v955 = vld [vmem:[%s3 + $0x8b8] sm:$0xff]
        %v956 = vld [vmem:[%s3 + $0x8c0] sm:$0xff]
        %v957 = vld [vmem:[%s3 + $0x8c8] sm:$0xff]
        %v958 = vld [vmem:[%s3 + $0x8d0] sm:$0xff]
        %v959 = vld [vmem:[%s3 + $0x8d8] sm:$0xff]
        %v960 = vld [vmem:[%s3 + $0x8e0] sm:$0xff]
        %v961 = vld [vmem:[%s3 + $0x8e8] sm:$0xff]
        %v962 = vld [vmem:[%s3 + $0x8f0] sm:$0xff]
        %v963 = vld [vmem:[%s3 + $0x8f8] sm:$0xff]
        %v964 = vld [vmem:[%s4] sm:$0x3]
        %v966 = vlaneseq
        %v967 = vshrl.u32 %v966, 7
        %v968 = vsub.s32 0, %v967
        %v969 = vrot.slane %v964, %v968
        %v970 = vlaneseq
        %v971 = vshrl.u32 %v970, 7
        %v972 = vsub.s32 1, %v971
        %v973 = vrot.slane %v964, %v972
        %v1264 = vunpack.c.l.b16 %v676
        %v1265 = vunpack.c.h.b16 %v676
        %v1266 = vunpack.c.l.b16 %v677
        %v1267 = vunpack.c.h.b16 %v677
        %v1268 = vunpack.c.l.b16 %v678
        %v1269 = vunpack.c.h.b16 %v678
        %v1270 = vunpack.c.l.b16 %v679
        %v1271 = vunpack.c.h.b16 %v679
        %v1272 = vunpack.c.l.b16 %v680
        %v1273 = vunpack.c.h.b16 %v680
        %v1274 = vunpack.c.l.b16 %v681
        %v1275 = vunpack.c.h.b16 %v681
        %v1276 = vunpack.c.l.b16 %v682
        %v1277 = vunpack.c.h.b16 %v682
        %v1278 = vunpack.c.l.b16 %v683
        %v1279 = vunpack.c.h.b16 %v683
        %v1280 = vunpack.c.l.b16 %v684
        %v1281 = vunpack.c.h.b16 %v684
        %v1282 = vunpack.c.l.b16 %v685
        %v1283 = vunpack.c.h.b16 %v685
        %v1284 = vunpack.c.l.b16 %v686
        %v1285 = vunpack.c.h.b16 %v686
        %v1286 = vunpack.c.l.b16 %v687
        %v1287 = vunpack.c.h.b16 %v687
        %v1288 = vunpack.c.l.b16 %v688
        %v1289 = vunpack.c.h.b16 %v688
        %v1290 = vunpack.c.l.b16 %v689
        %v1291 = vunpack.c.h.b16 %v689
        %v1292 = vunpack.c.l.b16 %v690
        %v1293 = vunpack.c.h.b16 %v690
        %v1294 = vunpack.c.l.b16 %v691
        %v1295 = vunpack.c.h.b16 %v691
        %v1296 = vunpack.c.l.b16 %v692
        %v1297 = vunpack.c.h.b16 %v692
        %v1298 = vunpack.c.l.b16 %v693
        %v1299 = vunpack.c.h.b16 %v693
        %v1300 = vunpack.c.l.b16 %v694
        %v1301 = vunpack.c.h.b16 %v694
        %v1302 = vunpack.c.l.b16 %v695
        %v1303 = vunpack.c.h.b16 %v695
        %v1304 = vunpack.c.l.b16 %v696
        %v1305 = vunpack.c.h.b16 %v696
        %v1306 = vunpack.c.l.b16 %v697
        %v1307 = vunpack.c.h.b16 %v697
        %v1308 = vunpack.c.l.b16 %v698
        %v1309 = vunpack.c.h.b16 %v698
        %v1310 = vunpack.c.l.b16 %v699
        %v1311 = vunpack.c.h.b16 %v699
        %v1312 = vunpack.c.l.b16 %v700
        %v1313 = vunpack.c.h.b16 %v700
        %v1314 = vunpack.c.l.b16 %v701
        %v1315 = vunpack.c.h.b16 %v701
        %v1316 = vunpack.c.l.b16 %v702
        %v1317 = vunpack.c.h.b16 %v702
        %v1318 = vunpack.c.l.b16 %v703
        %v1319 = vunpack.c.h.b16 %v703
        %v1320 = vunpack.c.l.b16 %v704
        %v1321 = vunpack.c.h.b16 %v704
        %v1322 = vunpack.c.l.b16 %v705
        %v1323 = vunpack.c.h.b16 %v705
        %v1324 = vunpack.c.l.b16 %v706
        %v1325 = vunpack.c.h.b16 %v706
        %v1326 = vunpack.c.l.b16 %v707
        %v1327 = vunpack.c.h.b16 %v707
        %v1328 = vunpack.c.l.b16 %v708
        %v1329 = vunpack.c.h.b16 %v708
        %v1330 = vunpack.c.l.b16 %v709
        %v1331 = vunpack.c.h.b16 %v709
        %v1332 = vunpack.c.l.b16 %v710
        %v1333 = vunpack.c.h.b16 %v710
        %v1334 = vunpack.c.l.b16 %v711
        %v1335 = vunpack.c.h.b16 %v711
        %v1336 = vunpack.c.l.b16 %v712
        %v1337 = vunpack.c.h.b16 %v712
        %v1338 = vunpack.c.l.b16 %v713
        %v1339 = vunpack.c.h.b16 %v713
        %v1340 = vunpack.c.l.b16 %v714
        %v1341 = vunpack.c.h.b16 %v714
        %v1342 = vunpack.c.l.b16 %v715
        %v1343 = vunpack.c.h.b16 %v715
        %v1344 = vunpack.c.l.b16 %v716
        %v1345 = vunpack.c.h.b16 %v716
        %v1346 = vunpack.c.l.b16 %v717
        %v1347 = vunpack.c.h.b16 %v717
        %v1348 = vunpack.c.l.b16 %v718
        %v1349 = vunpack.c.h.b16 %v718
        %v1350 = vunpack.c.l.b16 %v719
        %v1351 = vunpack.c.h.b16 %v719
        %v1352 = vunpack.c.l.b16 %v720
        %v1353 = vunpack.c.h.b16 %v720
        %v1354 = vunpack.c.l.b16 %v721
        %v1355 = vunpack.c.h.b16 %v721
        %v1356 = vunpack.c.l.b16 %v722
        %v1357 = vunpack.c.h.b16 %v722
        %v1358 = vunpack.c.l.b16 %v723
        %v1359 = vunpack.c.h.b16 %v723
        %v1360 = vunpack.c.l.b16 %v724
        %v1361 = vunpack.c.h.b16 %v724
        %v1362 = vunpack.c.l.b16 %v725
        %v1363 = vunpack.c.h.b16 %v725
        %v1364 = vunpack.c.l.b16 %v726
        %v1365 = vunpack.c.h.b16 %v726
        %v1366 = vunpack.c.l.b16 %v727
        %v1367 = vunpack.c.h.b16 %v727
        %v1368 = vunpack.c.l.b16 %v728
        %v1369 = vunpack.c.h.b16 %v728
        %v1370 = vunpack.c.l.b16 %v729
        %v1371 = vunpack.c.h.b16 %v729
        %v1372 = vunpack.c.l.b16 %v730
        %v1373 = vunpack.c.h.b16 %v730
        %v1374 = vunpack.c.l.b16 %v731
        %v1375 = vunpack.c.h.b16 %v731
        %v1376 = vunpack.c.l.b16 %v732
        %v1377 = vunpack.c.h.b16 %v732
        %v1378 = vunpack.c.l.b16 %v733
        %v1379 = vunpack.c.h.b16 %v733
        %v1380 = vunpack.c.l.b16 %v734
        %v1381 = vunpack.c.h.b16 %v734
        %v1382 = vunpack.c.l.b16 %v735
        %v1383 = vunpack.c.h.b16 %v735
        %v1384 = vunpack.c.l.b16 %v736
        %v1385 = vunpack.c.h.b16 %v736
        %v1386 = vunpack.c.l.b16 %v737
        %v1387 = vunpack.c.h.b16 %v737
        %v1388 = vunpack.c.l.b16 %v738
        %v1389 = vunpack.c.h.b16 %v738
        %v1390 = vunpack.c.l.b16 %v739
        %v1391 = vunpack.c.h.b16 %v739
        %v1392 = vunpack.c.l.b16 %v740
        %v1393 = vunpack.c.h.b16 %v740
        %v1394 = vunpack.c.l.b16 %v741
        %v1395 = vunpack.c.h.b16 %v741
        %v1396 = vunpack.c.l.b16 %v742
        %v1397 = vunpack.c.h.b16 %v742
        %v1398 = vunpack.c.l.b16 %v743
        %v1399 = vunpack.c.h.b16 %v743
        %v1400 = vunpack.c.l.b16 %v744
        %v1401 = vunpack.c.h.b16 %v744
        %v1402 = vunpack.c.l.b16 %v745
        %v1403 = vunpack.c.h.b16 %v745
        %v1404 = vunpack.c.l.b16 %v746
        %v1405 = vunpack.c.h.b16 %v746
        %v1406 = vunpack.c.l.b16 %v747
        %v1407 = vunpack.c.h.b16 %v747
        %v1408 = vunpack.c.l.b16 %v748
        %v1409 = vunpack.c.h.b16 %v748
        %v1410 = vunpack.c.l.b16 %v749
        %v1411 = vunpack.c.h.b16 %v749
        %v1412 = vunpack.c.l.b16 %v750
        %v1413 = vunpack.c.h.b16 %v750
        %v1414 = vunpack.c.l.b16 %v751
        %v1415 = vunpack.c.h.b16 %v751
        %v1416 = vunpack.c.l.b16 %v752
        %v1417 = vunpack.c.h.b16 %v752
        %v1418 = vunpack.c.l.b16 %v753
        %v1419 = vunpack.c.h.b16 %v753
        %v1420 = vunpack.c.l.b16 %v754
        %v1421 = vunpack.c.h.b16 %v754
        %v1422 = vunpack.c.l.b16 %v755
        %v1423 = vunpack.c.h.b16 %v755
        %v1424 = vunpack.c.l.b16 %v756
        %v1425 = vunpack.c.h.b16 %v756
        %v1426 = vunpack.c.l.b16 %v757
        %v1427 = vunpack.c.h.b16 %v757
        %v1428 = vunpack.c.l.b16 %v758
        %v1429 = vunpack.c.h.b16 %v758
        %v1430 = vunpack.c.l.b16 %v759
        %v1431 = vunpack.c.h.b16 %v759
        %v1432 = vunpack.c.l.b16 %v760
        %v1433 = vunpack.c.h.b16 %v760
        %v1434 = vunpack.c.l.b16 %v761
        %v1435 = vunpack.c.h.b16 %v761
        %v1436 = vunpack.c.l.b16 %v762
        %v1437 = vunpack.c.h.b16 %v762
        %v1438 = vunpack.c.l.b16 %v763
        %v1439 = vunpack.c.h.b16 %v763
        %v1440 = vunpack.c.l.b16 %v764
        %v1441 = vunpack.c.h.b16 %v764
        %v1442 = vunpack.c.l.b16 %v765
        %v1443 = vunpack.c.h.b16 %v765
        %v1444 = vunpack.c.l.b16 %v766
        %v1445 = vunpack.c.h.b16 %v766
        %v1446 = vunpack.c.l.b16 %v767
        %v1447 = vunpack.c.h.b16 %v767
        %v1448 = vunpack.c.l.b16 %v768
        %v1449 = vunpack.c.h.b16 %v768
        %v1450 = vunpack.c.l.b16 %v769
        %v1451 = vunpack.c.h.b16 %v769
        %v1452 = vunpack.c.l.b16 %v770
        %v1453 = vunpack.c.h.b16 %v770
        %v1454 = vunpack.c.l.b16 %v771
        %v1455 = vunpack.c.h.b16 %v771
        %v1456 = vunpack.c.l.b16 %v772
        %v1457 = vunpack.c.h.b16 %v772
        %v1458 = vunpack.c.l.b16 %v773
        %v1459 = vunpack.c.h.b16 %v773
        %v1460 = vunpack.c.l.b16 %v774
        %v1461 = vunpack.c.h.b16 %v774
        %v1462 = vunpack.c.l.b16 %v775
        %v1463 = vunpack.c.h.b16 %v775
        %v1464 = vunpack.c.l.b16 %v776
        %v1465 = vunpack.c.h.b16 %v776
        %v1466 = vunpack.c.l.b16 %v777
        %v1467 = vunpack.c.h.b16 %v777
        %v1468 = vunpack.c.l.b16 %v778
        %v1469 = vunpack.c.h.b16 %v778
        %v1470 = vunpack.c.l.b16 %v779
        %v1471 = vunpack.c.h.b16 %v779
        %v1472 = vunpack.c.l.b16 %v780
        %v1473 = vunpack.c.h.b16 %v780
        %v1474 = vunpack.c.l.b16 %v781
        %v1475 = vunpack.c.h.b16 %v781
        %v1476 = vunpack.c.l.b16 %v782
        %v1477 = vunpack.c.h.b16 %v782
        %v1478 = vunpack.c.l.b16 %v783
        %v1479 = vunpack.c.h.b16 %v783
        %v1480 = vunpack.c.l.b16 %v784
        %v1481 = vunpack.c.h.b16 %v784
        %v1482 = vunpack.c.l.b16 %v785
        %v1483 = vunpack.c.h.b16 %v785
        %v1484 = vunpack.c.l.b16 %v786
        %v1485 = vunpack.c.h.b16 %v786
        %v1486 = vunpack.c.l.b16 %v787
        %v1487 = vunpack.c.h.b16 %v787
        %v1488 = vunpack.c.l.b16 %v788
        %v1489 = vunpack.c.h.b16 %v788
        %v1490 = vunpack.c.l.b16 %v789
        %v1491 = vunpack.c.h.b16 %v789
        %v1492 = vunpack.c.l.b16 %v790
        %v1493 = vunpack.c.h.b16 %v790
        %v1494 = vunpack.c.l.b16 %v791
        %v1495 = vunpack.c.h.b16 %v791
        %v1496 = vunpack.c.l.b16 %v792
        %v1497 = vunpack.c.h.b16 %v792
        %v1498 = vunpack.c.l.b16 %v793
        %v1499 = vunpack.c.h.b16 %v793
        %v1500 = vunpack.c.l.b16 %v794
        %v1501 = vunpack.c.h.b16 %v794
        %v1502 = vunpack.c.l.b16 %v795
        %v1503 = vunpack.c.h.b16 %v795
        %v1504 = vunpack.c.l.b16 %v796
        %v1505 = vunpack.c.h.b16 %v796
        %v1506 = vunpack.c.l.b16 %v797
        %v1507 = vunpack.c.h.b16 %v797
        %v1508 = vunpack.c.l.b16 %v798
        %v1509 = vunpack.c.h.b16 %v798
        %v1510 = vunpack.c.l.b16 %v799
        %v1511 = vunpack.c.h.b16 %v799
        %v1512 = vunpack.c.l.b16 %v800
        %v1513 = vunpack.c.h.b16 %v800
        %v1514 = vunpack.c.l.b16 %v801
        %v1515 = vunpack.c.h.b16 %v801
        %v1516 = vunpack.c.l.b16 %v802
        %v1517 = vunpack.c.h.b16 %v802
        %v1518 = vunpack.c.l.b16 %v803
        %v1519 = vunpack.c.h.b16 %v803
        %v1520 = vunpack.c.l.b16 %v804
        %v1521 = vunpack.c.h.b16 %v804
        %v1522 = vunpack.c.l.b16 %v805
        %v1523 = vunpack.c.h.b16 %v805
        %v1524 = vunpack.c.l.b16 %v806
        %v1525 = vunpack.c.h.b16 %v806
        %v1526 = vunpack.c.l.b16 %v807
        %v1527 = vunpack.c.h.b16 %v807
        %v1528 = vunpack.c.l.b16 %v808
        %v1529 = vunpack.c.h.b16 %v808
        %v1530 = vunpack.c.l.b16 %v809
        %v1531 = vunpack.c.h.b16 %v809
        %v1532 = vunpack.c.l.b16 %v810
        %v1533 = vunpack.c.h.b16 %v810
        %v1534 = vunpack.c.l.b16 %v811
        %v1535 = vunpack.c.h.b16 %v811
        %v1536 = vunpack.c.l.b16 %v812
        %v1537 = vunpack.c.h.b16 %v812
        %v1538 = vunpack.c.l.b16 %v813
        %v1539 = vunpack.c.h.b16 %v813
        %v1540 = vunpack.c.l.b16 %v814
        %v1541 = vunpack.c.h.b16 %v814
        %v1542 = vunpack.c.l.b16 %v815
        %v1543 = vunpack.c.h.b16 %v815
        %v1544 = vunpack.c.l.b16 %v816
        %v1545 = vunpack.c.h.b16 %v816
        %v1546 = vunpack.c.l.b16 %v817
        %v1547 = vunpack.c.h.b16 %v817
        %v1548 = vunpack.c.l.b16 %v818
        %v1549 = vunpack.c.h.b16 %v818
        %v1550 = vunpack.c.l.b16 %v819
        %v1551 = vunpack.c.h.b16 %v819
        %v1552 = vunpack.c.l.b16 %v820
        %v1553 = vunpack.c.h.b16 %v820
        %v1554 = vunpack.c.l.b16 %v821
        %v1555 = vunpack.c.h.b16 %v821
        %v1556 = vunpack.c.l.b16 %v822
        %v1557 = vunpack.c.h.b16 %v822
        %v1558 = vunpack.c.l.b16 %v823
        %v1559 = vunpack.c.h.b16 %v823
        %v1560 = vunpack.c.l.b16 %v824
        %v1561 = vunpack.c.h.b16 %v824
        %v1562 = vunpack.c.l.b16 %v825
        %v1563 = vunpack.c.h.b16 %v825
        %v1564 = vunpack.c.l.b16 %v826
        %v1565 = vunpack.c.h.b16 %v826
        %v1566 = vunpack.c.l.b16 %v827
        %v1567 = vunpack.c.h.b16 %v827
        %v1568 = vunpack.c.l.b16 %v828
        %v1569 = vunpack.c.h.b16 %v828
        %v1570 = vunpack.c.l.b16 %v829
        %v1571 = vunpack.c.h.b16 %v829
        %v1572 = vunpack.c.l.b16 %v830
        %v1573 = vunpack.c.h.b16 %v830
        %v1574 = vunpack.c.l.b16 %v831
        %v1575 = vunpack.c.h.b16 %v831
        %v1576 = vunpack.c.l.b16 %v832
        %v1577 = vunpack.c.h.b16 %v832
        %v1578 = vunpack.c.l.b16 %v833
        %v1579 = vunpack.c.h.b16 %v833
        %v1580 = vunpack.c.l.b16 %v834
        %v1581 = vunpack.c.h.b16 %v834
        %v1582 = vunpack.c.l.b16 %v835
        %v1583 = vunpack.c.h.b16 %v835
        %v1584 = vunpack.c.l.b16 %v836
        %v1585 = vunpack.c.h.b16 %v836
        %v1586 = vunpack.c.l.b16 %v837
        %v1587 = vunpack.c.h.b16 %v837
        %v1588 = vunpack.c.l.b16 %v838
        %v1589 = vunpack.c.h.b16 %v838
        %v1590 = vunpack.c.l.b16 %v839
        %v1591 = vunpack.c.h.b16 %v839
        %v1592 = vunpack.c.l.b16 %v840
        %v1593 = vunpack.c.h.b16 %v840
        %v1594 = vunpack.c.l.b16 %v841
        %v1595 = vunpack.c.h.b16 %v841
        %v1596 = vunpack.c.l.b16 %v842
        %v1597 = vunpack.c.h.b16 %v842
        %v1598 = vunpack.c.l.b16 %v843
        %v1599 = vunpack.c.h.b16 %v843
        %v1600 = vunpack.c.l.b16 %v844
        %v1601 = vunpack.c.h.b16 %v844
        %v1602 = vunpack.c.l.b16 %v845
        %v1603 = vunpack.c.h.b16 %v845
        %v1604 = vunpack.c.l.b16 %v846
        %v1605 = vunpack.c.h.b16 %v846
        %v1606 = vunpack.c.l.b16 %v847
        %v1607 = vunpack.c.h.b16 %v847
        %v1608 = vunpack.c.l.b16 %v848
        %v1609 = vunpack.c.h.b16 %v848
        %v1610 = vunpack.c.l.b16 %v849
        %v1611 = vunpack.c.h.b16 %v849
        %v1612 = vunpack.c.l.b16 %v850
        %v1613 = vunpack.c.h.b16 %v850
        %v1614 = vunpack.c.l.b16 %v851
        %v1615 = vunpack.c.h.b16 %v851
        %v1616 = vunpack.c.l.b16 %v852
        %v1617 = vunpack.c.h.b16 %v852
        %v1618 = vunpack.c.l.b16 %v853
        %v1619 = vunpack.c.h.b16 %v853
        %v1620 = vunpack.c.l.b16 %v854
        %v1621 = vunpack.c.h.b16 %v854
        %v1622 = vunpack.c.l.b16 %v855
        %v1623 = vunpack.c.h.b16 %v855
        %v1624 = vunpack.c.l.b16 %v856
        %v1625 = vunpack.c.h.b16 %v856
        %v1626 = vunpack.c.l.b16 %v857
        %v1627 = vunpack.c.h.b16 %v857
        %v1628 = vunpack.c.l.b16 %v858
        %v1629 = vunpack.c.h.b16 %v858
        %v1630 = vunpack.c.l.b16 %v859
        %v1631 = vunpack.c.h.b16 %v859
        %v1632 = vunpack.c.l.b16 %v860
        %v1633 = vunpack.c.h.b16 %v860
        %v1634 = vunpack.c.l.b16 %v861
        %v1635 = vunpack.c.h.b16 %v861
        %v1636 = vunpack.c.l.b16 %v862
        %v1637 = vunpack.c.h.b16 %v862
        %v1638 = vunpack.c.l.b16 %v863
        %v1639 = vunpack.c.h.b16 %v863
        %v1640 = vunpack.c.l.b16 %v864
        %v1641 = vunpack.c.h.b16 %v864
        %v1642 = vunpack.c.l.b16 %v865
        %v1643 = vunpack.c.h.b16 %v865
        %v1644 = vunpack.c.l.b16 %v866
        %v1645 = vunpack.c.h.b16 %v866
        %v1646 = vunpack.c.l.b16 %v867
        %v1647 = vunpack.c.h.b16 %v867
        %v1648 = vunpack.c.l.b16 %v868
        %v1649 = vunpack.c.h.b16 %v868
        %v1650 = vunpack.c.l.b16 %v869
        %v1651 = vunpack.c.h.b16 %v869
        %v1652 = vunpack.c.l.b16 %v870
        %v1653 = vunpack.c.h.b16 %v870
        %v1654 = vunpack.c.l.b16 %v871
        %v1655 = vunpack.c.h.b16 %v871
        %v1656 = vunpack.c.l.b16 %v872
        %v1657 = vunpack.c.h.b16 %v872
        %v1658 = vunpack.c.l.b16 %v873
        %v1659 = vunpack.c.h.b16 %v873
        %v1660 = vunpack.c.l.b16 %v874
        %v1661 = vunpack.c.h.b16 %v874
        %v1662 = vunpack.c.l.b16 %v875
        %v1663 = vunpack.c.h.b16 %v875
        %v1664 = vunpack.c.l.b16 %v876
        %v1665 = vunpack.c.h.b16 %v876
        %v1666 = vunpack.c.l.b16 %v877
        %v1667 = vunpack.c.h.b16 %v877
        %v1668 = vunpack.c.l.b16 %v878
        %v1669 = vunpack.c.h.b16 %v878
        %v1670 = vunpack.c.l.b16 %v879
        %v1671 = vunpack.c.h.b16 %v879
        %v1672 = vunpack.c.l.b16 %v880
        %v1673 = vunpack.c.h.b16 %v880
        %v1674 = vunpack.c.l.b16 %v881
        %v1675 = vunpack.c.h.b16 %v881
        %v1676 = vunpack.c.l.b16 %v882
        %v1677 = vunpack.c.h.b16 %v882
        %v1678 = vunpack.c.l.b16 %v883
        %v1679 = vunpack.c.h.b16 %v883
        %v1680 = vunpack.c.l.b16 %v884
        %v1681 = vunpack.c.h.b16 %v884
        %v1682 = vunpack.c.l.b16 %v885
        %v1683 = vunpack.c.h.b16 %v885
        %v1684 = vunpack.c.l.b16 %v886
        %v1685 = vunpack.c.h.b16 %v886
        %v1686 = vunpack.c.l.b16 %v887
        %v1687 = vunpack.c.h.b16 %v887
        %v1688 = vunpack.c.l.b16 %v888
        %v1689 = vunpack.c.h.b16 %v888
        %v1690 = vunpack.c.l.b16 %v889
        %v1691 = vunpack.c.h.b16 %v889
        %v1692 = vunpack.c.l.b16 %v890
        %v1693 = vunpack.c.h.b16 %v890
        %v1694 = vunpack.c.l.b16 %v891
        %v1695 = vunpack.c.h.b16 %v891
        %v1696 = vunpack.c.l.b16 %v892
        %v1697 = vunpack.c.h.b16 %v892
        %v1698 = vunpack.c.l.b16 %v893
        %v1699 = vunpack.c.h.b16 %v893
        %v1700 = vunpack.c.l.b16 %v894
        %v1701 = vunpack.c.h.b16 %v894
        %v1702 = vunpack.c.l.b16 %v895
        %v1703 = vunpack.c.h.b16 %v895
        %v1704 = vunpack.c.l.b16 %v896
        %v1705 = vunpack.c.h.b16 %v896
        %v1706 = vunpack.c.l.b16 %v897
        %v1707 = vunpack.c.h.b16 %v897
        %v1708 = vunpack.c.l.b16 %v898
        %v1709 = vunpack.c.h.b16 %v898
        %v1710 = vunpack.c.l.b16 %v899
        %v1711 = vunpack.c.h.b16 %v899
        %v1712 = vunpack.c.l.b16 %v900
        %v1713 = vunpack.c.h.b16 %v900
        %v1714 = vunpack.c.l.b16 %v901
        %v1715 = vunpack.c.h.b16 %v901
        %v1716 = vunpack.c.l.b16 %v902
        %v1717 = vunpack.c.h.b16 %v902
        %v1718 = vunpack.c.l.b16 %v903
        %v1719 = vunpack.c.h.b16 %v903
        %v1720 = vunpack.c.l.b16 %v904
        %v1721 = vunpack.c.h.b16 %v904
        %v1722 = vunpack.c.l.b16 %v905
        %v1723 = vunpack.c.h.b16 %v905
        %v1724 = vunpack.c.l.b16 %v906
        %v1725 = vunpack.c.h.b16 %v906
        %v1726 = vunpack.c.l.b16 %v907
        %v1727 = vunpack.c.h.b16 %v907
        %v1728 = vunpack.c.l.b16 %v908
        %v1729 = vunpack.c.h.b16 %v908
        %v1730 = vunpack.c.l.b16 %v909
        %v1731 = vunpack.c.h.b16 %v909
        %v1732 = vunpack.c.l.b16 %v910
        %v1733 = vunpack.c.h.b16 %v910
        %v1734 = vunpack.c.l.b16 %v911
        %v1735 = vunpack.c.h.b16 %v911
        %v1736 = vunpack.c.l.b16 %v912
        %v1737 = vunpack.c.h.b16 %v912
        %v1738 = vunpack.c.l.b16 %v913
        %v1739 = vunpack.c.h.b16 %v913
        %v1740 = vunpack.c.l.b16 %v914
        %v1741 = vunpack.c.h.b16 %v914
        %v1742 = vunpack.c.l.b16 %v915
        %v1743 = vunpack.c.h.b16 %v915
        %v1744 = vunpack.c.l.b16 %v916
        %v1745 = vunpack.c.h.b16 %v916
        %v1746 = vunpack.c.l.b16 %v917
        %v1747 = vunpack.c.h.b16 %v917
        %v1748 = vunpack.c.l.b16 %v918
        %v1749 = vunpack.c.h.b16 %v918
        %v1750 = vunpack.c.l.b16 %v919
        %v1751 = vunpack.c.h.b16 %v919
        %v1752 = vunpack.c.l.b16 %v920
        %v1753 = vunpack.c.h.b16 %v920
        %v1754 = vunpack.c.l.b16 %v921
        %v1755 = vunpack.c.h.b16 %v921
        %v1756 = vunpack.c.l.b16 %v922
        %v1757 = vunpack.c.h.b16 %v922
        %v1758 = vunpack.c.l.b16 %v923
        %v1759 = vunpack.c.h.b16 %v923
        %v1760 = vunpack.c.l.b16 %v924
        %v1761 = vunpack.c.h.b16 %v924
        %v1762 = vunpack.c.l.b16 %v925
        %v1763 = vunpack.c.h.b16 %v925
        %v1764 = vunpack.c.l.b16 %v926
        %v1765 = vunpack.c.h.b16 %v926
        %v1766 = vunpack.c.l.b16 %v927
        %v1767 = vunpack.c.h.b16 %v927
        %v1768 = vunpack.c.l.b16 %v928
        %v1769 = vunpack.c.h.b16 %v928
        %v1770 = vunpack.c.l.b16 %v929
        %v1771 = vunpack.c.h.b16 %v929
        %v1772 = vunpack.c.l.b16 %v930
        %v1773 = vunpack.c.h.b16 %v930
        %v1774 = vunpack.c.l.b16 %v931
        %v1775 = vunpack.c.h.b16 %v931
        %v1776 = vunpack.c.l.b16 %v932
        %v1777 = vunpack.c.h.b16 %v932
        %v1778 = vunpack.c.l.b16 %v933
        %v1779 = vunpack.c.h.b16 %v933
        %v1780 = vunpack.c.l.b16 %v934
        %v1781 = vunpack.c.h.b16 %v934
        %v1782 = vunpack.c.l.b16 %v935
        %v1783 = vunpack.c.h.b16 %v935
        %v1784 = vunpack.c.l.b16 %v936
        %v1785 = vunpack.c.h.b16 %v936
        %v1786 = vunpack.c.l.b16 %v937
        %v1787 = vunpack.c.h.b16 %v937
        %v1788 = vunpack.c.l.b16 %v938
        %v1789 = vunpack.c.h.b16 %v938
        %v1790 = vunpack.c.l.b16 %v939
        %v1791 = vunpack.c.h.b16 %v939
        %v1792 = vunpack.c.l.b16 %v940
        %v1793 = vunpack.c.h.b16 %v940
        %v1794 = vunpack.c.l.b16 %v941
        %v1795 = vunpack.c.h.b16 %v941
        %v1796 = vunpack.c.l.b16 %v942
        %v1797 = vunpack.c.h.b16 %v942
        %v1798 = vunpack.c.l.b16 %v943
        %v1799 = vunpack.c.h.b16 %v943
        %v1800 = vunpack.c.l.b16 %v944
        %v1801 = vunpack.c.h.b16 %v944
        %v1802 = vunpack.c.l.b16 %v945
        %v1803 = vunpack.c.h.b16 %v945
        %v1804 = vunpack.c.l.b16 %v946
        %v1805 = vunpack.c.h.b16 %v946
        %v1806 = vunpack.c.l.b16 %v947
        %v1807 = vunpack.c.h.b16 %v947
        %v1808 = vunpack.c.l.b16 %v948
        %v1809 = vunpack.c.h.b16 %v948
        %v1810 = vunpack.c.l.b16 %v949
        %v1811 = vunpack.c.h.b16 %v949
        %v1812 = vunpack.c.l.b16 %v950
        %v1813 = vunpack.c.h.b16 %v950
        %v1814 = vunpack.c.l.b16 %v951
        %v1815 = vunpack.c.h.b16 %v951
        %v1816 = vunpack.c.l.b16 %v952
        %v1817 = vunpack.c.h.b16 %v952
        %v1818 = vunpack.c.l.b16 %v953
        %v1819 = vunpack.c.h.b16 %v953
        %v1820 = vunpack.c.l.b16 %v954
        %v1821 = vunpack.c.h.b16 %v954
        %v1822 = vunpack.c.l.b16 %v955
        %v1823 = vunpack.c.h.b16 %v955
        %v1824 = vunpack.c.l.b16 %v956
        %v1825 = vunpack.c.h.b16 %v956
        %v1826 = vunpack.c.l.b16 %v957
        %v1827 = vunpack.c.h.b16 %v957
        %v1828 = vunpack.c.l.b16 %v958
        %v1829 = vunpack.c.h.b16 %v958
        %v1830 = vunpack.c.l.b16 %v959
        %v1831 = vunpack.c.h.b16 %v959
        %v1832 = vunpack.c.l.b16 %v960
        %v1833 = vunpack.c.h.b16 %v960
        %v1834 = vunpack.c.l.b16 %v961
        %v1835 = vunpack.c.h.b16 %v961
        %v1836 = vunpack.c.l.b16 %v962
        %v1837 = vunpack.c.h.b16 %v962
        %v1838 = vunpack.c.l.b16 %v963
        %v1839 = vunpack.c.h.b16 %v963
        %v1840 = vpack.c.b16 %v1266, %v1264
        %v1841 = vpack.c.b16 %v1267, %v1265
        %v1842 = vpack.c.b16 %v1270, %v1268
        %v1843 = vpack.c.b16 %v1271, %v1269
        %v1844 = vpack.c.b16 %v1274, %v1272
        %v1845 = vpack.c.b16 %v1275, %v1273
        %v1846 = vpack.c.b16 %v1278, %v1276
        %v1847 = vpack.c.b16 %v1279, %v1277
        %v1848 = vpack.c.b16 %v1282, %v1280
        %v1849 = vpack.c.b16 %v1283, %v1281
        %v1850 = vpack.c.b16 %v1286, %v1284
        %v1851 = vpack.c.b16 %v1287, %v1285
        %v1852 = vpack.c.b16 %v1290, %v1288
        %v1853 = vpack.c.b16 %v1291, %v1289
        %v1854 = vpack.c.b16 %v1294, %v1292
        %v1855 = vpack.c.b16 %v1295, %v1293
        %v1856 = vpack.c.b16 %v1298, %v1296
        %v1857 = vpack.c.b16 %v1299, %v1297
        %v1858 = vpack.c.b16 %v1302, %v1300
        %v1859 = vpack.c.b16 %v1303, %v1301
        %v1860 = vpack.c.b16 %v1306, %v1304
        %v1861 = vpack.c.b16 %v1307, %v1305
        %v1862 = vpack.c.b16 %v1310, %v1308
        %v1863 = vpack.c.b16 %v1311, %v1309
        %v1864 = vpack.c.b16 %v1314, %v1312
        %v1865 = vpack.c.b16 %v1315, %v1313
        %v1866 = vpack.c.b16 %v1318, %v1316
        %v1867 = vpack.c.b16 %v1319, %v1317
        %v1868 = vpack.c.b16 %v1322, %v1320
        %v1869 = vpack.c.b16 %v1323, %v1321
        %v1870 = vpack.c.b16 %v1326, %v1324
        %v1871 = vpack.c.b16 %v1327, %v1325
        %v1872 = vpack.c.b16 %v1330, %v1328
        %v1873 = vpack.c.b16 %v1331, %v1329
        %v1874 = vpack.c.b16 %v1334, %v1332
        %v1875 = vpack.c.b16 %v1335, %v1333
        %v1876 = vpack.c.b16 %v1338, %v1336
        %v1877 = vpack.c.b16 %v1339, %v1337
        %v1878 = vpack.c.b16 %v1342, %v1340
        %v1879 = vpack.c.b16 %v1343, %v1341
        %v1880 = vpack.c.b16 %v1346, %v1344
        %v1881 = vpack.c.b16 %v1347, %v1345
        %v1882 = vpack.c.b16 %v1350, %v1348
        %v1883 = vpack.c.b16 %v1351, %v1349
        %v1884 = vpack.c.b16 %v1354, %v1352
        %v1885 = vpack.c.b16 %v1355, %v1353
        %v1886 = vpack.c.b16 %v1358, %v1356
        %v1887 = vpack.c.b16 %v1359, %v1357
        %v1888 = vpack.c.b16 %v1362, %v1360
        %v1889 = vpack.c.b16 %v1363, %v1361
        %v1890 = vpack.c.b16 %v1366, %v1364
        %v1891 = vpack.c.b16 %v1367, %v1365
        %v1892 = vpack.c.b16 %v1370, %v1368
        %v1893 = vpack.c.b16 %v1371, %v1369
        %v1894 = vpack.c.b16 %v1374, %v1372
        %v1895 = vpack.c.b16 %v1375, %v1373
        %v1896 = vpack.c.b16 %v1378, %v1376
        %v1897 = vpack.c.b16 %v1379, %v1377
        %v1898 = vpack.c.b16 %v1382, %v1380
        %v1899 = vpack.c.b16 %v1383, %v1381
        %v1900 = vpack.c.b16 %v1386, %v1384
        %v1901 = vpack.c.b16 %v1387, %v1385
        %v1902 = vpack.c.b16 %v1390, %v1388
        %v1903 = vpack.c.b16 %v1391, %v1389
        %v1904 = vpack.c.b16 %v1394, %v1392
        %v1905 = vpack.c.b16 %v1395, %v1393
        %v1906 = vpack.c.b16 %v1398, %v1396
        %v1907 = vpack.c.b16 %v1399, %v1397
        %v1908 = vpack.c.b16 %v1402, %v1400
        %v1909 = vpack.c.b16 %v1403, %v1401
        %v1910 = vpack.c.b16 %v1406, %v1404
        %v1911 = vpack.c.b16 %v1407, %v1405
        %v1912 = vpack.c.b16 %v1410, %v1408
        %v1913 = vpack.c.b16 %v1411, %v1409
        %v1914 = vpack.c.b16 %v1414, %v1412
        %v1915 = vpack.c.b16 %v1415, %v1413
        %v1916 = vpack.c.b16 %v1418, %v1416
        %v1917 = vpack.c.b16 %v1419, %v1417
        %v1918 = vpack.c.b16 %v1422, %v1420
        %v1919 = vpack.c.b16 %v1423, %v1421
        %v1920 = vpack.c.b16 %v1426, %v1424
        %v1921 = vpack.c.b16 %v1427, %v1425
        %v1922 = vpack.c.b16 %v1430, %v1428
        %v1923 = vpack.c.b16 %v1431, %v1429
        %v1924 = vpack.c.b16 %v1434, %v1432
        %v1925 = vpack.c.b16 %v1435, %v1433
        %v1926 = vpack.c.b16 %v1438, %v1436
        %v1927 = vpack.c.b16 %v1439, %v1437
        %v1928 = vpack.c.b16 %v1442, %v1440
        %v1929 = vpack.c.b16 %v1443, %v1441
        %v1930 = vpack.c.b16 %v1446, %v1444
        %v1931 = vpack.c.b16 %v1447, %v1445
        %v1932 = vpack.c.b16 %v1450, %v1448
        %v1933 = vpack.c.b16 %v1451, %v1449
        %v1934 = vpack.c.b16 %v1454, %v1452
        %v1935 = vpack.c.b16 %v1455, %v1453
        %v1936 = vpack.c.b16 %v1458, %v1456
        %v1937 = vpack.c.b16 %v1459, %v1457
        %v1938 = vpack.c.b16 %v1462, %v1460
        %v1939 = vpack.c.b16 %v1463, %v1461
        %v1940 = vpack.c.b16 %v1466, %v1464
        %v1941 = vpack.c.b16 %v1467, %v1465
        %v1942 = vpack.c.b16 %v1470, %v1468
        %v1943 = vpack.c.b16 %v1471, %v1469
        %v1944 = vpack.c.b16 %v1474, %v1472
        %v1945 = vpack.c.b16 %v1475, %v1473
        %v1946 = vpack.c.b16 %v1478, %v1476
        %v1947 = vpack.c.b16 %v1479, %v1477
        %v1948 = vpack.c.b16 %v1482, %v1480
        %v1949 = vpack.c.b16 %v1483, %v1481
        %v1950 = vpack.c.b16 %v1486, %v1484
        %v1951 = vpack.c.b16 %v1487, %v1485
        %v1952 = vpack.c.b16 %v1490, %v1488
        %v1953 = vpack.c.b16 %v1491, %v1489
        %v1954 = vpack.c.b16 %v1494, %v1492
        %v1955 = vpack.c.b16 %v1495, %v1493
        %v1956 = vpack.c.b16 %v1498, %v1496
        %v1957 = vpack.c.b16 %v1499, %v1497
        %v1958 = vpack.c.b16 %v1502, %v1500
        %v1959 = vpack.c.b16 %v1503, %v1501
        %v1960 = vpack.c.b16 %v1506, %v1504
        %v1961 = vpack.c.b16 %v1507, %v1505
        %v1962 = vpack.c.b16 %v1510, %v1508
        %v1963 = vpack.c.b16 %v1511, %v1509
        %v1964 = vpack.c.b16 %v1514, %v1512
        %v1965 = vpack.c.b16 %v1515, %v1513
        %v1966 = vpack.c.b16 %v1518, %v1516
        %v1967 = vpack.c.b16 %v1519, %v1517
        %v1968 = vpack.c.b16 %v1522, %v1520
        %v1969 = vpack.c.b16 %v1523, %v1521
        %v1970 = vpack.c.b16 %v1526, %v1524
        %v1971 = vpack.c.b16 %v1527, %v1525
        %v1972 = vpack.c.b16 %v1530, %v1528
        %v1973 = vpack.c.b16 %v1531, %v1529
        %v1974 = vpack.c.b16 %v1534, %v1532
        %v1975 = vpack.c.b16 %v1535, %v1533
        %v1976 = vpack.c.b16 %v1538, %v1536
        %v1977 = vpack.c.b16 %v1539, %v1537
        %v1978 = vpack.c.b16 %v1542, %v1540
        %v1979 = vpack.c.b16 %v1543, %v1541
        %v1980 = vpack.c.b16 %v1546, %v1544
        %v1981 = vpack.c.b16 %v1547, %v1545
        %v1982 = vpack.c.b16 %v1550, %v1548
        %v1983 = vpack.c.b16 %v1551, %v1549
        %v1984 = vpack.c.b16 %v1554, %v1552
        %v1985 = vpack.c.b16 %v1555, %v1553
        %v1986 = vpack.c.b16 %v1558, %v1556
        %v1987 = vpack.c.b16 %v1559, %v1557
        %v1988 = vpack.c.b16 %v1562, %v1560
        %v1989 = vpack.c.b16 %v1563, %v1561
        %v1990 = vpack.c.b16 %v1566, %v1564
        %v1991 = vpack.c.b16 %v1567, %v1565
        %v1992 = vpack.c.b16 %v1570, %v1568
        %v1993 = vpack.c.b16 %v1571, %v1569
        %v1994 = vpack.c.b16 %v1574, %v1572
        %v1995 = vpack.c.b16 %v1575, %v1573
        %v1996 = vpack.c.b16 %v1578, %v1576
        %v1997 = vpack.c.b16 %v1579, %v1577
        %v1998 = vpack.c.b16 %v1582, %v1580
        %v1999 = vpack.c.b16 %v1583, %v1581
        %v2000 = vpack.c.b16 %v1586, %v1584
        %v2001 = vpack.c.b16 %v1587, %v1585
        %v2002 = vpack.c.b16 %v1590, %v1588
        %v2003 = vpack.c.b16 %v1591, %v1589
        %v2004 = vpack.c.b16 %v1594, %v1592
        %v2005 = vpack.c.b16 %v1595, %v1593
        %v2006 = vpack.c.b16 %v1598, %v1596
        %v2007 = vpack.c.b16 %v1599, %v1597
        %v2008 = vpack.c.b16 %v1602, %v1600
        %v2009 = vpack.c.b16 %v1603, %v1601
        %v2010 = vpack.c.b16 %v1606, %v1604
        %v2011 = vpack.c.b16 %v1607, %v1605
        %v2012 = vpack.c.b16 %v1610, %v1608
        %v2013 = vpack.c.b16 %v1611, %v1609
        %v2014 = vpack.c.b16 %v1614, %v1612
        %v2015 = vpack.c.b16 %v1615, %v1613
        %v2016 = vpack.c.b16 %v1618, %v1616
        %v2017 = vpack.c.b16 %v1619, %v1617
        %v2018 = vpack.c.b16 %v1622, %v1620
        %v2019 = vpack.c.b16 %v1623, %v1621
        %v2020 = vpack.c.b16 %v1626, %v1624
        %v2021 = vpack.c.b16 %v1627, %v1625
        %v2022 = vpack.c.b16 %v1630, %v1628
        %v2023 = vpack.c.b16 %v1631, %v1629
        %v2024 = vpack.c.b16 %v1634, %v1632
        %v2025 = vpack.c.b16 %v1635, %v1633
        %v2026 = vpack.c.b16 %v1638, %v1636
        %v2027 = vpack.c.b16 %v1639, %v1637
        %v2028 = vpack.c.b16 %v1642, %v1640
        %v2029 = vpack.c.b16 %v1643, %v1641
        %v2030 = vpack.c.b16 %v1646, %v1644
        %v2031 = vpack.c.b16 %v1647, %v1645
        %v2032 = vpack.c.b16 %v1650, %v1648
        %v2033 = vpack.c.b16 %v1651, %v1649
        %v2034 = vpack.c.b16 %v1654, %v1652
        %v2035 = vpack.c.b16 %v1655, %v1653
        %v2036 = vpack.c.b16 %v1658, %v1656
        %v2037 = vpack.c.b16 %v1659, %v1657
        %v2038 = vpack.c.b16 %v1662, %v1660
        %v2039 = vpack.c.b16 %v1663, %v1661
        %v2040 = vpack.c.b16 %v1666, %v1664
        %v2041 = vpack.c.b16 %v1667, %v1665
        %v2042 = vpack.c.b16 %v1670, %v1668
        %v2043 = vpack.c.b16 %v1671, %v1669
        %v2044 = vpack.c.b16 %v1674, %v1672
        %v2045 = vpack.c.b16 %v1675, %v1673
        %v2046 = vpack.c.b16 %v1678, %v1676
        %v2047 = vpack.c.b16 %v1679, %v1677
        %v2048 = vpack.c.b16 %v1682, %v1680
        %v2049 = vpack.c.b16 %v1683, %v1681
        %v2050 = vpack.c.b16 %v1686, %v1684
        %v2051 = vpack.c.b16 %v1687, %v1685
        %v2052 = vpack.c.b16 %v1690, %v1688
        %v2053 = vpack.c.b16 %v1691, %v1689
        %v2054 = vpack.c.b16 %v1694, %v1692
        %v2055 = vpack.c.b16 %v1695, %v1693
        %v2056 = vpack.c.b16 %v1698, %v1696
        %v2057 = vpack.c.b16 %v1699, %v1697
        %v2058 = vpack.c.b16 %v1702, %v1700
        %v2059 = vpack.c.b16 %v1703, %v1701
        %v2060 = vpack.c.b16 %v1706, %v1704
        %v2061 = vpack.c.b16 %v1707, %v1705
        %v2062 = vpack.c.b16 %v1710, %v1708
        %v2063 = vpack.c.b16 %v1711, %v1709
        %v2064 = vpack.c.b16 %v1714, %v1712
        %v2065 = vpack.c.b16 %v1715, %v1713
        %v2066 = vpack.c.b16 %v1718, %v1716
        %v2067 = vpack.c.b16 %v1719, %v1717
        %v2068 = vpack.c.b16 %v1722, %v1720
        %v2069 = vpack.c.b16 %v1723, %v1721
        %v2070 = vpack.c.b16 %v1726, %v1724
        %v2071 = vpack.c.b16 %v1727, %v1725
        %v2072 = vpack.c.b16 %v1730, %v1728
        %v2073 = vpack.c.b16 %v1731, %v1729
        %v2074 = vpack.c.b16 %v1734, %v1732
        %v2075 = vpack.c.b16 %v1735, %v1733
        %v2076 = vpack.c.b16 %v1738, %v1736
        %v2077 = vpack.c.b16 %v1739, %v1737
        %v2078 = vpack.c.b16 %v1742, %v1740
        %v2079 = vpack.c.b16 %v1743, %v1741
        %v2080 = vpack.c.b16 %v1746, %v1744
        %v2081 = vpack.c.b16 %v1747, %v1745
        %v2082 = vpack.c.b16 %v1750, %v1748
        %v2083 = vpack.c.b16 %v1751, %v1749
        %v2084 = vpack.c.b16 %v1754, %v1752
        %v2085 = vpack.c.b16 %v1755, %v1753
        %v2086 = vpack.c.b16 %v1758, %v1756
        %v2087 = vpack.c.b16 %v1759, %v1757
        %v2088 = vpack.c.b16 %v1762, %v1760
        %v2089 = vpack.c.b16 %v1763, %v1761
        %v2090 = vpack.c.b16 %v1766, %v1764
        %v2091 = vpack.c.b16 %v1767, %v1765
        %v2092 = vpack.c.b16 %v1770, %v1768
        %v2093 = vpack.c.b16 %v1771, %v1769
        %v2094 = vpack.c.b16 %v1774, %v1772
        %v2095 = vpack.c.b16 %v1775, %v1773
        %v2096 = vpack.c.b16 %v1778, %v1776
        %v2097 = vpack.c.b16 %v1779, %v1777
        %v2098 = vpack.c.b16 %v1782, %v1780
        %v2099 = vpack.c.b16 %v1783, %v1781
        %v2100 = vpack.c.b16 %v1786, %v1784
        %v2101 = vpack.c.b16 %v1787, %v1785
        %v2102 = vpack.c.b16 %v1790, %v1788
        %v2103 = vpack.c.b16 %v1791, %v1789
        %v2104 = vpack.c.b16 %v1794, %v1792
        %v2105 = vpack.c.b16 %v1795, %v1793
        %v2106 = vpack.c.b16 %v1798, %v1796
        %v2107 = vpack.c.b16 %v1799, %v1797
        %v2108 = vpack.c.b16 %v1802, %v1800
        %v2109 = vpack.c.b16 %v1803, %v1801
        %v2110 = vpack.c.b16 %v1806, %v1804
        %v2111 = vpack.c.b16 %v1807, %v1805
        %v2112 = vpack.c.b16 %v1810, %v1808
        %v2113 = vpack.c.b16 %v1811, %v1809
        %v2114 = vpack.c.b16 %v1814, %v1812
        %v2115 = vpack.c.b16 %v1815, %v1813
        %v2116 = vpack.c.b16 %v1818, %v1816
        %v2117 = vpack.c.b16 %v1819, %v1817
        %v2118 = vpack.c.b16 %v1822, %v1820
        %v2119 = vpack.c.b16 %v1823, %v1821
        %v2120 = vpack.c.b16 %v1826, %v1824
        %v2121 = vpack.c.b16 %v1827, %v1825
        %v2122 = vpack.c.b16 %v1830, %v1828
        %v2123 = vpack.c.b16 %v1831, %v1829
        %v2124 = vpack.c.b16 %v1834, %v1832
        %v2125 = vpack.c.b16 %v1835, %v1833
        %v2126 = vpack.c.b16 %v1838, %v1836
        %v2127 = vpack.c.b16 %v1839, %v1837
        %2416 = vmatprep.subr.bf16.mxu0 %v1841
        %2417 = vmatpush1.bf16.msra.mxu0 %v1840
        %2418 = vmatprep.subr.bf16.mxu0 %v1843
        %2419 = vmatpush1.bf16.msra.mxu0 %v1842
        %2420 = vmatprep.subr.bf16.mxu0 %v1845
        %2421 = vmatpush1.bf16.msra.mxu0 %v1844
        %2422 = vmatprep.subr.bf16.mxu0 %v1847
        %2423 = vmatpush1.bf16.msra.mxu0 %v1846
        %2424 = vmatprep.subr.bf16.mxu0 %v1849
        %2425 = vmatpush1.bf16.msra.mxu0 %v1848
        %2426 = vmatprep.subr.bf16.mxu0 %v1851
        %2427 = vmatpush1.bf16.msra.mxu0 %v1850
        %2428 = vmatprep.subr.bf16.mxu0 %v1853
        %2429 = vmatpush1.bf16.msra.mxu0 %v1852
        %2430 = vmatprep.subr.bf16.mxu0 %v1855
        %2431 = vmatpush1.bf16.msra.mxu0 %v1854
        %2432 = vmatprep.subr.bf16.mxu0 %v1857
        %2433 = vmatpush1.bf16.msra.mxu0 %v1856
        %2434 = vmatprep.subr.bf16.mxu0 %v1859
        %2435 = vmatpush1.bf16.msra.mxu0 %v1858
        %2436 = vmatprep.subr.bf16.mxu0 %v1861
        %2437 = vmatpush1.bf16.msra.mxu0 %v1860
        %2438 = vmatprep.subr.bf16.mxu0 %v1863
        %2439 = vmatpush1.bf16.msra.mxu0 %v1862
        %2440 = vmatprep.subr.bf16.mxu0 %v1865
        %2441 = vmatpush1.bf16.msra.mxu0 %v1864
        %2442 = vmatprep.subr.bf16.mxu0 %v1867
        %2443 = vmatpush1.bf16.msra.mxu0 %v1866
        %2444 = vmatprep.subr.bf16.mxu0 %v1869
        %2445 = vmatpush1.bf16.msra.mxu0 %v1868
        %2446 = vmatprep.subr.bf16.mxu0 %v1871
        %2447 = vmatpush1.bf16.msra.mxu0 %v1870
        %2448 = vmatprep.mubr.bf16.mxu0 %v659
        %2449 = vmatmul.mubr.bf16.gmra.mrb[0].mxu0 %v658
        %v2450 = vpop.f32.mrb[0].mxu0
        %v2451 = vadd.f32 %v969, %v2450
        %v2452 = vpop.f32.mrb[0].mxu0
        %v2453 = vadd.f32 %v973, %v2452
        %v2454 = vpop.f32.mrb[0].mxu0
        %v2455 = vpop.f32.mrb[0].mxu0
        %2456 = vdwg.mxu0
        %2457 = vmatprep.subr.bf16.mxu0 %v1873
        %2458 = vmatpush1.bf16.msra.mxu0 %v1872
        %2459 = vmatprep.subr.bf16.mxu0 %v1875
        %2460 = vmatpush1.bf16.msra.mxu0 %v1874
        %2461 = vmatprep.subr.bf16.mxu0 %v1877
        %2462 = vmatpush1.bf16.msra.mxu0 %v1876
        %2463 = vmatprep.subr.bf16.mxu0 %v1879
        %2464 = vmatpush1.bf16.msra.mxu0 %v1878
        %2465 = vmatprep.subr.bf16.mxu0 %v1881
        %2466 = vmatpush1.bf16.msra.mxu0 %v1880
        %2467 = vmatprep.subr.bf16.mxu0 %v1883
        %2468 = vmatpush1.bf16.msra.mxu0 %v1882
        %2469 = vmatprep.subr.bf16.mxu0 %v1885
        %2470 = vmatpush1.bf16.msra.mxu0 %v1884
        %2471 = vmatprep.subr.bf16.mxu0 %v1887
        %2472 = vmatpush1.bf16.msra.mxu0 %v1886
        %2473 = vmatprep.subr.bf16.mxu0 %v1889
        %2474 = vmatpush1.bf16.msra.mxu0 %v1888
        %2475 = vmatprep.subr.bf16.mxu0 %v1891
        %2476 = vmatpush1.bf16.msra.mxu0 %v1890
        %2477 = vmatprep.subr.bf16.mxu0 %v1893
        %2478 = vmatpush1.bf16.msra.mxu0 %v1892
        %2479 = vmatprep.subr.bf16.mxu0 %v1895
        %2480 = vmatpush1.bf16.msra.mxu0 %v1894
        %2481 = vmatprep.subr.bf16.mxu0 %v1897
        %2482 = vmatpush1.bf16.msra.mxu0 %v1896
        %2483 = vmatprep.subr.bf16.mxu0 %v1899
        %2484 = vmatpush1.bf16.msra.mxu0 %v1898
        %2485 = vmatprep.subr.bf16.mxu0 %v1901
        %2486 = vmatpush1.bf16.msra.mxu0 %v1900
        %2487 = vmatprep.subr.bf16.mxu0 %v1903
        %2488 = vmatpush1.bf16.msra.mxu0 %v1902
        %2489 = vmatprep.mubr.bf16.mxu0 %v661
        %2490 = vmatmul.mubr.bf16.gmra.mrb[0].mxu0 %v660
        %v2491 = vpop.f32.mrb[0].mxu0
        %v2492 = vadd.f32 %v2451, %v2491
        %v2493 = vpop.f32.mrb[0].mxu0
        %v2494 = vadd.f32 %v2453, %v2493
        %v2495 = vpop.f32.mrb[0].mxu0
        %v2496 = vpop.f32.mrb[0].mxu0
        %2497 = vdwg.mxu0
        %2498 = vmatprep.subr.bf16.mxu0 %v1905
        %2499 = vmatpush1.bf16.msra.mxu0 %v1904
        %2500 = vmatprep.subr.bf16.mxu0 %v1907
        %2501 = vmatpush1.bf16.msra.mxu0 %v1906
        %2502 = vmatprep.subr.bf16.mxu0 %v1909
        %2503 = vmatpush1.bf16.msra.mxu0 %v1908
        %2504 = vmatprep.subr.bf16.mxu0 %v1911
        %2505 = vmatpush1.bf16.msra.mxu0 %v1910
        %2506 = vmatprep.subr.bf16.mxu0 %v1913
        %2507 = vmatpush1.bf16.msra.mxu0 %v1912
        %2508 = vmatprep.subr.bf16.mxu0 %v1915
        %2509 = vmatpush1.bf16.msra.mxu0 %v1914
        %2510 = vmatprep.subr.bf16.mxu0 %v1917
        %2511 = vmatpush1.bf16.msra.mxu0 %v1916
        %2512 = vmatprep.subr.bf16.mxu0 %v1919
        %2513 = vmatpush1.bf16.msra.mxu0 %v1918
        %2514 = vmatprep.subr.bf16.mxu0 %v1921
        %2515 = vmatpush1.bf16.msra.mxu0 %v1920
        %2516 = vmatprep.subr.bf16.mxu0 %v1923
        %2517 = vmatpush1.bf16.msra.mxu0 %v1922
        %2518 = vmatprep.subr.bf16.mxu0 %v1925
        %2519 = vmatpush1.bf16.msra.mxu0 %v1924
        %2520 = vmatprep.subr.bf16.mxu0 %v1927
        %2521 = vmatpush1.bf16.msra.mxu0 %v1926
        %2522 = vmatprep.subr.bf16.mxu0 %v1929
        %2523 = vmatpush1.bf16.msra.mxu0 %v1928
        %2524 = vmatprep.subr.bf16.mxu0 %v1931
        %2525 = vmatpush1.bf16.msra.mxu0 %v1930
        %2526 = vmatprep.subr.bf16.mxu0 %v1933
        %2527 = vmatpush1.bf16.msra.mxu0 %v1932
        %2528 = vmatprep.subr.bf16.mxu0 %v1935
        %2529 = vmatpush1.bf16.msra.mxu0 %v1934
        %2530 = vmatprep.mubr.bf16.mxu0 %v663
        %2531 = vmatmul.mubr.bf16.gmra.mrb[0].mxu0 %v662
        %v2532 = vpop.f32.mrb[0].mxu0
        %v2533 = vadd.f32 %v2492, %v2532
        %v2534 = vpop.f32.mrb[0].mxu0
        %v2535 = vadd.f32 %v2494, %v2534
        %v2536 = vpop.f32.mrb[0].mxu0
        %v2537 = vpop.f32.mrb[0].mxu0
        %2538 = vdwg.mxu0
        %2539 = vmatprep.subr.bf16.mxu0 %v1937
        %2540 = vmatpush1.bf16.msra.mxu0 %v1936
        %2541 = vmatprep.subr.bf16.mxu0 %v1939
        %2542 = vmatpush1.bf16.msra.mxu0 %v1938
        %2543 = vmatprep.subr.bf16.mxu0 %v1941
        %2544 = vmatpush1.bf16.msra.mxu0 %v1940
        %2545 = vmatprep.subr.bf16.mxu0 %v1943
        %2546 = vmatpush1.bf16.msra.mxu0 %v1942
        %2547 = vmatprep.subr.bf16.mxu0 %v1945
        %2548 = vmatpush1.bf16.msra.mxu0 %v1944
        %2549 = vmatprep.subr.bf16.mxu0 %v1947
        %2550 = vmatpush1.bf16.msra.mxu0 %v1946
        %2551 = vmatprep.subr.bf16.mxu0 %v1949
        %2552 = vmatpush1.bf16.msra.mxu0 %v1948
        %2553 = vmatprep.subr.bf16.mxu0 %v1951
        %2554 = vmatpush1.bf16.msra.mxu0 %v1950
        %2555 = vmatprep.subr.bf16.mxu0 %v1953
        %2556 = vmatpush1.bf16.msra.mxu0 %v1952
        %2557 = vmatprep.subr.bf16.mxu0 %v1955
        %2558 = vmatpush1.bf16.msra.mxu0 %v1954
        %2559 = vmatprep.subr.bf16.mxu0 %v1957
        %2560 = vmatpush1.bf16.msra.mxu0 %v1956
        %2561 = vmatprep.subr.bf16.mxu0 %v1959
        %2562 = vmatpush1.bf16.msra.mxu0 %v1958
        %2563 = vmatprep.subr.bf16.mxu0 %v1961
        %2564 = vmatpush1.bf16.msra.mxu0 %v1960
        %2565 = vmatprep.subr.bf16.mxu0 %v1963
        %2566 = vmatpush1.bf16.msra.mxu0 %v1962
        %2567 = vmatprep.subr.bf16.mxu0 %v1965
        %2568 = vmatpush1.bf16.msra.mxu0 %v1964
        %2569 = vmatprep.subr.bf16.mxu0 %v1967
        %2570 = vmatpush1.bf16.msra.mxu0 %v1966
        %2571 = vmatprep.mubr.bf16.mxu0 %v665
        %2572 = vmatmul.mubr.bf16.gmra.mrb[0].mxu0 %v664
        %v2573 = vpop.f32.mrb[0].mxu0
        %v2574 = vadd.f32 %v2533, %v2573
        %v2575 = vpop.f32.mrb[0].mxu0
        %v2576 = vadd.f32 %v2535, %v2575
        %v2577 = vpop.f32.mrb[0].mxu0
        %v2578 = vpop.f32.mrb[0].mxu0
        %2579 = vdwg.mxu0
        %2580 = vmatprep.subr.bf16.mxu0 %v1969
        %2581 = vmatpush1.bf16.msra.mxu0 %v1968
        %2582 = vmatprep.subr.bf16.mxu0 %v1971
        %2583 = vmatpush1.bf16.msra.mxu0 %v1970
        %2584 = vmatprep.subr.bf16.mxu0 %v1973
        %2585 = vmatpush1.bf16.msra.mxu0 %v1972
        %2586 = vmatprep.subr.bf16.mxu0 %v1975
        %2587 = vmatpush1.bf16.msra.mxu0 %v1974
        %2588 = vmatprep.subr.bf16.mxu0 %v1977
        %2589 = vmatpush1.bf16.msra.mxu0 %v1976
        %2590 = vmatprep.subr.bf16.mxu0 %v1979
        %2591 = vmatpush1.bf16.msra.mxu0 %v1978
        %2592 = vmatprep.subr.bf16.mxu0 %v1981
        %2593 = vmatpush1.bf16.msra.mxu0 %v1980
        %2594 = vmatprep.subr.bf16.mxu0 %v1983
        %2595 = vmatpush1.bf16.msra.mxu0 %v1982
        %2596 = vmatprep.subr.bf16.mxu0 %v1985
        %2597 = vmatpush1.bf16.msra.mxu0 %v1984
        %2598 = vmatprep.subr.bf16.mxu0 %v1987
        %2599 = vmatpush1.bf16.msra.mxu0 %v1986
        %2600 = vmatprep.subr.bf16.mxu0 %v1989
        %2601 = vmatpush1.bf16.msra.mxu0 %v1988
        %2602 = vmatprep.subr.bf16.mxu0 %v1991
        %2603 = vmatpush1.bf16.msra.mxu0 %v1990
        %2604 = vmatprep.subr.bf16.mxu0 %v1993
        %2605 = vmatpush1.bf16.msra.mxu0 %v1992
        %2606 = vmatprep.subr.bf16.mxu0 %v1995
        %2607 = vmatpush1.bf16.msra.mxu0 %v1994
        %2608 = vmatprep.subr.bf16.mxu0 %v1997
        %2609 = vmatpush1.bf16.msra.mxu0 %v1996
        %2610 = vmatprep.subr.bf16.mxu0 %v1999
        %2611 = vmatpush1.bf16.msra.mxu0 %v1998
        %2612 = vmatprep.mubr.bf16.mxu0 %v667
        %2613 = vmatmul.mubr.bf16.gmra.mrb[0].mxu0 %v666
        %v2614 = vpop.f32.mrb[0].mxu0
        %v2615 = vadd.f32 %v2574, %v2614
        %v2616 = vpop.f32.mrb[0].mxu0
        %v2617 = vadd.f32 %v2576, %v2616
        %v2618 = vpop.f32.mrb[0].mxu0
        %v2619 = vpop.f32.mrb[0].mxu0
        %2620 = vdwg.mxu0
        %2621 = vmatprep.subr.bf16.mxu0 %v2001
        %2622 = vmatpush1.bf16.msra.mxu0 %v2000
        %2623 = vmatprep.subr.bf16.mxu0 %v2003
        %2624 = vmatpush1.bf16.msra.mxu0 %v2002
        %2625 = vmatprep.subr.bf16.mxu0 %v2005
        %2626 = vmatpush1.bf16.msra.mxu0 %v2004
        %2627 = vmatprep.subr.bf16.mxu0 %v2007
        %2628 = vmatpush1.bf16.msra.mxu0 %v2006
        %2629 = vmatprep.subr.bf16.mxu0 %v2009
        %2630 = vmatpush1.bf16.msra.mxu0 %v2008
        %2631 = vmatprep.subr.bf16.mxu0 %v2011
        %2632 = vmatpush1.bf16.msra.mxu0 %v2010
        %2633 = vmatprep.subr.bf16.mxu0 %v2013
        %2634 = vmatpush1.bf16.msra.mxu0 %v2012
        %2635 = vmatprep.subr.bf16.mxu0 %v2015
        %2636 = vmatpush1.bf16.msra.mxu0 %v2014
        %2637 = vmatprep.subr.bf16.mxu0 %v2017
        %2638 = vmatpush1.bf16.msra.mxu0 %v2016
        %2639 = vmatprep.subr.bf16.mxu0 %v2019
        %2640 = vmatpush1.bf16.msra.mxu0 %v2018
        %2641 = vmatprep.subr.bf16.mxu0 %v2021
        %2642 = vmatpush1.bf16.msra.mxu0 %v2020
        %2643 = vmatprep.subr.bf16.mxu0 %v2023
        %2644 = vmatpush1.bf16.msra.mxu0 %v2022
        %2645 = vmatprep.subr.bf16.mxu0 %v2025
        %2646 = vmatpush1.bf16.msra.mxu0 %v2024
        %2647 = vmatprep.subr.bf16.mxu0 %v2027
        %2648 = vmatpush1.bf16.msra.mxu0 %v2026
        %2649 = vmatprep.subr.bf16.mxu0 %v2029
        %2650 = vmatpush1.bf16.msra.mxu0 %v2028
        %2651 = vmatprep.subr.bf16.mxu0 %v2031
        %2652 = vmatpush1.bf16.msra.mxu0 %v2030
        %2653 = vmatprep.mubr.bf16.mxu0 %v669
        %2654 = vmatmul.mubr.bf16.gmra.mrb[0].mxu0 %v668
        %v2655 = vpop.f32.mrb[0].mxu0
        %v2656 = vadd.f32 %v2615, %v2655
        %v2657 = vpop.f32.mrb[0].mxu0
        %v2658 = vadd.f32 %v2617, %v2657
        %v2659 = vpop.f32.mrb[0].mxu0
        %v2660 = vpop.f32.mrb[0].mxu0
        %2661 = vdwg.mxu0
        %2662 = vmatprep.subr.bf16.mxu0 %v2033
        %2663 = vmatpush1.bf16.msra.mxu0 %v2032
        %2664 = vmatprep.subr.bf16.mxu0 %v2035
        %2665 = vmatpush1.bf16.msra.mxu0 %v2034
        %2666 = vmatprep.subr.bf16.mxu0 %v2037
        %2667 = vmatpush1.bf16.msra.mxu0 %v2036
        %2668 = vmatprep.subr.bf16.mxu0 %v2039
        %2669 = vmatpush1.bf16.msra.mxu0 %v2038
        %2670 = vmatprep.subr.bf16.mxu0 %v2041
        %2671 = vmatpush1.bf16.msra.mxu0 %v2040
        %2672 = vmatprep.subr.bf16.mxu0 %v2043
        %2673 = vmatpush1.bf16.msra.mxu0 %v2042
        %2674 = vmatprep.subr.bf16.mxu0 %v2045
        %2675 = vmatpush1.bf16.msra.mxu0 %v2044
        %2676 = vmatprep.subr.bf16.mxu0 %v2047
        %2677 = vmatpush1.bf16.msra.mxu0 %v2046
        %2678 = vmatprep.subr.bf16.mxu0 %v2049
        %2679 = vmatpush1.bf16.msra.mxu0 %v2048
        %2680 = vmatprep.subr.bf16.mxu0 %v2051
        %2681 = vmatpush1.bf16.msra.mxu0 %v2050
        %2682 = vmatprep.subr.bf16.mxu0 %v2053
        %2683 = vmatpush1.bf16.msra.mxu0 %v2052
        %2684 = vmatprep.subr.bf16.mxu0 %v2055
        %2685 = vmatpush1.bf16.msra.mxu0 %v2054
        %2686 = vmatprep.subr.bf16.mxu0 %v2057
        %2687 = vmatpush1.bf16.msra.mxu0 %v2056
        %2688 = vmatprep.subr.bf16.mxu0 %v2059
        %2689 = vmatpush1.bf16.msra.mxu0 %v2058
        %2690 = vmatprep.subr.bf16.mxu0 %v2061
        %2691 = vmatpush1.bf16.msra.mxu0 %v2060
        %2692 = vmatprep.subr.bf16.mxu0 %v2063
        %2693 = vmatpush1.bf16.msra.mxu0 %v2062
        %2694 = vmatprep.mubr.bf16.mxu0 %v671
        %2695 = vmatmul.mubr.bf16.gmra.mrb[0].mxu0 %v670
        %v2696 = vpop.f32.mrb[0].mxu0
        %v2697 = vadd.f32 %v2656, %v2696
        %v2698 = vpop.f32.mrb[0].mxu0
        %v2699 = vadd.f32 %v2658, %v2698
        %v2700 = vpop.f32.mrb[0].mxu0
        %v2701 = vpop.f32.mrb[0].mxu0
        %2702 = vdwg.mxu0
        %2703 = vmatprep.subr.bf16.mxu0 %v2065
        %2704 = vmatpush1.bf16.msra.mxu0 %v2064
        %2705 = vmatprep.subr.bf16.mxu0 %v2067
        %2706 = vmatpush1.bf16.msra.mxu0 %v2066
        %2707 = vmatprep.subr.bf16.mxu0 %v2069
        %2708 = vmatpush1.bf16.msra.mxu0 %v2068
        %2709 = vmatprep.subr.bf16.mxu0 %v2071
        %2710 = vmatpush1.bf16.msra.mxu0 %v2070
        %2711 = vmatprep.subr.bf16.mxu0 %v2073
        %2712 = vmatpush1.bf16.msra.mxu0 %v2072
        %2713 = vmatprep.subr.bf16.mxu0 %v2075
        %2714 = vmatpush1.bf16.msra.mxu0 %v2074
        %2715 = vmatprep.subr.bf16.mxu0 %v2077
        %2716 = vmatpush1.bf16.msra.mxu0 %v2076
        %2717 = vmatprep.subr.bf16.mxu0 %v2079
        %2718 = vmatpush1.bf16.msra.mxu0 %v2078
        %2719 = vmatprep.subr.bf16.mxu0 %v2081
        %2720 = vmatpush1.bf16.msra.mxu0 %v2080
        %2721 = vmatprep.subr.bf16.mxu0 %v2083
        %2722 = vmatpush1.bf16.msra.mxu0 %v2082
        %2723 = vmatprep.subr.bf16.mxu0 %v2085
        %2724 = vmatpush1.bf16.msra.mxu0 %v2084
        %2725 = vmatprep.subr.bf16.mxu0 %v2087
        %2726 = vmatpush1.bf16.msra.mxu0 %v2086
        %2727 = vmatprep.subr.bf16.mxu0 %v2089
        %2728 = vmatpush1.bf16.msra.mxu0 %v2088
        %2729 = vmatprep.subr.bf16.mxu0 %v2091
        %2730 = vmatpush1.bf16.msra.mxu0 %v2090
        %2731 = vmatprep.subr.bf16.mxu0 %v2093
        %2732 = vmatpush1.bf16.msra.mxu0 %v2092
        %2733 = vmatprep.subr.bf16.mxu0 %v2095
        %2734 = vmatpush1.bf16.msra.mxu0 %v2094
        %2735 = vmatprep.mubr.bf16.mxu0 %v673
        %2736 = vmatmul.mubr.bf16.gmra.mrb[0].mxu0 %v672
        %v2737 = vpop.f32.mrb[0].mxu0
        %v2738 = vadd.f32 %v2697, %v2737
        %v2739 = vpop.f32.mrb[0].mxu0
        %v2740 = vadd.f32 %v2699, %v2739
        %v2741 = vpop.f32.mrb[0].mxu0
        %v2742 = vpop.f32.mrb[0].mxu0
        %2743 = vdwg.mxu0
        %2744 = vmatprep.subr.bf16.mxu0 %v2097
        %2745 = vmatpush1.bf16.msra.mxu0 %v2096
        %2746 = vmatprep.subr.bf16.mxu0 %v2099
        %2747 = vmatpush1.bf16.msra.mxu0 %v2098
        %2748 = vmatprep.subr.bf16.mxu0 %v2101
        %2749 = vmatpush1.bf16.msra.mxu0 %v2100
        %2750 = vmatprep.subr.bf16.mxu0 %v2103
        %2751 = vmatpush1.bf16.msra.mxu0 %v2102
        %2752 = vmatprep.subr.bf16.mxu0 %v2105
        %2753 = vmatpush1.bf16.msra.mxu0 %v2104
        %2754 = vmatprep.subr.bf16.mxu0 %v2107
        %2755 = vmatpush1.bf16.msra.mxu0 %v2106
        %2756 = vmatprep.subr.bf16.mxu0 %v2109
        %2757 = vmatpush1.bf16.msra.mxu0 %v2108
        %2758 = vmatprep.subr.bf16.mxu0 %v2111
        %2759 = vmatpush1.bf16.msra.mxu0 %v2110
        %2760 = vmatprep.subr.bf16.mxu0 %v2113
        %2761 = vmatpush1.bf16.msra.mxu0 %v2112
        %2762 = vmatprep.subr.bf16.mxu0 %v2115
        %2763 = vmatpush1.bf16.msra.mxu0 %v2114
        %2764 = vmatprep.subr.bf16.mxu0 %v2117
        %2765 = vmatpush1.bf16.msra.mxu0 %v2116
        %2766 = vmatprep.subr.bf16.mxu0 %v2119
        %2767 = vmatpush1.bf16.msra.mxu0 %v2118
        %2768 = vmatprep.subr.bf16.mxu0 %v2121
        %2769 = vmatpush1.bf16.msra.mxu0 %v2120
        %2770 = vmatprep.subr.bf16.mxu0 %v2123
        %2771 = vmatpush1.bf16.msra.mxu0 %v2122
        %2772 = vmatprep.subr.bf16.mxu0 %v2125
        %2773 = vmatpush1.bf16.msra.mxu0 %v2124
        %2774 = vmatprep.subr.bf16.mxu0 %v2127
        %2775 = vmatpush1.bf16.msra.mxu0 %v2126
        %2776 = vmatprep.mubr.bf16.mxu0 %v675
        %2777 = vmatmul.mubr.bf16.gmra.mrb[0].mxu0 %v674
        %v2778 = vpop.f32.mrb[0].mxu0
        %v2779 = vadd.f32 %v2738, %v2778
        %v2780 = vpop.f32.mrb[0].mxu0
        %v2781 = vadd.f32 %v2740, %v2780
        %v2782 = vpop.f32.mrb[0].mxu0
        %v2783 = vpop.f32.mrb[0].mxu0
        %2784 = vdwg.mxu0
        %v2785 = vmax.f32 %v2779, 0.0
        %v2786 = vmax.f32 %v2781, 0.0
        %v2787 = vpack.c.bf16 %v2785, %v2785
        %v2788 = vpack.c.bf16 %v2786, %v2786
        %v2789 = vld [vmem:[%s5] sm:$0xf]
        %v2790 = vld [vmem:[%s5 + $0x4] sm:$0xf]
        %v2791 = vld [vmem:[%s5 + $0x8] sm:$0xf]
        %v2792 = vld [vmem:[%s5 + $0xc] sm:$0xf]
        %v2793 = vld [vmem:[%s5 + $0x10] sm:$0xf]
        %v2794 = vld [vmem:[%s5 + $0x14] sm:$0xf]
        %v2795 = vld [vmem:[%s5 + $0x18] sm:$0xf]
        %v2796 = vld [vmem:[%s5 + $0x1c] sm:$0xf]
        %v2797 = vld [vmem:[%s5 + $0x20] sm:$0xf]
        %v2798 = vld [vmem:[%s5 + $0x24] sm:$0xf]
        %v2799 = vld [vmem:[%s5 + $0x28] sm:$0xf]
        %v2800 = vld [vmem:[%s5 + $0x2c] sm:$0xf]
        %v2801 = vld [vmem:[%s5 + $0x30] sm:$0xf]
        %v2802 = vld [vmem:[%s5 + $0x34] sm:$0xf]
        %v2803 = vld [vmem:[%s5 + $0x38] sm:$0xf]
        %v2804 = vld [vmem:[%s5 + $0x3c] sm:$0xf]
        %v2805 = vld [vmem:[%s5 + $0x40] sm:$0xf]
        %v2806 = vld [vmem:[%s5 + $0x44] sm:$0xf]
        %v2807 = vld [vmem:[%s5 + $0x48] sm:$0xf]
        %v2808 = vld [vmem:[%s5 + $0x4c] sm:$0xf]
        %v2809 = vld [vmem:[%s5 + $0x50] sm:$0xf]
        %v2810 = vld [vmem:[%s5 + $0x54] sm:$0xf]
        %v2811 = vld [vmem:[%s5 + $0x58] sm:$0xf]
        %v2812 = vld [vmem:[%s5 + $0x5c] sm:$0xf]
        %v2813 = vld [vmem:[%s5 + $0x60] sm:$0xf]
        %v2814 = vld [vmem:[%s5 + $0x64] sm:$0xf]
        %v2815 = vld [vmem:[%s5 + $0x68] sm:$0xf]
        %v2816 = vld [vmem:[%s5 + $0x6c] sm:$0xf]
        %v2817 = vld [vmem:[%s5 + $0x70] sm:$0xf]
        %v2818 = vld [vmem:[%s5 + $0x74] sm:$0xf]
        %v2819 = vld [vmem:[%s5 + $0x78] sm:$0xf]
        %v2820 = vld [vmem:[%s5 + $0x7c] sm:$0xf]
        %v2821 = vld [vmem:[%s5 + $0x80] sm:$0xf]
        %v2822 = vld [vmem:[%s5 + $0x84] sm:$0xf]
        %v2823 = vld [vmem:[%s5 + $0x88] sm:$0xf]
        %v2824 = vld [vmem:[%s5 + $0x8c] sm:$0xf]
        %v2825 = vld [vmem:[%s5 + $0x90] sm:$0xf]
        %v2826 = vld [vmem:[%s5 + $0x94] sm:$0xf]
        %v2827 = vld [vmem:[%s5 + $0x98] sm:$0xf]
        %v2828 = vld [vmem:[%s5 + $0x9c] sm:$0xf]
        %v2829 = vld [vmem:[%s5 + $0xa0] sm:$0xf]
        %v2830 = vld [vmem:[%s5 + $0xa4] sm:$0xf]
        %v2831 = vld [vmem:[%s5 + $0xa8] sm:$0xf]
        %v2832 = vld [vmem:[%s5 + $0xac] sm:$0xf]
        %v2833 = vld [vmem:[%s5 + $0xb0] sm:$0xf]
        %v2834 = vld [vmem:[%s5 + $0xb4] sm:$0xf]
        %v2835 = vld [vmem:[%s5 + $0xb8] sm:$0xf]
        %v2836 = vld [vmem:[%s5 + $0xbc] sm:$0xf]
        %v2837 = vld [vmem:[%s5 + $0xc0] sm:$0xf]
        %v2838 = vld [vmem:[%s5 + $0xc4] sm:$0xf]
        %v2839 = vld [vmem:[%s5 + $0xc8] sm:$0xf]
        %v2840 = vld [vmem:[%s5 + $0xcc] sm:$0xf]
        %v2841 = vld [vmem:[%s5 + $0xd0] sm:$0xf]
        %v2842 = vld [vmem:[%s5 + $0xd4] sm:$0xf]
        %v2843 = vld [vmem:[%s5 + $0xd8] sm:$0xf]
        %v2844 = vld [vmem:[%s5 + $0xdc] sm:$0xf]
        %v2845 = vld [vmem:[%s5 + $0xe0] sm:$0xf]
        %v2846 = vld [vmem:[%s5 + $0xe4] sm:$0xf]
        %v2847 = vld [vmem:[%s5 + $0xe8] sm:$0xf]
        %v2848 = vld [vmem:[%s5 + $0xec] sm:$0xf]
        %v2849 = vld [vmem:[%s5 + $0xf0] sm:$0xf]
        %v2850 = vld [vmem:[%s5 + $0xf4] sm:$0xf]
        %v2851 = vld [vmem:[%s5 + $0xf8] sm:$0xf]
        %v2852 = vld [vmem:[%s5 + $0xfc] sm:$0xf]
        %v2854 = vshrl.u32 %v2787, 16
        %v2857 = vshrl.u32 %v2788, 16
        %v2893 = vunpack.c.l.b16 %v2821
        %v2894 = vunpack.c.l.b16 %v2822
        %v2895 = vunpack.c.l.b16 %v2823
        %v2896 = vunpack.c.l.b16 %v2824
        %v2897 = vunpack.c.l.b16 %v2825
        %v2898 = vunpack.c.l.b16 %v2826
        %v2899 = vunpack.c.l.b16 %v2827
        %v2900 = vunpack.c.l.b16 %v2828
        %v2901 = vunpack.c.l.b16 %v2829
        %v2902 = vunpack.c.l.b16 %v2830
        %v2903 = vunpack.c.l.b16 %v2831
        %v2904 = vunpack.c.l.b16 %v2832
        %v2905 = vunpack.c.l.b16 %v2833
        %v2906 = vunpack.c.l.b16 %v2834
        %v2907 = vunpack.c.l.b16 %v2835
        %v2908 = vunpack.c.l.b16 %v2836
        %v2909 = vunpack.c.l.b16 %v2837
        %v2910 = vunpack.c.l.b16 %v2838
        %v2911 = vunpack.c.l.b16 %v2839
        %v2912 = vunpack.c.l.b16 %v2840
        %v2913 = vunpack.c.l.b16 %v2841
        %v2914 = vunpack.c.l.b16 %v2842
        %v2915 = vunpack.c.l.b16 %v2843
        %v2916 = vunpack.c.l.b16 %v2844
        %v2917 = vunpack.c.l.b16 %v2845
        %v2918 = vunpack.c.l.b16 %v2846
        %v2919 = vunpack.c.l.b16 %v2847
        %v2920 = vunpack.c.l.b16 %v2848
        %v2921 = vunpack.c.l.b16 %v2849
        %v2922 = vunpack.c.l.b16 %v2850
        %v2923 = vunpack.c.l.b16 %v2851
        %v2924 = vunpack.c.l.b16 %v2852
        %v2925 = vpack.c.b16 %v2894, %v2893
        %v2926 = vpack.c.b16 %v2896, %v2895
        %v2927 = vpack.c.b16 %v2898, %v2897
        %v2928 = vpack.c.b16 %v2900, %v2899
        %v2929 = vpack.c.b16 %v2902, %v2901
        %v2930 = vpack.c.b16 %v2904, %v2903
        %v2931 = vpack.c.b16 %v2906, %v2905
        %v2932 = vpack.c.b16 %v2908, %v2907
        %v2933 = vpack.c.b16 %v2910, %v2909
        %v2934 = vpack.c.b16 %v2912, %v2911
        %v2935 = vpack.c.b16 %v2914, %v2913
        %v2936 = vpack.c.b16 %v2916, %v2915
        %v2937 = vpack.c.b16 %v2918, %v2917
        %v2938 = vpack.c.b16 %v2920, %v2919
        %v2939 = vpack.c.b16 %v2922, %v2921
        %v2940 = vpack.c.b16 %v2924, %v2923
        %2957 = vmatprep.subr.bf16.mxu0 0
        %2958 = vmatpush1.bf16.msra.mxu0 %v2925
        %2959 = vmatprep.subr.bf16.mxu0 0
        %2960 = vmatpush1.bf16.msra.mxu0 %v2926
        %2961 = vmatprep.subr.bf16.mxu0 0
        %2962 = vmatpush1.bf16.msra.mxu0 %v2927
        %2963 = vmatprep.subr.bf16.mxu0 0
        %2964 = vmatpush1.bf16.msra.mxu0 %v2928
        %2965 = vmatprep.subr.bf16.mxu0 0
        %2966 = vmatpush1.bf16.msra.mxu0 %v2929
        %2967 = vmatprep.subr.bf16.mxu0 0
        %2968 = vmatpush1.bf16.msra.mxu0 %v2930
        %2969 = vmatprep.subr.bf16.mxu0 0
        %2970 = vmatpush1.bf16.msra.mxu0 %v2931
        %2971 = vmatprep.subr.bf16.mxu0 0
        %2972 = vmatpush1.bf16.msra.mxu0 %v2932
        %2973 = vmatprep.subr.bf16.mxu0 0
        %2974 = vmatpush1.bf16.msra.mxu0 %v2933
        %2975 = vmatprep.subr.bf16.mxu0 0
        %2976 = vmatpush1.bf16.msra.mxu0 %v2934
        %2977 = vmatprep.subr.bf16.mxu0 0
        %2978 = vmatpush1.bf16.msra.mxu0 %v2935
        %2979 = vmatprep.subr.bf16.mxu0 0
        %2980 = vmatpush1.bf16.msra.mxu0 %v2936
        %2981 = vmatprep.subr.bf16.mxu0 0
        %2982 = vmatpush1.bf16.msra.mxu0 %v2937
        %2983 = vmatprep.subr.bf16.mxu0 0
        %2984 = vmatpush1.bf16.msra.mxu0 %v2938
        %2985 = vmatprep.subr.bf16.mxu0 0
        %2986 = vmatpush1.bf16.msra.mxu0 %v2939
        %2987 = vmatprep.subr.bf16.mxu0 0
        %2988 = vmatpush1.bf16.msra.mxu0 %v2940
        %2989 = vmatprep.mubr.bf16.mxu0 %v2857
        %2990 = vmatmul.mubr.bf16.gmra.mrb[0].mxu0 %v2854
        %v2991 = vpop.f32.mrb[0].mxu0
        %v2992 = vadd.f32 0.0, %v2991
        %v2993 = vpop.f32.mrb[0].mxu0
        %v2994 = vpop.f32.mrb[0].mxu0
        %v2995 = vpop.f32.mrb[0].mxu0
        %2996 = vdwg.mxu0
        %v3029 = vunpack.c.l.b16 %v2789
        %v3030 = vunpack.c.l.b16 %v2790
        %v3031 = vunpack.c.l.b16 %v2791
        %v3032 = vunpack.c.l.b16 %v2792
        %v3033 = vunpack.c.l.b16 %v2793
        %v3034 = vunpack.c.l.b16 %v2794
        %v3035 = vunpack.c.l.b16 %v2795
        %v3036 = vunpack.c.l.b16 %v2796
        %v3037 = vunpack.c.l.b16 %v2797
        %v3038 = vunpack.c.l.b16 %v2798
        %v3039 = vunpack.c.l.b16 %v2799
        %v3040 = vunpack.c.l.b16 %v2800
        %v3041 = vunpack.c.l.b16 %v2801
        %v3042 = vunpack.c.l.b16 %v2802
        %v3043 = vunpack.c.l.b16 %v2803
        %v3044 = vunpack.c.l.b16 %v2804
        %v3045 = vunpack.c.l.b16 %v2805
        %v3046 = vunpack.c.l.b16 %v2806
        %v3047 = vunpack.c.l.b16 %v2807
        %v3048 = vunpack.c.l.b16 %v2808
        %v3049 = vunpack.c.l.b16 %v2809
        %v3050 = vunpack.c.l.b16 %v2810
        %v3051 = vunpack.c.l.b16 %v2811
        %v3052 = vunpack.c.l.b16 %v2812
        %v3053 = vunpack.c.l.b16 %v2813
        %v3054 = vunpack.c.l.b16 %v2814
        %v3055 = vunpack.c.l.b16 %v2815
        %v3056 = vunpack.c.l.b16 %v2816
        %v3057 = vunpack.c.l.b16 %v2817
        %v3058 = vunpack.c.l.b16 %v2818
        %v3059 = vunpack.c.l.b16 %v2819
        %v3060 = vunpack.c.l.b16 %v2820
        %v3061 = vpack.c.b16 %v3030, %v3029
        %v3062 = vpack.c.b16 %v3032, %v3031
        %v3063 = vpack.c.b16 %v3034, %v3033
        %v3064 = vpack.c.b16 %v3036, %v3035
        %v3065 = vpack.c.b16 %v3038, %v3037
        %v3066 = vpack.c.b16 %v3040, %v3039
        %v3067 = vpack.c.b16 %v3042, %v3041
        %v3068 = vpack.c.b16 %v3044, %v3043
        %v3069 = vpack.c.b16 %v3046, %v3045
        %v3070 = vpack.c.b16 %v3048, %v3047
        %v3071 = vpack.c.b16 %v3050, %v3049
        %v3072 = vpack.c.b16 %v3052, %v3051
        %v3073 = vpack.c.b16 %v3054, %v3053
        %v3074 = vpack.c.b16 %v3056, %v3055
        %v3075 = vpack.c.b16 %v3058, %v3057
        %v3076 = vpack.c.b16 %v3060, %v3059
        %3093 = vmatprep.subr.bf16.mxu0 0
        %3094 = vmatpush1.bf16.msra.mxu0 %v3061
        %3095 = vmatprep.subr.bf16.mxu0 0
        %3096 = vmatpush1.bf16.msra.mxu0 %v3062
        %3097 = vmatprep.subr.bf16.mxu0 0
        %3098 = vmatpush1.bf16.msra.mxu0 %v3063
        %3099 = vmatprep.subr.bf16.mxu0 0
        %3100 = vmatpush1.bf16.msra.mxu0 %v3064
        %3101 = vmatprep.subr.bf16.mxu0 0
        %3102 = vmatpush1.bf16.msra.mxu0 %v3065
        %3103 = vmatprep.subr.bf16.mxu0 0
        %3104 = vmatpush1.bf16.msra.mxu0 %v3066
        %3105 = vmatprep.subr.bf16.mxu0 0
        %3106 = vmatpush1.bf16.msra.mxu0 %v3067
        %3107 = vmatprep.subr.bf16.mxu0 0
        %3108 = vmatpush1.bf16.msra.mxu0 %v3068
        %3109 = vmatprep.subr.bf16.mxu0 0
        %3110 = vmatpush1.bf16.msra.mxu0 %v3069
        %3111 = vmatprep.subr.bf16.mxu0 0
        %3112 = vmatpush1.bf16.msra.mxu0 %v3070
        %3113 = vmatprep.subr.bf16.mxu0 0
        %3114 = vmatpush1.bf16.msra.mxu0 %v3071
        %3115 = vmatprep.subr.bf16.mxu0 0
        %3116 = vmatpush1.bf16.msra.mxu0 %v3072
        %3117 = vmatprep.subr.bf16.mxu0 0
        %3118 = vmatpush1.bf16.msra.mxu0 %v3073
        %3119 = vmatprep.subr.bf16.mxu0 0
        %3120 = vmatpush1.bf16.msra.mxu0 %v3074
        %3121 = vmatprep.subr.bf16.mxu0 0
        %3122 = vmatpush1.bf16.msra.mxu0 %v3075
        %3123 = vmatprep.subr.bf16.mxu0 0
        %3124 = vmatpush1.bf16.msra.mxu0 %v3076
        %3125 = vmatprep.mubr.bf16.mxu0 %v2788
        %3126 = vmatmul.mubr.bf16.gmra.mrb[0].mxu0 %v2787
        %v3127 = vpop.f32.mrb[0].mxu0
        %v3128 = vadd.f32 %v2992, %v3127
        %v3129 = vpop.f32.mrb[0].mxu0
        %v3130 = vpop.f32.mrb[0].mxu0
        %v3131 = vpop.f32.mrb[0].mxu0
        %3132 = vdwg.mxu0
        %v3133 = vld [vmem:[%s5 + $0x100] sm:$0xf]
        %v3134 = vld [vmem:[%s5 + $0x104] sm:$0xf]
        %v3135 = vld [vmem:[%s5 + $0x108] sm:$0xf]
        %v3136 = vld [vmem:[%s5 + $0x10c] sm:$0xf]
        %v3137 = vld [vmem:[%s5 + $0x110] sm:$0xf]
        %v3138 = vld [vmem:[%s5 + $0x114] sm:$0xf]
        %v3139 = vld [vmem:[%s5 + $0x118] sm:$0xf]
        %v3140 = vld [vmem:[%s5 + $0x11c] sm:$0xf]
        %v3141 = vld [vmem:[%s5 + $0x120] sm:$0xf]
        %v3142 = vld [vmem:[%s5 + $0x124] sm:$0xf]
        %v3143 = vld [vmem:[%s5 + $0x128] sm:$0xf]
        %v3144 = vld [vmem:[%s5 + $0x12c] sm:$0xf]
        %v3145 = vld [vmem:[%s5 + $0x130] sm:$0xf]
        %v3146 = vld [vmem:[%s5 + $0x134] sm:$0xf]
        %v3147 = vld [vmem:[%s5 + $0x138] sm:$0xf]
        %v3148 = vld [vmem:[%s5 + $0x13c] sm:$0xf]
        %v3149 = vld [vmem:[%s5 + $0x140] sm:$0xf]
        %v3150 = vld [vmem:[%s5 + $0x144] sm:$0xf]
        %v3151 = vld [vmem:[%s5 + $0x148] sm:$0xf]
        %v3152 = vld [vmem:[%s5 + $0x14c] sm:$0xf]
        %v3153 = vld [vmem:[%s5 + $0x150] sm:$0xf]
        %v3154 = vld [vmem:[%s5 + $0x154] sm:$0xf]
        %v3155 = vld [vmem:[%s5 + $0x158] sm:$0xf]
        %v3156 = vld [vmem:[%s5 + $0x15c] sm:$0xf]
        %v3157 = vld [vmem:[%s5 + $0x160] sm:$0xf]
        %v3158 = vld [vmem:[%s5 + $0x164] sm:$0xf]
        %v3159 = vld [vmem:[%s5 + $0x168] sm:$0xf]
        %v3160 = vld [vmem:[%s5 + $0x16c] sm:$0xf]
        %v3161 = vld [vmem:[%s5 + $0x170] sm:$0xf]
        %v3162 = vld [vmem:[%s5 + $0x174] sm:$0xf]
        %v3163 = vld [vmem:[%s5 + $0x178] sm:$0xf]
        %v3164 = vld [vmem:[%s5 + $0x17c] sm:$0xf]
        %v3167 = vrot.slane %v2787, 1
        %v3168 = vrot.slane %v2788, 1
        %v3203 = vunpack.c.l.b16 %v3133
        %v3204 = vunpack.c.l.b16 %v3134
        %v3205 = vunpack.c.l.b16 %v3135
        %v3206 = vunpack.c.l.b16 %v3136
        %v3207 = vunpack.c.l.b16 %v3137
        %v3208 = vunpack.c.l.b16 %v3138
        %v3209 = vunpack.c.l.b16 %v3139
        %v3210 = vunpack.c.l.b16 %v3140
        %v3211 = vunpack.c.l.b16 %v3141
        %v3212 = vunpack.c.l.b16 %v3142
        %v3213 = vunpack.c.l.b16 %v3143
        %v3214 = vunpack.c.l.b16 %v3144
        %v3215 = vunpack.c.l.b16 %v3145
        %v3216 = vunpack.c.l.b16 %v3146
        %v3217 = vunpack.c.l.b16 %v3147
        %v3218 = vunpack.c.l.b16 %v3148
        %v3219 = vunpack.c.l.b16 %v3149
        %v3220 = vunpack.c.l.b16 %v3150
        %v3221 = vunpack.c.l.b16 %v3151
        %v3222 = vunpack.c.l.b16 %v3152
        %v3223 = vunpack.c.l.b16 %v3153
        %v3224 = vunpack.c.l.b16 %v3154
        %v3225 = vunpack.c.l.b16 %v3155
        %v3226 = vunpack.c.l.b16 %v3156
        %v3227 = vunpack.c.l.b16 %v3157
        %v3228 = vunpack.c.l.b16 %v3158
        %v3229 = vunpack.c.l.b16 %v3159
        %v3230 = vunpack.c.l.b16 %v3160
        %v3231 = vunpack.c.l.b16 %v3161
        %v3232 = vunpack.c.l.b16 %v3162
        %v3233 = vunpack.c.l.b16 %v3163
        %v3234 = vunpack.c.l.b16 %v3164
        %v3235 = vpack.c.b16 %v3204, %v3203
        %v3236 = vpack.c.b16 %v3206, %v3205
        %v3237 = vpack.c.b16 %v3208, %v3207
        %v3238 = vpack.c.b16 %v3210, %v3209
        %v3239 = vpack.c.b16 %v3212, %v3211
        %v3240 = vpack.c.b16 %v3214, %v3213
        %v3241 = vpack.c.b16 %v3216, %v3215
        %v3242 = vpack.c.b16 %v3218, %v3217
        %v3243 = vpack.c.b16 %v3220, %v3219
        %v3244 = vpack.c.b16 %v3222, %v3221
        %v3245 = vpack.c.b16 %v3224, %v3223
        %v3246 = vpack.c.b16 %v3226, %v3225
        %v3247 = vpack.c.b16 %v3228, %v3227
        %v3248 = vpack.c.b16 %v3230, %v3229
        %v3249 = vpack.c.b16 %v3232, %v3231
        %v3250 = vpack.c.b16 %v3234, %v3233
        %3267 = vmatprep.subr.bf16.mxu0 0
        %3268 = vmatpush1.bf16.msra.mxu0 %v3235
        %3269 = vmatprep.subr.bf16.mxu0 0
        %3270 = vmatpush1.bf16.msra.mxu0 %v3236
        %3271 = vmatprep.subr.bf16.mxu0 0
        %3272 = vmatpush1.bf16.msra.mxu0 %v3237
        %3273 = vmatprep.subr.bf16.mxu0 0
        %3274 = vmatpush1.bf16.msra.mxu0 %v3238
        %3275 = vmatprep.subr.bf16.mxu0 0
        %3276 = vmatpush1.bf16.msra.mxu0 %v3239
        %3277 = vmatprep.subr.bf16.mxu0 0
        %3278 = vmatpush1.bf16.msra.mxu0 %v3240
        %3279 = vmatprep.subr.bf16.mxu0 0
        %3280 = vmatpush1.bf16.msra.mxu0 %v3241
        %3281 = vmatprep.subr.bf16.mxu0 0
        %3282 = vmatpush1.bf16.msra.mxu0 %v3242
        %3283 = vmatprep.subr.bf16.mxu0 0
        %3284 = vmatpush1.bf16.msra.mxu0 %v3243
        %3285 = vmatprep.subr.bf16.mxu0 0
        %3286 = vmatpush1.bf16.msra.mxu0 %v3244
        %3287 = vmatprep.subr.bf16.mxu0 0
        %3288 = vmatpush1.bf16.msra.mxu0 %v3245
        %3289 = vmatprep.subr.bf16.mxu0 0
        %3290 = vmatpush1.bf16.msra.mxu0 %v3246
        %3291 = vmatprep.subr.bf16.mxu0 0
        %3292 = vmatpush1.bf16.msra.mxu0 %v3247
        %3293 = vmatprep.subr.bf16.mxu0 0
        %3294 = vmatpush1.bf16.msra.mxu0 %v3248
        %3295 = vmatprep.subr.bf16.mxu0 0
        %3296 = vmatpush1.bf16.msra.mxu0 %v3249
        %3297 = vmatprep.subr.bf16.mxu0 0
        %3298 = vmatpush1.bf16.msra.mxu0 %v3250
        %3299 = vmatprep.mubr.bf16.mxu0 %v3168
        %3300 = vmatmul.mubr.bf16.gmra.mrb[0].mxu0 %v3167
        %v3301 = vpop.f32.mrb[0].mxu0
        %v3302 = vadd.f32 0.0, %v3301
        %v3303 = vpop.f32.mrb[0].mxu0
        %v3304 = vpop.f32.mrb[0].mxu0
        %v3305 = vpop.f32.mrb[0].mxu0
        %3306 = vdwg.mxu0
        %v3307 = vadd.f32 %v3128, %v3302
        %v3308 = vld [vmem:[%s5 + $0x180] sm:$0xf]
        %v3309 = vld [vmem:[%s5 + $0x184] sm:$0xf]
        %v3310 = vld [vmem:[%s5 + $0x188] sm:$0xf]
        %v3311 = vld [vmem:[%s5 + $0x18c] sm:$0xf]
        %v3312 = vld [vmem:[%s5 + $0x190] sm:$0xf]
        %v3313 = vld [vmem:[%s5 + $0x194] sm:$0xf]
        %v3314 = vld [vmem:[%s5 + $0x198] sm:$0xf]
        %v3315 = vld [vmem:[%s5 + $0x19c] sm:$0xf]
        %v3316 = vld [vmem:[%s5 + $0x1a0] sm:$0xf]
        %v3317 = vld [vmem:[%s5 + $0x1a4] sm:$0xf]
        %v3318 = vld [vmem:[%s5 + $0x1a8] sm:$0xf]
        %v3319 = vld [vmem:[%s5 + $0x1ac] sm:$0xf]
        %v3320 = vld [vmem:[%s5 + $0x1b0] sm:$0xf]
        %v3321 = vld [vmem:[%s5 + $0x1b4] sm:$0xf]
        %v3322 = vld [vmem:[%s5 + $0x1b8] sm:$0xf]
        %v3323 = vld [vmem:[%s5 + $0x1bc] sm:$0xf]
        %v3324 = vld [vmem:[%s5 + $0x1c0] sm:$0xf]
        %v3325 = vld [vmem:[%s5 + $0x1c4] sm:$0xf]
        %v3326 = vld [vmem:[%s5 + $0x1c8] sm:$0xf]
        %v3327 = vld [vmem:[%s5 + $0x1cc] sm:$0xf]
        %v3328 = vld [vmem:[%s5 + $0x1d0] sm:$0xf]
        %v3329 = vld [vmem:[%s5 + $0x1d4] sm:$0xf]
        %v3330 = vld [vmem:[%s5 + $0x1d8] sm:$0xf]
        %v3331 = vld [vmem:[%s5 + $0x1dc] sm:$0xf]
        %v3332 = vld [vmem:[%s5 + $0x1e0] sm:$0xf]
        %v3333 = vld [vmem:[%s5 + $0x1e4] sm:$0xf]
        %v3334 = vld [vmem:[%s5 + $0x1e8] sm:$0xf]
        %v3335 = vld [vmem:[%s5 + $0x1ec] sm:$0xf]
        %v3336 = vld [vmem:[%s5 + $0x1f0] sm:$0xf]
        %v3337 = vld [vmem:[%s5 + $0x1f4] sm:$0xf]
        %v3338 = vld [vmem:[%s5 + $0x1f8] sm:$0xf]
        %v3339 = vld [vmem:[%s5 + $0x1fc] sm:$0xf]
        %v3340 = vrot.slane %v2854, 1
        %v3341 = vrot.slane %v2857, 1
        %v3376 = vunpack.c.l.b16 %v3308
        %v3377 = vunpack.c.l.b16 %v3309
        %v3378 = vunpack.c.l.b16 %v3310
        %v3379 = vunpack.c.l.b16 %v3311
        %v3380 = vunpack.c.l.b16 %v3312
        %v3381 = vunpack.c.l.b16 %v3313
        %v3382 = vunpack.c.l.b16 %v3314
        %v3383 = vunpack.c.l.b16 %v3315
        %v3384 = vunpack.c.l.b16 %v3316
        %v3385 = vunpack.c.l.b16 %v3317
        %v3386 = vunpack.c.l.b16 %v3318
        %v3387 = vunpack.c.l.b16 %v3319
        %v3388 = vunpack.c.l.b16 %v3320
        %v3389 = vunpack.c.l.b16 %v3321
        %v3390 = vunpack.c.l.b16 %v3322
        %v3391 = vunpack.c.l.b16 %v3323
        %v3392 = vunpack.c.l.b16 %v3324
        %v3393 = vunpack.c.l.b16 %v3325
        %v3394 = vunpack.c.l.b16 %v3326
        %v3395 = vunpack.c.l.b16 %v3327
        %v3396 = vunpack.c.l.b16 %v3328
        %v3397 = vunpack.c.l.b16 %v3329
        %v3398 = vunpack.c.l.b16 %v3330
        %v3399 = vunpack.c.l.b16 %v3331
        %v3400 = vunpack.c.l.b16 %v3332
        %v3401 = vunpack.c.l.b16 %v3333
        %v3402 = vunpack.c.l.b16 %v3334
        %v3403 = vunpack.c.l.b16 %v3335
        %v3404 = vunpack.c.l.b16 %v3336
        %v3405 = vunpack.c.l.b16 %v3337
        %v3406 = vunpack.c.l.b16 %v3338
        %v3407 = vunpack.c.l.b16 %v3339
        %v3408 = vpack.c.b16 %v3377, %v3376
        %v3409 = vpack.c.b16 %v3379, %v3378
        %v3410 = vpack.c.b16 %v3381, %v3380
        %v3411 = vpack.c.b16 %v3383, %v3382
        %v3412 = vpack.c.b16 %v3385, %v3384
        %v3413 = vpack.c.b16 %v3387, %v3386
        %v3414 = vpack.c.b16 %v3389, %v3388
        %v3415 = vpack.c.b16 %v3391, %v3390
        %v3416 = vpack.c.b16 %v3393, %v3392
        %v3417 = vpack.c.b16 %v3395, %v3394
        %v3418 = vpack.c.b16 %v3397, %v3396
        %v3419 = vpack.c.b16 %v3399, %v3398
        %v3420 = vpack.c.b16 %v3401, %v3400
        %v3421 = vpack.c.b16 %v3403, %v3402
        %v3422 = vpack.c.b16 %v3405, %v3404
        %v3423 = vpack.c.b16 %v3407, %v3406
        %3440 = vmatprep.subr.bf16.mxu0 0
        %3441 = vmatpush1.bf16.msra.mxu0 %v3408
        %3442 = vmatprep.subr.bf16.mxu0 0
        %3443 = vmatpush1.bf16.msra.mxu0 %v3409
        %3444 = vmatprep.subr.bf16.mxu0 0
        %3445 = vmatpush1.bf16.msra.mxu0 %v3410
        %3446 = vmatprep.subr.bf16.mxu0 0
        %3447 = vmatpush1.bf16.msra.mxu0 %v3411
        %3448 = vmatprep.subr.bf16.mxu0 0
        %3449 = vmatpush1.bf16.msra.mxu0 %v3412
        %3450 = vmatprep.subr.bf16.mxu0 0
        %3451 = vmatpush1.bf16.msra.mxu0 %v3413
        %3452 = vmatprep.subr.bf16.mxu0 0
        %3453 = vmatpush1.bf16.msra.mxu0 %v3414
        %3454 = vmatprep.subr.bf16.mxu0 0
        %3455 = vmatpush1.bf16.msra.mxu0 %v3415
        %3456 = vmatprep.subr.bf16.mxu0 0
        %3457 = vmatpush1.bf16.msra.mxu0 %v3416
        %3458 = vmatprep.subr.bf16.mxu0 0
        %3459 = vmatpush1.bf16.msra.mxu0 %v3417
        %3460 = vmatprep.subr.bf16.mxu0 0
        %3461 = vmatpush1.bf16.msra.mxu0 %v3418
        %3462 = vmatprep.subr.bf16.mxu0 0
        %3463 = vmatpush1.bf16.msra.mxu0 %v3419
        %3464 = vmatprep.subr.bf16.mxu0 0
        %3465 = vmatpush1.bf16.msra.mxu0 %v3420
        %3466 = vmatprep.subr.bf16.mxu0 0
        %3467 = vmatpush1.bf16.msra.mxu0 %v3421
        %3468 = vmatprep.subr.bf16.mxu0 0
        %3469 = vmatpush1.bf16.msra.mxu0 %v3422
        %3470 = vmatprep.subr.bf16.mxu0 0
        %3471 = vmatpush1.bf16.msra.mxu0 %v3423
        %3472 = vmatprep.mubr.bf16.mxu0 %v3341
        %3473 = vmatmul.mubr.bf16.gmra.mrb[0].mxu0 %v3340
        %v3474 = vpop.f32.mrb[0].mxu0
        %v3475 = vadd.f32 0.0, %v3474
        %v3476 = vpop.f32.mrb[0].mxu0
        %v3477 = vpop.f32.mrb[0].mxu0
        %v3478 = vpop.f32.mrb[0].mxu0
        %3479 = vdwg.mxu0
        %v3480 = vadd.f32 %v3307, %v3475
        %v3481 = vld [vmem:[%s6] sm:$0x1]
        %v3482 = vadd.f32 %v3480, %v3481
        %3483 = vst [vmem:[%s270] sm:$0x1] %v3482
        %s3484 = sand.u32 %s181, 1
        %s3485 = scalar_lea.sflag [#allocation5], %s3484
        %s3486 = sand.u32 %s181, 1
        %s3487 = scalar_lea.vmem [#allocation4], %s3486
        // Predicated region
        $region49: #{class_rcnn_predictor_forward.1} parent=47 // pred_check
          %p3488 = pneg %p191
        $region50: #{class_rcnn_predictor_forward.1} parent=47 // pred_check_branch
          %3490 = sbr.rel (%p3488) target = $region52
        $region51: #{class_rcnn_predictor_forward.1} parent=47 // pred_region
          %s3492 = ssub.s32 16, 16
          %3493 = vsyncadd %s3485, %s3492
          %s3494 = smul.addr %s21, 16
          %s3495 = scalar_lea.hbm %s7, %s3494
          %s3497 = sshll.u32 %s3487, 4
          %s3498 = int_to_ptr.vmem [resolvable:$true] %s3497
          %3500 = dma.vmem_to_hbm [thread:$0]  %s3498, 16, %s3495, %s3485
        $region52: #{class_rcnn_predictor_forward.1} parent=47 // pred_fallthru
          _
      $region48: #{class_rcnn_predictor_forward.1} parent=5 // pred_fallthru
        _
      %p3501 = scmp.le.s32.totalorder 2, %s16
      // Predicated region
      $region53: #{class_rcnn_predictor_forward.1} parent=5 // pred_check
        %p3502 = pneg %p3501
      $region54: #{class_rcnn_predictor_forward.1} parent=5 // pred_check_branch
        %3504 = sbr.rel (%p3502) target = $region56
      $region55: #{class_rcnn_predictor_forward.1} parent=5 // pred_region
        %s3505 = ssub.s32 %s16, 2
        // Predicated region
        $region57: #{class_rcnn_predictor_forward.1} parent=55 // pred_check
          %p3506 = pneg %p197
        $region58: #{class_rcnn_predictor_forward.1} parent=55 // pred_check_branch
          %3508 = sbr.rel (%p3506) target = $region60
        $region59: #{class_rcnn_predictor_forward.1} parent=55 // pred_region
          %s3509 = sand.u32 %s182, 1
          %s3510 = scalar_lea.sflag [#allocation5], %s3509
          %s3511 = sand.u32 %s182, 1
          %s3512 = scalar_lea.vmem [#allocation4], %s3511
          %3513 = dma.done %s3510, 16
        $region60: #{class_rcnn_predictor_forward.1} parent=55 // pred_fallthru
          _
      $region56: #{class_rcnn_predictor_forward.1} parent=5 // pred_fallthru
        _
    $region6: #{class_rcnn_predictor_forward.1} parent=1 // loop_footer
      %s20 = sadd.s32 1, %s16
    $region7: #{class_rcnn_predictor_forward.1} parent=1 // loop_footer_branch
      %15 = sbr.rel target = $region3
    $region8: #{class_rcnn_predictor_forward.1} parent=1 // loop_exit
      _
    %3514 = vsyncpa [#allocation5], 1
    %s3515 = scalar_lea.sflag [#allocation5], 1
    %3516 = vsyncpa %s3515, 1

</llo_original>
